<compile_context>
chip_gen: v6e
topology: v6e:2x2x1
jax: 0.10.0
libtpu: 0.0.40
codegen_flags: <defaults>
</compile_context>

<pallas_src>
import functools

import jax
import jax.numpy as jnp
import numpy as np
from jax.experimental import pallas as pl
from jax.experimental.pallas import tpu as pltpu


# ----------------------------------------------------------------------------
# small helpers
# ----------------------------------------------------------------------------
def _round_up(x, m):
    return (x + m - 1) // m * m


def _detect_lane_align():
    """256-column alignment on v6e/v7x (256-wide MXU), 128 elsewhere."""
    try:
        kind = jax.devices()[0].device_kind.lower()
    except Exception:
        return 128
    return 256 if any(t in kind for t in ("v6", "v7", "7x")) else 128


_LANE_ALIGN = _detect_lane_align()


def _lane_pad(n):
    npad = _round_up(n, 128)
    if npad > 128 and _LANE_ALIGN == 256:
        npad = _round_up(n, 256)
    return npad


def _m_tiling(m, max_tm=512):
    """(num_tiles, tile_m, padded_m); tile_m multiple of 16 (bf16 sublanes).

    Larger-M layers always get >= 2 grid steps so both v7x TensorCores can be
    fed via the 'parallel' grid axis (one extra ~0.35us step on v5e/v6e)."""
    nt = -(-m // max_tm)
    if m >= 256:
        nt = max(nt, 2)
    tm = _round_up(-(-m // nt), 16)
    return nt, tm, tm * nt


# ----------------------------------------------------------------------------
# Pallas kernels
# ----------------------------------------------------------------------------
def _conv_relu_pool_kernel(a_ref, w_ref, b_ref, o_ref):
    """Fused conv(+bias)+ReLU+2x2 max-pool.

    a_ref: (4, tm, K) im2col rows grouped by pooling-window offset (u, v).
    One long MXU push over the concatenated (4*tm, K) operand, then the pool
    is a 3-way elementwise max of the four (tm, Npad) result slabs.
    relu(max_u(conv_u) + b) == max_u(relu(conv_u + b)) since bias is shared.
    """
    tm = a_ref.shape[1]
    a = jnp.concatenate([a_ref[0], a_ref[1], a_ref[2], a_ref[3]], axis=0)
    acc = jnp.dot(a, w_ref[...], preferred_element_type=jnp.float32)
    m01 = jnp.maximum(acc[0:tm], acc[tm:2 * tm])
    m23 = jnp.maximum(acc[2 * tm:3 * tm], acc[3 * tm:4 * tm])
    o_ref[...] = jnp.maximum(jnp.maximum(m01, m23) + b_ref[...], 0.0
                             ).astype(o_ref.dtype)


def _matmul_kernel(a_ref, w_ref, o_ref):
    """o = a @ w (bf16 operands, f32 accumulation, bf16 store)."""
    o_ref[...] = jnp.dot(a_ref[...], w_ref[...],
                         preferred_element_type=jnp.float32).astype(o_ref.dtype)


def _lin_enc_dec_kernel(a_ref, w1_ref, b1_ref, w2_ref, b2_ref, out_ref, hid_ref):
    """Fused linear_out + linear_out_t(+tanh).

    w2 is zero-padded to K=128 rows so the padded logits (cols >= out_size are
    exactly 0) feed the second matmul with no slicing."""
    t = jnp.dot(a_ref[...], w1_ref[...],
                preferred_element_type=jnp.float32) + b1_ref[...]
    out_ref[...] = t
    h = jnp.dot(t.astype(jnp.bfloat16), w2_ref[...],
                preferred_element_type=jnp.float32) + b2_ref[...]
    hid_ref[...] = jnp.tanh(h).astype(hid_ref.dtype)


# ----------------------------------------------------------------------------
# Pallas-backed ops (wrappers)
# ----------------------------------------------------------------------------
def conv_relu_pool(x, w_packed, b_packed, out_c, KH=4, KW=4):
    """relu(conv_valid(x)) followed by MaxPool2d(2), fused in one kernel.

    x: (B, H, W, C) NHWC.  Returns (B, PH, PW, out_c) bf16.
    """
    B, H, W, C = x.shape
    OH, OW = H - KH + 1, W - KW + 1
    PH, PW = OH // 2, OW // 2           # floor mode: trailing odd row/col dropped
    K = KH * KW * C
    Mp = B * PH * PW

    # im2col restricted to conv positions that survive the pool, grouped by
    # pooling-window offset (u, v) -> (4, Mp, K).  XLA fuses these slices (and
    # the attention-mask multiply upstream) into one copy producing A4.
    slabs = []
    for u in (0, 1):
        for v in (0, 1):
            cols = [x[:, u + i: u + i + 2 * PH: 2, v + j: v + j + 2 * PW: 2, :]
                    for i in range(KH) for j in range(KW)]
            p = jnp.stack(cols, axis=3)                  # (B, PH, PW, KH*KW, C)
            slabs.append(p.reshape(Mp, K))
    A4 = jnp.stack(slabs, axis=0).astype(jnp.bfloat16)   # (4, Mp, K)

    Npad = w_packed.shape[1]
    nt, tm, mpad = _m_tiling(Mp)
    if mpad != Mp:
        A4 = jnp.pad(A4, ((0, 0), (0, mpad - Mp), (0, 0)))
    out = pl.pallas_call(
        _conv_relu_pool_kernel,
        out_shape=jax.ShapeDtypeStruct((mpad, Npad), jnp.bfloat16),
        grid=(nt,),
        in_specs=[pl.BlockSpec((4, tm, K), lambda i: (0, i, 0)),
                  pl.BlockSpec((K, Npad), lambda i: (0, 0)),
                  pl.BlockSpec((1, Npad), lambda i: (0, 0))],
        out_specs=pl.BlockSpec((tm, Npad), lambda i: (i, 0)),
        compiler_params=pltpu.CompilerParams(
            dimension_semantics=("parallel",)),
    )(A4, w_packed, b_packed)
    return out[:Mp, :out_c].reshape(B, PH, PW, out_c)


def matmul_tiled(a, w_packed, out_dtype=jnp.bfloat16):
    """a @ w with an M-tiled 'parallel' grid; returns (M, Npad) out_dtype."""
    M, K = a.shape
    Npad = w_packed.shape[1]
    nt, tm, mpad = _m_tiling(M)
    a = a.astype(jnp.bfloat16)
    if mpad != M:
        a = jnp.pad(a, ((0, mpad - M), (0, 0)))
    out = pl.pallas_call(
        _matmul_kernel,
        out_shape=jax.ShapeDtypeStruct((mpad, Npad), out_dtype),
        grid=(nt,),
        in_specs=[pl.BlockSpec((tm, K), lambda i: (i, 0)),
                  pl.BlockSpec((K, Npad), lambda i: (0, 0))],
        out_specs=pl.BlockSpec((tm, Npad), lambda i: (i, 0)),
        compiler_params=pltpu.CompilerParams(
            dimension_semantics=("parallel",)),
    )(a, w_packed)
    return out[:M]


def linear_enc_dec(flat, w1, b1, w2, b2, out_n, hid_n):
    """Fused linear_out (logits, f32) + tanh(linear_out_t) (hidden, bf16)."""
    B, K = flat.shape
    mpad = _round_up(B, 16)
    a = flat.astype(jnp.bfloat16)
    if mpad != B:
        a = jnp.pad(a, ((0, mpad - B), (0, 0)))
    n1, n2 = w1.shape[1], w2.shape[1]
    out, hid = pl.pallas_call(
        _lin_enc_dec_kernel,
        out_shape=(jax.ShapeDtypeStruct((mpad, n1), jnp.float32),
                   jax.ShapeDtypeStruct((mpad, n2), jnp.bfloat16)),
    )(a, w1, b1, w2, b2)
    return out[:B, :out_n], hid[:B, :hid_n]


def col2im_bias_tanh(patches, B, H, W, KH, KW, OC, bias):
    """Scatter (col2im) overlap-add for ConvTranspose2d(stride=1), then
    bias + tanh.  patches: (>=B*H*W, >=KH*KW*OC) with columns (ki, kj, oc).
    Tiny, left to one XLA fusion."""
    p = patches[:B * H * W, :KH * KW * OC].astype(jnp.float32)
    p = p.reshape(B, H, W, KH, KW, OC)
    out = jnp.zeros((B, H + KH - 1, W + KW - 1, OC), jnp.float32)
    for ki in range(KH):
        for kj in range(KW):
            out = out + jnp.pad(
                p[:, :, :, ki, kj, :],
                ((0, 0), (ki, KH - 1 - ki), (kj, KW - 1 - kj), (0, 0)))
    return jnp.tanh(out + bias)


def upsample_nearest_nhwc(x, out_h, out_w):
    """nn.Upsample(size=..., mode='nearest'): src = floor(dst * in / out)."""
    B, H, W, C = x.shape
    hi = (jnp.arange(out_h) * H // out_h).astype(jnp.int32)
    wi = (jnp.arange(out_w) * W // out_w).astype(jnp.int32)
    x = jnp.take(x, hi, axis=1)
    x = jnp.take(x, wi, axis=2)
    return x


# ----------------------------------------------------------------------------
# Model: shapes, parameters, packing, forward
# ----------------------------------------------------------------------------
IN_SIZE = (28, 28)
OUT_SIZE = 10


def _cout(x, k, stride=1, padding=0):
    return (x - k + 2 * padding) // stride + 1


H1, W1 = _cout(IN_SIZE[0], 4, 1), _cout(IN_SIZE[1], 4, 1)          # 25, 25
H2, W2 = _cout(H1, 2, 2), _cout(W1, 2, 2)                           # 12, 12
H3, W3 = _cout(H2, 4, 1), _cout(W2, 4, 1)                           # 9, 9
H4, W4 = _cout(H3, 2, 2), _cout(W3, 2, 2)                           # 4, 4
COUTSIZE = H4 * W4 * 50                                              # 800


def init_params(key):
    """PyTorch-style uniform(-1/sqrt(fan_in), 1/sqrt(fan_in)) init.
    For ConvTranspose2d, fan_in = weight.size(1) * k * k (matches torch)."""
    def u(k, shape, fan_in):
        bound = 1.0 / np.sqrt(fan_in)
        return jax.random.uniform(k, shape, jnp.float32, -bound, bound)

    ks = jax.random.split(key, 12)
    return {
        "conv1_w": u(ks[0], (20, 1, 4, 4), 1 * 16),
        "conv1_b": u(ks[1], (20,), 1 * 16),
        "conv2_w": u(ks[2], (50, 20, 4, 4), 20 * 16),
        "conv2_b": u(ks[3], (50,), 20 * 16),
        "lin_w":   u(ks[4], (OUT_SIZE, COUTSIZE), COUTSIZE),
        "lin_b":   u(ks[5], (OUT_SIZE,), COUTSIZE),
        "lin_t_w": u(ks[6], (COUTSIZE, OUT_SIZE), OUT_SIZE),
        "lin_t_b": u(ks[7], (COUTSIZE,), OUT_SIZE),
        "conv2_t_w": u(ks[8], (100, 20, 4, 4), 20 * 16),   # ConvTranspose2d(100,20,4)
        "conv2_t_b": u(ks[9], (20,), 20 * 16),
        "conv1_t_w": u(ks[10], (40, 1, 4, 4), 1 * 16),     # ConvTranspose2d(40,1,4)
        "conv1_t_b": u(ks[11], (1,), 1 * 16),
    }


def _pad_pack(wm, b):
    """(K, N) weight, (N,) bias -> bf16 (K, Npad) weight, f32 (1, Npad) bias."""
    K, N = wm.shape
    npad = _lane_pad(N)
    wm = jnp.pad(wm, ((0, 0), (0, npad - N))).astype(jnp.bfloat16)
    bm = jnp.pad(b, (0, npad - N)).reshape(1, npad).astype(jnp.float32)
    return wm, bm


def _pack_conv(w, b):
    """Conv2d weight (OC,IC,KH,KW) -> (KH*KW*IC, Npad) matching NHWC im2col."""
    OC, IC, KH, KW = w.shape
    wm = w.transpose(2, 3, 1, 0).reshape(KH * KW * IC, OC)
    return _pad_pack(wm, b)


def _pack_convt_scatter(w, b):
    """ConvTranspose2d weight (IC,OC,KH,KW) -> scatter-form (IC, KH*KW*OC),
    columns ordered (ki, kj, oc); bias kept as plain f32 for the XLA col2im."""
    IC, OC, KH, KW = w.shape
    n = KH * KW * OC
    wm = jnp.transpose(w, (0, 2, 3, 1)).reshape(IC, n)
    npad = _lane_pad(n)
    wm = jnp.pad(wm, ((0, 0), (0, npad - n))).astype(jnp.bfloat16)
    return wm, jnp.asarray(b, jnp.float32)


def _pack_linear_in_chw(w, b, C, H, W):
    """nn.Linear(C*H*W, N): reference input is NCHW-flat, ours is NHWC-flat."""
    N = w.shape[0]
    wm = w.reshape(N, C, H, W).transpose(2, 3, 1, 0).reshape(H * W * C, N)
    return _pad_pack(wm, b)


def _pack_linear_out_chw(w, b, C, H, W):
    """nn.Linear(K, C*H*W): reference output is NCHW-flat, ours is NHWC-flat.
    K is zero-padded to 128 rows so the fused kernel feeds padded logits."""
    K = w.shape[1]
    N = C * H * W
    wm = w.reshape(C, H, W, K).transpose(1, 2, 0, 3).reshape(N, K).T     # (K, N)
    bv = b.reshape(C, H, W).transpose(1, 2, 0).reshape(N)
    npad = _lane_pad(N)
    wm = jnp.pad(wm, ((0, 128 - K), (0, npad - N))).astype(jnp.bfloat16)
    bm = jnp.pad(bv, (0, npad - N)).reshape(1, npad).astype(jnp.float32)
    return wm, bm


def pack_params(p):
    """One-time (outside jit) repack: transpose/reshape, lane-pad, bf16."""
    packed = {}
    packed["conv1_w"], packed["conv1_b"] = _pack_conv(p["conv1_w"], p["conv1_b"])
    packed["conv2_w"], packed["conv2_b"] = _pack_conv(p["conv2_w"], p["conv2_b"])
    packed["lin_w"], packed["lin_b"] = _pack_linear_in_chw(
        p["lin_w"], p["lin_b"], 50, H4, W4)
    packed["lin_t_w"], packed["lin_t_b"] = _pack_linear_out_chw(
        p["lin_t_w"], p["lin_t_b"], 50, H4, W4)
    packed["conv2_t_w"], packed["conv2_t_b"] = _pack_convt_scatter(
        p["conv2_t_w"], p["conv2_t_b"])
    packed["conv1_t_w"], packed["conv1_t_b"] = _pack_convt_scatter(
        p["conv1_t_w"], p["conv1_t_b"])
    return packed


def net_forward(packed, x, hidden_conv1_in, hidden_conv2_in, strength=1.0):
    """Inputs/outputs are NCHW (PyTorch layout); internals are NHWC + bf16.
    Returns (out, new_hidden_conv1_in, new_hidden_conv2_in)."""
    B = x.shape[0]

    # ---- encoder ----
    # attention mask fused (by XLA) with the NCHW->NHWC transpose and im2col.
    x_in = (x * (1.0 - strength * hidden_conv1_in)).transpose(0, 2, 3, 1)
    p1 = conv_relu_pool(x_in, packed["conv1_w"], packed["conv1_b"], out_c=20)   # (B,12,12,20) bf16
    h2 = hidden_conv2_in.transpose(0, 2, 3, 1)
    xm = p1.astype(jnp.float32) * (1.0 - strength * h2)
    p2 = conv_relu_pool(xm, packed["conv2_w"], packed["conv2_b"], out_c=50)     # (B,4,4,50) bf16
    flat = p2.reshape(B, COUTSIZE)                                              # NHWC-flat, bf16

    # fused linear_out + tanh(linear_out_t)
    out, lin_in_flat = linear_enc_dec(flat, packed["lin_w"], packed["lin_b"],
                                      packed["lin_t_w"], packed["lin_t_b"],
                                      OUT_SIZE, COUTSIZE)                       # (B,10) f32, (B,800) bf16
    lin_in = lin_in_flat.reshape(B, H4, W4, 50)

    # ---- decoder / hidden-state updates (conv-transposes in scatter form) ----
    cat2 = jnp.concatenate([upsample_nearest_nhwc(lin_in, H3, W3),
                            upsample_nearest_nhwc(p2, H3, W3)], axis=-1)        # (B,9,9,100) bf16
    patches2 = matmul_tiled(cat2.reshape(B * H3 * W3, 100), packed["conv2_t_w"])
    conv2_in = col2im_bias_tanh(patches2, B, H3, W3, 4, 4, 20,
                                packed["conv2_t_b"])                            # (B,12,12,20) f32

    cat1 = jnp.concatenate([upsample_nearest_nhwc(conv2_in.astype(jnp.bfloat16),
                                                  H1, W1),
                            upsample_nearest_nhwc(p1, H1, W1)], axis=-1)        # (B,25,25,40) bf16
    patches1 = matmul_tiled(cat1.reshape(B * H1 * W1, 40), packed["conv1_t_w"])
    conv1_in = col2im_bias_tanh(patches1, B, H1, W1, 4, 4, 1,
                                packed["conv1_t_b"])                            # (B,28,28,1) f32

    # TODO(synk): out_mask branch of the reference forward is not implemented
    # (this models the out_mask=None path only).
    return (out,
            conv1_in.transpose(0, 3, 1, 2),     # (B,1,28,28)
            conv2_in.transpose(0, 3, 1, 2))     # (B,20,12,12)


# ----------------------------------------------------------------------------
if __name__ == "__main__":
    key = jax.random.PRNGKey(0)
    pkey, xkey = jax.random.split(key)
    params = init_params(pkey)
    packed = pack_params(params)        # one-time weight repack, outside jit

    B = 2
    x = jax.random.uniform(xkey, (B, 1, IN_SIZE[0], IN_SIZE[1]), jnp.float32)
    # initHidden(): zeros for both attention feedback maps
    hidden_conv1_in = jnp.zeros((B, 1, IN_SIZE[0], IN_SIZE[1]), jnp.float32)
    hidden_conv2_in = jnp.zeros((B, 20, H2, W2), jnp.float32)

    fwd = jax.jit(functools.partial(net_forward, strength=1.0))
    out, new_c1, new_c2 = fwd(packed, x, hidden_conv1_in, hidden_conv2_in)
    jax.block_until_ready((out, new_c1, new_c2))

    assert out.shape == (B, OUT_SIZE)
    assert new_c1.shape == (B, 1, IN_SIZE[0], IN_SIZE[1])
    assert new_c2.shape == (B, 20, H2, W2)
    assert bool(jnp.all(jnp.isfinite(out)))
    assert bool(jnp.all(jnp.isfinite(new_c1))) and bool(jnp.all(jnp.isfinite(new_c2)))
    print("KERNEL_OK")
</pallas_src>

<mosaic_0001>
module attributes {stable_mosaic.version = 11 : i64} {
  func.func @_conv_relu_pool_kernel(%arg0: i32, %arg1: memref<4x144x16xbf16, #tpu.memory_space<vmem>>, %arg2: memref<16x128xbf16, #tpu.memory_space<vmem>>, %arg3: memref<1x128xf32, #tpu.memory_space<vmem>>, %arg4: memref<144x128xbf16, #tpu.memory_space<vmem>>) attributes {dimension_semantics = [#tpu.dimension_semantics<parallel>], iteration_bounds = array<i64: 2>, scalar_prefetch = 0 : i64, scratch_operands = 0 : i64, tpu.core_type = #tpu.core_type<tc>, window_params = [{transform_indices = @transform_0, window_bounds = array<i64: 4, 144, 16>}, {pipeline_mode = #tpu.pipeline_mode<synchronous>, transform_indices = @transform_1, window_bounds = array<i64: 16, 128>}, {pipeline_mode = #tpu.pipeline_mode<synchronous>, transform_indices = @transform_2, window_bounds = array<i64: 1, 128>}, {transform_indices = @transform_3, window_bounds = array<i64: 144, 128>}]} {
    %c0 = arith.constant 0 : index
    %c0_0 = arith.constant 0 : index
    %c0_1 = arith.constant 0 : index
    %0 = vector.load %arg1[%c0, %c0_0, %c0_1] : memref<4x144x16xbf16, #tpu.memory_space<vmem>>, vector<1x144x16xbf16>
    %1 = vector.shape_cast %0 : vector<1x144x16xbf16> to vector<144x16xbf16>
    %c1 = arith.constant 1 : index
    %c0_2 = arith.constant 0 : index
    %c0_3 = arith.constant 0 : index
    %2 = vector.load %arg1[%c1, %c0_2, %c0_3] : memref<4x144x16xbf16, #tpu.memory_space<vmem>>, vector<1x144x16xbf16>
    %3 = vector.shape_cast %2 : vector<1x144x16xbf16> to vector<144x16xbf16>
    %c2 = arith.constant 2 : index
    %c0_4 = arith.constant 0 : index
    %c0_5 = arith.constant 0 : index
    %4 = vector.load %arg1[%c2, %c0_4, %c0_5] : memref<4x144x16xbf16, #tpu.memory_space<vmem>>, vector<1x144x16xbf16>
    %5 = vector.shape_cast %4 : vector<1x144x16xbf16> to vector<144x16xbf16>
    %c3 = arith.constant 3 : index
    %c0_6 = arith.constant 0 : index
    %c0_7 = arith.constant 0 : index
    %6 = vector.load %arg1[%c3, %c0_6, %c0_7] : memref<4x144x16xbf16, #tpu.memory_space<vmem>>, vector<1x144x16xbf16>
    %7 = vector.shape_cast %6 : vector<1x144x16xbf16> to vector<144x16xbf16>
    %8 = tpu.concatenate %1, %3, %5, %7 in 0 : vector<144x16xbf16>, vector<144x16xbf16>, vector<144x16xbf16>, vector<144x16xbf16> -> vector<576x16xbf16>
    %c0_8 = arith.constant 0 : index
    %c0_9 = arith.constant 0 : index
    %9 = vector.load %arg2[%c0_8, %c0_9] : memref<16x128xbf16, #tpu.memory_space<vmem>>, vector<16x128xbf16>
    %cst = arith.constant dense<0.000000e+00> : vector<576x128xf32>
    %10 = tpu.matmul %8, %9, %cst {dimension_numbers = #tpu.dot_dimension_numbers<[1], [0], [0], [1], [0, 0, 1, 1], [], []>} : vector<576x16xbf16>, vector<16x128xbf16>, vector<576x128xf32> -> vector<576x128xf32>
    %11 = vector.extract_strided_slice %10 {offsets = [0, 0], sizes = [144, 128], strides = [1, 1]} : vector<576x128xf32> to vector<144x128xf32>
    %12 = vector.extract_strided_slice %10 {offsets = [144, 0], sizes = [144, 128], strides = [1, 1]} : vector<576x128xf32> to vector<144x128xf32>
    %13 = arith.maximumf %11, %12 : vector<144x128xf32>
    %14 = vector.extract_strided_slice %10 {offsets = [288, 0], sizes = [144, 128], strides = [1, 1]} : vector<576x128xf32> to vector<144x128xf32>
    %15 = vector.extract_strided_slice %10 {offsets = [432, 0], sizes = [144, 128], strides = [1, 1]} : vector<576x128xf32> to vector<144x128xf32>
    %16 = arith.maximumf %14, %15 : vector<144x128xf32>
    %17 = arith.maximumf %13, %16 : vector<144x128xf32>
    %c0_10 = arith.constant 0 : index
    %c0_11 = arith.constant 0 : index
    %18 = vector.load %arg3[%c0_10, %c0_11] : memref<1x128xf32, #tpu.memory_space<vmem>>, vector<1x128xf32>
    %19 = vector.broadcast %18 : vector<1x128xf32> to vector<144x128xf32>
    %20 = arith.addf %17, %19 : vector<144x128xf32>
    %cst_12 = arith.constant 0.000000e+00 : f32
    %21 = vector.broadcast %cst_12 : f32 to vector<144x128xf32>
    %22 = arith.maximumf %20, %21 : vector<144x128xf32>
    %23 = arith.truncf %22 : vector<144x128xf32> to vector<144x128xbf16>
    %c0_13 = arith.constant 0 : index
    %c0_14 = arith.constant 0 : index
    %24 = vector.load %arg4[%c0_13, %c0_14] : memref<144x128xbf16, #tpu.memory_space<vmem>>, vector<144x128xbf16>
    tpu.vector_store %arg4[%c0_13, %c0_14], %23 {strides = array<i32>} : memref<144x128xbf16, #tpu.memory_space<vmem>>, vector<144x128xbf16>,
    return
  }
  func.func @transform_0(%arg0: i32) -> (i32, i32, i32) {
    %c0_i32 = arith.constant 0 : i32
    %c0_i32_0 = arith.constant 0 : i32
    %c0_i32_1 = arith.constant 0 : i32
    return %c0_i32, %arg0, %c0_i32_0 : i32, i32, i32
  }
  func.func @transform_1(%arg0: i32) -> (i32, i32) {
    %c0_i32 = arith.constant 0 : i32
    %c0_i32_0 = arith.constant 0 : i32
    %c0_i32_1 = arith.constant 0 : i32
    return %c0_i32, %c0_i32_0 : i32, i32
  }
  func.func @transform_2(%arg0: i32) -> (i32, i32) {
    %c0_i32 = arith.constant 0 : i32
    %c0_i32_0 = arith.constant 0 : i32
    %c0_i32_1 = arith.constant 0 : i32
    return %c0_i32, %c0_i32_0 : i32, i32
  }
  func.func @transform_3(%arg0: i32) -> (i32, i32) {
    %c0_i32 = arith.constant 0 : i32
    %c0_i32_0 = arith.constant 0 : i32
    return %arg0, %c0_i32 : i32, i32
  }
}

module attributes {stable_mosaic.version = 11 : i64} {
  func.func @_lin_enc_dec_kernel(%arg0: memref<16x800xbf16, #tpu.memory_space<vmem>>, %arg1: memref<800x128xbf16, #tpu.memory_space<vmem>>, %arg2: memref<1x128xf32, #tpu.memory_space<vmem>>, %arg3: memref<128x896xbf16, #tpu.memory_space<vmem>>, %arg4: memref<1x896xf32, #tpu.memory_space<vmem>>, %arg5: memref<16x128xf32, #tpu.memory_space<vmem>>, %arg6: memref<16x896xbf16, #tpu.memory_space<vmem>>) attributes {dimension_semantics = [], scalar_prefetch = 0 : i64, scratch_operands = 0 : i64, tpu.core_type = #tpu.core_type<tc>} {
    %c0 = arith.constant 0 : index
    %c0_0 = arith.constant 0 : index
    %0 = vector.load %arg0[%c0, %c0_0] : memref<16x800xbf16, #tpu.memory_space<vmem>>, vector<16x800xbf16>
    %c0_1 = arith.constant 0 : index
    %c0_2 = arith.constant 0 : index
    %1 = vector.load %arg1[%c0_1, %c0_2] : memref<800x128xbf16, #tpu.memory_space<vmem>>, vector<800x128xbf16>
    %cst = arith.constant dense<0.000000e+00> : vector<16x128xf32>
    %2 = tpu.matmul %0, %1, %cst {dimension_numbers = #tpu.dot_dimension_numbers<[1], [0], [0], [1], [0, 0, 1, 1], [], []>} : vector<16x800xbf16>, vector<800x128xbf16>, vector<16x128xf32> -> vector<16x128xf32>
    %c0_3 = arith.constant 0 : index
    %c0_4 = arith.constant 0 : index
    %3 = vector.load %arg2[%c0_3, %c0_4] : memref<1x128xf32, #tpu.memory_space<vmem>>, vector<1x128xf32>
    %4 = vector.broadcast %3 : vector<1x128xf32> to vector<16x128xf32>
    %5 = arith.addf %2, %4 : vector<16x128xf32>
    %c0_5 = arith.constant 0 : index
    %c0_6 = arith.constant 0 : index
    %6 = vector.load %arg5[%c0_5, %c0_6] : memref<16x128xf32, #tpu.memory_space<vmem>>, vector<16x128xf32>
    tpu.vector_store %arg5[%c0_5, %c0_6], %5 {strides = array<i32>} : memref<16x128xf32, #tpu.memory_space<vmem>>, vector<16x128xf32>,
    %7 = arith.truncf %5 : vector<16x128xf32> to vector<16x128xbf16>
    %c0_7 = arith.constant 0 : index
    %c0_8 = arith.constant 0 : index
    %8 = vector.load %arg3[%c0_7, %c0_8] : memref<128x896xbf16, #tpu.memory_space<vmem>>, vector<128x896xbf16>
    %cst_9 = arith.constant dense<0.000000e+00> : vector<16x896xf32>
    %9 = tpu.matmul %7, %8, %cst_9 {dimension_numbers = #tpu.dot_dimension_numbers<[1], [0], [0], [1], [0, 0, 1, 1], [], []>} : vector<16x128xbf16>, vector<128x896xbf16>, vector<16x896xf32> -> vector<16x896xf32>
    %c0_10 = arith.constant 0 : index
    %c0_11 = arith.constant 0 : index
    %10 = vector.load %arg4[%c0_10, %c0_11] : memref<1x896xf32, #tpu.memory_space<vmem>>, vector<1x896xf32>
    %11 = vector.broadcast %10 : vector<1x896xf32> to vector<16x896xf32>
    %12 = arith.addf %9, %11 : vector<16x896xf32>
    %13 = math.tanh %12 : vector<16x896xf32>
    %14 = arith.truncf %13 : vector<16x896xf32> to vector<16x896xbf16>
    %c0_12 = arith.constant 0 : index
    %c0_13 = arith.constant 0 : index
    %15 = vector.load %arg6[%c0_12, %c0_13] : memref<16x896xbf16, #tpu.memory_space<vmem>>, vector<16x896xbf16>
    tpu.vector_store %arg6[%c0_12, %c0_13], %14 {strides = array<i32>} : memref<16x896xbf16, #tpu.memory_space<vmem>>, vector<16x896xbf16>,
    return
  }
}

module attributes {stable_mosaic.version = 11 : i64} {
  func.func @_conv_relu_pool_kernel(%arg0: i32, %arg1: memref<4x32x320xbf16, #tpu.memory_space<vmem>>, %arg2: memref<320x128xbf16, #tpu.memory_space<vmem>>, %arg3: memref<1x128xf32, #tpu.memory_space<vmem>>, %arg4: memref<32x128xbf16, #tpu.memory_space<vmem>>) attributes {dimension_semantics = [#tpu.dimension_semantics<parallel>], iteration_bounds = array<i64: 1>, scalar_prefetch = 0 : i64, scratch_operands = 0 : i64, tpu.core_type = #tpu.core_type<tc>, window_params = [{transform_indices = @transform_0, window_bounds = array<i64: 4, 32, 320>}, {pipeline_mode = #tpu.pipeline_mode<synchronous>, transform_indices = @transform_1, window_bounds = array<i64: 320, 128>}, {pipeline_mode = #tpu.pipeline_mode<synchronous>, transform_indices = @transform_2, window_bounds = array<i64: 1, 128>}, {transform_indices = @transform_3, window_bounds = array<i64: 32, 128>}]} {
    %c0 = arith.constant 0 : index
    %c0_0 = arith.constant 0 : index
    %c0_1 = arith.constant 0 : index
    %0 = vector.load %arg1[%c0, %c0_0, %c0_1] : memref<4x32x320xbf16, #tpu.memory_space<vmem>>, vector<1x32x320xbf16>
    %1 = vector.shape_cast %0 : vector<1x32x320xbf16> to vector<32x320xbf16>
    %c1 = arith.constant 1 : index
    %c0_2 = arith.constant 0 : index
    %c0_3 = arith.constant 0 : index
    %2 = vector.load %arg1[%c1, %c0_2, %c0_3] : memref<4x32x320xbf16, #tpu.memory_space<vmem>>, vector<1x32x320xbf16>
    %3 = vector.shape_cast %2 : vector<1x32x320xbf16> to vector<32x320xbf16>
    %c2 = arith.constant 2 : index
    %c0_4 = arith.constant 0 : index
    %c0_5 = arith.constant 0 : index
    %4 = vector.load %arg1[%c2, %c0_4, %c0_5] : memref<4x32x320xbf16, #tpu.memory_space<vmem>>, vector<1x32x320xbf16>
    %5 = vector.shape_cast %4 : vector<1x32x320xbf16> to vector<32x320xbf16>
    %c3 = arith.constant 3 : index
    %c0_6 = arith.constant 0 : index
    %c0_7 = arith.constant 0 : index
    %6 = vector.load %arg1[%c3, %c0_6, %c0_7] : memref<4x32x320xbf16, #tpu.memory_space<vmem>>, vector<1x32x320xbf16>
    %7 = vector.shape_cast %6 : vector<1x32x320xbf16> to vector<32x320xbf16>
    %8 = tpu.concatenate %1, %3, %5, %7 in 0 : vector<32x320xbf16>, vector<32x320xbf16>, vector<32x320xbf16>, vector<32x320xbf16> -> vector<128x320xbf16>
    %c0_8 = arith.constant 0 : index
    %c0_9 = arith.constant 0 : index
    %9 = vector.load %arg2[%c0_8, %c0_9] : memref<320x128xbf16, #tpu.memory_space<vmem>>, vector<320x128xbf16>
    %cst = arith.constant dense<0.000000e+00> : vector<128x128xf32>
    %10 = tpu.matmul %8, %9, %cst {dimension_numbers = #tpu.dot_dimension_numbers<[1], [0], [0], [1], [0, 0, 1, 1], [], []>} : vector<128x320xbf16>, vector<320x128xbf16>, vector<128x128xf32> -> vector<128x128xf32>
    %11 = vector.extract_strided_slice %10 {offsets = [0, 0], sizes = [32, 128], strides = [1, 1]} : vector<128x128xf32> to vector<32x128xf32>
    %12 = vector.extract_strided_slice %10 {offsets = [32, 0], sizes = [32, 128], strides = [1, 1]} : vector<128x128xf32> to vector<32x128xf32>
    %13 = arith.maximumf %11, %12 : vector<32x128xf32>
    %14 = vector.extract_strided_slice %10 {offsets = [64, 0], sizes = [32, 128], strides = [1, 1]} : vector<128x128xf32> to vector<32x128xf32>
    %15 = vector.extract_strided_slice %10 {offsets = [96, 0], sizes = [32, 128], strides = [1, 1]} : vector<128x128xf32> to vector<32x128xf32>
    %16 = arith.maximumf %14, %15 : vector<32x128xf32>
    %17 = arith.maximumf %13, %16 : vector<32x128xf32>
    %c0_10 = arith.constant 0 : index
    %c0_11 = arith.constant 0 : index
    %18 = vector.load %arg3[%c0_10, %c0_11] : memref<1x128xf32, #tpu.memory_space<vmem>>, vector<1x128xf32>
    %19 = vector.broadcast %18 : vector<1x128xf32> to vector<32x128xf32>
    %20 = arith.addf %17, %19 : vector<32x128xf32>
    %cst_12 = arith.constant 0.000000e+00 : f32
    %21 = vector.broadcast %cst_12 : f32 to vector<32x128xf32>
    %22 = arith.maximumf %20, %21 : vector<32x128xf32>
    %23 = arith.truncf %22 : vector<32x128xf32> to vector<32x128xbf16>
    %c0_13 = arith.constant 0 : index
    %c0_14 = arith.constant 0 : index
    %24 = vector.load %arg4[%c0_13, %c0_14] : memref<32x128xbf16, #tpu.memory_space<vmem>>, vector<32x128xbf16>
    tpu.vector_store %arg4[%c0_13, %c0_14], %23 {strides = array<i32>} : memref<32x128xbf16, #tpu.memory_space<vmem>>, vector<32x128xbf16>,
    return
  }
  func.func @transform_0(%arg0: i32) -> (i32, i32, i32) {
    %c0_i32 = arith.constant 0 : i32
    %c0_i32_0 = arith.constant 0 : i32
    %c0_i32_1 = arith.constant 0 : i32
    return %c0_i32, %arg0, %c0_i32_0 : i32, i32, i32
  }
  func.func @transform_1(%arg0: i32) -> (i32, i32) {
    %c0_i32 = arith.constant 0 : i32
    %c0_i32_0 = arith.constant 0 : i32
    %c0_i32_1 = arith.constant 0 : i32
    return %c0_i32, %c0_i32_0 : i32, i32
  }
  func.func @transform_2(%arg0: i32) -> (i32, i32) {
    %c0_i32 = arith.constant 0 : i32
    %c0_i32_0 = arith.constant 0 : i32
    %c0_i32_1 = arith.constant 0 : i32
    return %c0_i32, %c0_i32_0 : i32, i32
  }
  func.func @transform_3(%arg0: i32) -> (i32, i32) {
    %c0_i32 = arith.constant 0 : i32
    %c0_i32_0 = arith.constant 0 : i32
    return %arg0, %c0_i32 : i32, i32
  }
}

module attributes {stable_mosaic.version = 11 : i64} {
  func.func @_matmul_kernel(%arg0: i32, %arg1: memref<176x100xbf16, #tpu.memory_space<vmem>>, %arg2: memref<100x384xbf16, #tpu.memory_space<vmem>>, %arg3: memref<176x384xbf16, #tpu.memory_space<vmem>>) attributes {dimension_semantics = [#tpu.dimension_semantics<parallel>], iteration_bounds = array<i64: 1>, scalar_prefetch = 0 : i64, scratch_operands = 0 : i64, tpu.core_type = #tpu.core_type<tc>, window_params = [{transform_indices = @transform_0, window_bounds = array<i64: 176, 100>}, {pipeline_mode = #tpu.pipeline_mode<synchronous>, transform_indices = @transform_1, window_bounds = array<i64: 100, 384>}, {transform_indices = @transform_2, window_bounds = array<i64: 176, 384>}]} {
    %c0 = arith.constant 0 : index
    %c0_0 = arith.constant 0 : index
    %0 = vector.load %arg1[%c0, %c0_0] : memref<176x100xbf16, #tpu.memory_space<vmem>>, vector<176x100xbf16>
    %c0_1 = arith.constant 0 : index
    %c0_2 = arith.constant 0 : index
    %1 = vector.load %arg2[%c0_1, %c0_2] : memref<100x384xbf16, #tpu.memory_space<vmem>>, vector<100x384xbf16>
    %cst = arith.constant dense<0.000000e+00> : vector<176x384xf32>
    %2 = tpu.matmul %0, %1, %cst {dimension_numbers = #tpu.dot_dimension_numbers<[1], [0], [0], [1], [0, 0, 1, 1], [], []>} : vector<176x100xbf16>, vector<100x384xbf16>, vector<176x384xf32> -> vector<176x384xf32>
    %3 = arith.truncf %2 : vector<176x384xf32> to vector<176x384xbf16>
    %c0_3 = arith.constant 0 : index
    %c0_4 = arith.constant 0 : index
    %4 = vector.load %arg3[%c0_3, %c0_4] : memref<176x384xbf16, #tpu.memory_space<vmem>>, vector<176x384xbf16>
    tpu.vector_store %arg3[%c0_3, %c0_4], %3 {strides = array<i32>} : memref<176x384xbf16, #tpu.memory_space<vmem>>, vector<176x384xbf16>,
    return
  }
  func.func @transform_0(%arg0: i32) -> (i32, i32) {
    %c0_i32 = arith.constant 0 : i32
    %c0_i32_0 = arith.constant 0 : i32
    return %arg0, %c0_i32 : i32, i32
  }
  func.func @transform_1(%arg0: i32) -> (i32, i32) {
    %c0_i32 = arith.constant 0 : i32
    %c0_i32_0 = arith.constant 0 : i32
    %c0_i32_1 = arith.constant 0 : i32
    return %c0_i32, %c0_i32_0 : i32, i32
  }
  func.func @transform_2(%arg0: i32) -> (i32, i32) {
    %c0_i32 = arith.constant 0 : i32
    %c0_i32_0 = arith.constant 0 : i32
    return %arg0, %c0_i32 : i32, i32
  }
}

module attributes {stable_mosaic.version = 11 : i64} {
  func.func @_matmul_kernel(%arg0: i32, %arg1: memref<432x40xbf16, #tpu.memory_space<vmem>>, %arg2: memref<40x128xbf16, #tpu.memory_space<vmem>>, %arg3: memref<432x128xbf16, #tpu.memory_space<vmem>>) attributes {dimension_semantics = [#tpu.dimension_semantics<parallel>], iteration_bounds = array<i64: 3>, scalar_prefetch = 0 : i64, scratch_operands = 0 : i64, tpu.core_type = #tpu.core_type<tc>, window_params = [{transform_indices = @transform_0, window_bounds = array<i64: 432, 40>}, {pipeline_mode = #tpu.pipeline_mode<synchronous>, transform_indices = @transform_1, window_bounds = array<i64: 40, 128>}, {transform_indices = @transform_2, window_bounds = array<i64: 432, 128>}]} {
    %c0 = arith.constant 0 : index
    %c0_0 = arith.constant 0 : index
    %0 = vector.load %arg1[%c0, %c0_0] : memref<432x40xbf16, #tpu.memory_space<vmem>>, vector<432x40xbf16>
    %c0_1 = arith.constant 0 : index
    %c0_2 = arith.constant 0 : index
    %1 = vector.load %arg2[%c0_1, %c0_2] : memref<40x128xbf16, #tpu.memory_space<vmem>>, vector<40x128xbf16>
    %cst = arith.constant dense<0.000000e+00> : vector<432x128xf32>
    %2 = tpu.matmul %0, %1, %cst {dimension_numbers = #tpu.dot_dimension_numbers<[1], [0], [0], [1], [0, 0, 1, 1], [], []>} : vector<432x40xbf16>, vector<40x128xbf16>, vector<432x128xf32> -> vector<432x128xf32>
    %3 = arith.truncf %2 : vector<432x128xf32> to vector<432x128xbf16>
    %c0_3 = arith.constant 0 : index
    %c0_4 = arith.constant 0 : index
    %4 = vector.load %arg3[%c0_3, %c0_4] : memref<432x128xbf16, #tpu.memory_space<vmem>>, vector<432x128xbf16>
    tpu.vector_store %arg3[%c0_3, %c0_4], %3 {strides = array<i32>} : memref<432x128xbf16, #tpu.memory_space<vmem>>, vector<432x128xbf16>,
    return
  }
  func.func @transform_0(%arg0: i32) -> (i32, i32) {
    %c0_i32 = arith.constant 0 : i32
    %c0_i32_0 = arith.constant 0 : i32
    return %arg0, %c0_i32 : i32, i32
  }
  func.func @transform_1(%arg0: i32) -> (i32, i32) {
    %c0_i32 = arith.constant 0 : i32
    %c0_i32_0 = arith.constant 0 : i32
    %c0_i32_1 = arith.constant 0 : i32
    return %c0_i32, %c0_i32_0 : i32, i32
  }
  func.func @transform_2(%arg0: i32) -> (i32, i32) {
    %c0_i32 = arith.constant 0 : i32
    %c0_i32_0 = arith.constant 0 : i32
    return %arg0, %c0_i32 : i32, i32
  }
}

</mosaic_0001>

<llo_original>
// kernel: net_forward.5
$region0: #{net_forward.5}
  #allocation0 [shape = 'u32[]', space=smem, size = 0x4, offset = 0x4, fixed_abs, tag = 'smem constant byte address 0x4 - core index']
  #allocation1 [shape = 'u32[144,128]{1,0:T(1,128)}', space=vmem, size = 0x12000, scoped, tag = 'internal scratch']
  %s0 = inlined_call_operand.vmem [shape: bf16[4,288,16], index: 0, kind: input, shape index: {}]
  %s1 = inlined_call_operand.vmem [shape: bf16[16,128], index: 1, kind: input, shape index: {}]
  %s2 = inlined_call_operand.vmem [shape: f32[1,128], index: 2, kind: input, shape index: {}]
  %s3 = inlined_call_operand.vmem [shape: bf16[288,128], index: 3, kind: output, shape index: {}]
  %s4 = sld [smem:[#allocation0]]
  $region86: #{net_forward.5} parent=0
    _
  %s6 = ssub.s32 1, %s4
  %s7 = scalar_select 0, %s6, %s4
  $region1: #{net_forward.5} parent=0
    #allocation2 [shape = 'u8[294912]{0}', space=vmem, size = 0x48000, scoped, tag = 'input window, operand 0']
    loop: start=0, step=1, limit=4
    $region2: #{net_forward.5} parent=1 // loop_pre_header
      _
    $region3: #{net_forward.5} parent=1 // loop_header
      %s9 = sphi 0, %s13
      %p10 = scmp.ge.s32.totalorder %s9, 4
      %s19 = sphi 0, %s21
      %s22 = sphi 0, %s19
      %s23 = sphi 0, %s22
      %s39 = sphi 0, %s23
      %s43 = sphi 0, %s43
      %s45 = sphi 0, %s43
      %s46 = sphi 0, %s45
      %s60 = sphi 0, %s46
      %s64 = sphi 0, %s64
      %s66 = sphi 0, %s64
      %s67 = sphi 0, %s66
      %s81 = sphi 0, %s67
      %s87 = sphi 0, %s89
      %s90 = sphi 0, %s87
      %s91 = sphi 0, %s90
      %s107 = sphi 0, %s91
    $region4: #{net_forward.5} parent=1 // loop_header_branch
      %12 = sbr.rel (%p10) target = $region8
    $region5: #{net_forward.5} parent=1 // loop_body
      %s14 = ssub.s32 %s9, 1
      %s15 = ssub.s32 %s9, 2
      %s16 = sadd.s32 %s9, 1
      %s17 = ssub.s32 %s9, %s16
      %p18 = scmp.eq.s32.totalorder %s17, 0
      %s20 = sadd.s32 %s19, 1
      %s21 = scalar_select %p18, %s19, %s20
      %p24 = pneg %p18
      %p25 = scmp.eq.s32.totalorder %s9, 1
      %p26 = por %p24, %p25
      %p27 = scmp.ne.s32.totalorder %s19, %s22
      %p28 = scmp.eq.s32.totalorder %s9, 0
      %p29 = por %p27, %p28
      %p30 = scmp.ne.s32.totalorder %s19, %s22
      %p31 = scmp.eq.s32.totalorder %s14, 1
      %p32 = por %p30, %p31
      %p33 = scmp.ne.s32.totalorder %s22, %s23
      %p34 = scmp.eq.s32.totalorder %s14, 0
      %p35 = por %p33, %p34
      %p36 = scmp.ne.s32.totalorder %s22, %s23
      %p37 = scmp.eq.s32.totalorder %s15, 1
      %p38 = por %p36, %p37
      %p40 = scmp.ne.s32.totalorder %s23, %s39
      %p41 = scmp.eq.s32.totalorder %s15, 0
      %p42 = por %p40, %p41
      %s44 = sadd.s32 %s43, 1
      %p47 = scmp.eq.s32.totalorder %s9, 1
      %p48 = scmp.ne.s32.totalorder %s43, %s45
      %p49 = scmp.eq.s32.totalorder %s9, 0
      %p50 = por %p48, %p49
      %p51 = scmp.ne.s32.totalorder %s43, %s45
      %p52 = scmp.eq.s32.totalorder %s14, 1
      %p53 = por %p51, %p52
      %p54 = scmp.ne.s32.totalorder %s45, %s46
      %p55 = scmp.eq.s32.totalorder %s14, 0
      %p56 = por %p54, %p55
      %p57 = scmp.ne.s32.totalorder %s45, %s46
      %p58 = scmp.eq.s32.totalorder %s15, 1
      %p59 = por %p57, %p58
      %p61 = scmp.ne.s32.totalorder %s46, %s60
      %p62 = scmp.eq.s32.totalorder %s15, 0
      %p63 = por %p61, %p62
      %s65 = sadd.s32 %s64, 1
      %p68 = scmp.eq.s32.totalorder %s9, 1
      %p69 = scmp.ne.s32.totalorder %s64, %s66
      %p70 = scmp.eq.s32.totalorder %s9, 0
      %p71 = por %p69, %p70
      %p72 = scmp.ne.s32.totalorder %s64, %s66
      %p73 = scmp.eq.s32.totalorder %s14, 1
      %p74 = por %p72, %p73
      %p75 = scmp.ne.s32.totalorder %s66, %s67
      %p76 = scmp.eq.s32.totalorder %s14, 0
      %p77 = por %p75, %p76
      %p78 = scmp.ne.s32.totalorder %s66, %s67
      %p79 = scmp.eq.s32.totalorder %s15, 1
      %p80 = por %p78, %p79
      %p82 = scmp.ne.s32.totalorder %s67, %s81
      %p83 = scmp.eq.s32.totalorder %s15, 0
      %p84 = por %p82, %p83
      %s85 = ssub.s32 %s9, %s16
      %p86 = scmp.eq.s32.totalorder %s85, 0
      %s88 = sadd.s32 %s87, 1
      %s89 = scalar_select %p86, %s87, %s88
      %p92 = pneg %p86
      %p93 = scmp.eq.s32.totalorder %s9, 1
      %p94 = por %p92, %p93
      %p95 = scmp.ne.s32.totalorder %s87, %s90
      %p96 = scmp.eq.s32.totalorder %s9, 0
      %p97 = por %p95, %p96
      %p98 = scmp.ne.s32.totalorder %s87, %s90
      %p99 = scmp.eq.s32.totalorder %s14, 1
      %p100 = por %p98, %p99
      %p101 = scmp.ne.s32.totalorder %s90, %s91
      %p102 = scmp.eq.s32.totalorder %s14, 0
      %p103 = por %p101, %p102
      %p104 = scmp.ne.s32.totalorder %s90, %s91
      %p105 = scmp.eq.s32.totalorder %s15, 1
      %p106 = por %p104, %p105
      %p108 = scmp.ne.s32.totalorder %s91, %s107
      %p109 = scmp.eq.s32.totalorder %s15, 0
      %p110 = por %p108, %p109
      %p111 = scmp.le.s32.totalorder 1, %s9
      %p112 = scmp.lt.s32.totalorder %s9, 3
      %p113 = pnand %p111, %p112
      %p114 = pneg %p113
      // Predicated region
      $region9: #{net_forward.5} parent=5 // pred_check
        _
      $region10: #{net_forward.5} parent=5 // pred_check_branch
        %116 = sbr.rel (%p113) target = $region12
      $region11: #{net_forward.5} parent=5 // pred_region
        %s117 = ssub.s32 %s9, 1
        // Predicated region
        $region13: #{net_forward.5} parent=11 // pred_check
          %p118 = pneg %p56
        $region14: #{net_forward.5} parent=11 // pred_check_branch
          %120 = sbr.rel (%p118) target = $region16
        $region15: #{net_forward.5} parent=11 // pred_region
          _
        $region16: #{net_forward.5} parent=11 // pred_fallthru
          _
        // Predicated region
        $region17: #{net_forward.5} parent=11 // pred_check
          %p121 = pneg %p77
        $region18: #{net_forward.5} parent=11 // pred_check_branch
          %123 = sbr.rel (%p121) target = $region20
        $region19: #{net_forward.5} parent=11 // pred_region
          _
        $region20: #{net_forward.5} parent=11 // pred_fallthru
          _
      $region12: #{net_forward.5} parent=5 // pred_fallthru
        _
      %p124 = scmp.lt.s32.totalorder %s9, 2
      // Predicated region
      $region21: #{net_forward.5} parent=5 // pred_check
        %p125 = pneg %p124
      $region22: #{net_forward.5} parent=5 // pred_check_branch
        %127 = sbr.rel (%p125) target = $region24
      $region23: #{net_forward.5} parent=5 // pred_region
        // Predicated region
        $region25: #{net_forward.5} parent=23 // pred_check
          %p128 = pneg %p29
        $region26: #{net_forward.5} parent=23 // pred_check_branch
          %130 = sbr.rel (%p128) target = $region28
        $region27: #{net_forward.5} parent=23 // pred_region
          %s131 = sand.u32 %s19, 1
          %s132 = sand.u32 %s19, 1
          %s133 = smul.addr %s132, 288
          %s134 = scalar_lea.vmem [#allocation2], %s133
          %s135 = smul.u32 18, %s9
          %s136 = smul.addr %s135, 4
          %s137 = scalar_lea.vmem %s0, %s136
          // Predicated region
          $region29: #{net_forward.5} parent=27 // pred_check
            _
          $region30: #{net_forward.5} parent=27 // pred_check_branch
            %139 = sbr.rel (0) target = $region32
          $region31: #{net_forward.5} parent=27 // pred_region
            // Predicated region
            $region33: #{net_forward.5} parent=31 // pred_check
              _
            $region34: #{net_forward.5} parent=31 // pred_check_branch
              %141 = sbr.rel target = $region36
            $region35: #{net_forward.5} parent=31 // pred_region
              // Predicated region
              $region48: #{net_forward.5} parent=35 // pred_check
                _
              $region49: #{net_forward.5} parent=35 // pred_check_branch
                %299 = sbr.rel (0) target = $region51
              $region50: #{net_forward.5} parent=35 // pred_region
                loop: start=0, step=1, limit=1
                $region52: #{net_forward.5} parent=50 // loop_pre_header
                  _
                $region53: #{net_forward.5} parent=50 // loop_header
                  %s301 = sphi 0, %s305
                  %p302 = scmp.ge.s32.totalorder %s301, 1
                  %s306 = sphi %s137, %s137
                  %s307 = sphi %s134, %s134
                $region54: #{net_forward.5} parent=50 // loop_header_branch
                  %304 = sbr.rel (%p302) target = $region58
                $region55: #{net_forward.5} parent=50 // loop_body
                  _
                $region56: #{net_forward.5} parent=50 // loop_footer
                  %s305 = sadd.s32 1, %s301
                $region57: #{net_forward.5} parent=50 // loop_footer_branch
                  %300 = sbr.rel target = $region53
                $region58: #{net_forward.5} parent=50 // loop_exit
                  _
                %s309 = ssub.s32 16, 1
                loop: start=0, step=1, limit=1
                $region59: #{net_forward.5} parent=50 // loop_pre_header
                  _
                $region60: #{net_forward.5} parent=50 // loop_header
                  %s311 = sphi 0, %s315
                  %p312 = scmp.ge.s32.totalorder %s311, 1
                  %s316 = sphi %s137, %s137
                  %s317 = sphi %s134, %s134
                $region61: #{net_forward.5} parent=50 // loop_header_branch
                  %314 = sbr.rel (%p312) target = $region65
                $region62: #{net_forward.5} parent=50 // loop_body
                  %v318 = vld [vmem:[%s316] sm:%s309]
                  %319 = vst [vmem:[%s317] sm:%s309] %v318
                  %v320 = vld [vmem:[%s316 + $0x4] sm:%s309]
                  %321 = vst [vmem:[%s317 + $0x4] sm:%s309] %v320
                  %v322 = vld [vmem:[%s316 + $0x8] sm:%s309]
                  %323 = vst [vmem:[%s317 + $0x8] sm:%s309] %v322
                  %v324 = vld [vmem:[%s316 + $0xc] sm:%s309]
                  %325 = vst [vmem:[%s317 + $0xc] sm:%s309] %v324
                  %v326 = vld [vmem:[%s316 + $0x10] sm:%s309]
                  %327 = vst [vmem:[%s317 + $0x10] sm:%s309] %v326
                  %v328 = vld [vmem:[%s316 + $0x14] sm:%s309]
                  %329 = vst [vmem:[%s317 + $0x14] sm:%s309] %v328
                  %v330 = vld [vmem:[%s316 + $0x18] sm:%s309]
                  %331 = vst [vmem:[%s317 + $0x18] sm:%s309] %v330
                  %v332 = vld [vmem:[%s316 + $0x1c] sm:%s309]
                  %333 = vst [vmem:[%s317 + $0x1c] sm:%s309] %v332
                  %v334 = vld [vmem:[%s316 + $0x20] sm:%s309]
                  %335 = vst [vmem:[%s317 + $0x20] sm:%s309] %v334
                  %v336 = vld [vmem:[%s316 + $0x24] sm:%s309]
                  %337 = vst [vmem:[%s317 + $0x24] sm:%s309] %v336
                  %v338 = vld [vmem:[%s316 + $0x28] sm:%s309]
                  %339 = vst [vmem:[%s317 + $0x28] sm:%s309] %v338
                  %v340 = vld [vmem:[%s316 + $0x2c] sm:%s309]
                  %341 = vst [vmem:[%s317 + $0x2c] sm:%s309] %v340
                  %v342 = vld [vmem:[%s316 + $0x30] sm:%s309]
                  %343 = vst [vmem:[%s317 + $0x30] sm:%s309] %v342
                  %v344 = vld [vmem:[%s316 + $0x34] sm:%s309]
                  %345 = vst [vmem:[%s317 + $0x34] sm:%s309] %v344
                  %v346 = vld [vmem:[%s316 + $0x38] sm:%s309]
                  %347 = vst [vmem:[%s317 + $0x38] sm:%s309] %v346
                  %v348 = vld [vmem:[%s316 + $0x3c] sm:%s309]
                  %349 = vst [vmem:[%s317 + $0x3c] sm:%s309] %v348
                  %v350 = vld [vmem:[%s316 + $0x40] sm:%s309]
                  %351 = vst [vmem:[%s317 + $0x40] sm:%s309] %v350
                  %v352 = vld [vmem:[%s316 + $0x44] sm:%s309]
                  %353 = vst [vmem:[%s317 + $0x44] sm:%s309] %v352
                  %v354 = vld [vmem:[%s316 + $0x90] sm:%s309]
                  %355 = vst [vmem:[%s317 + $0x48] sm:%s309] %v354
                  %v356 = vld [vmem:[%s316 + $0x94] sm:%s309]
                  %357 = vst [vmem:[%s317 + $0x4c] sm:%s309] %v356
                  %v358 = vld [vmem:[%s316 + $0x98] sm:%s309]
                  %359 = vst [vmem:[%s317 + $0x50] sm:%s309] %v358
                  %v360 = vld [vmem:[%s316 + $0x9c] sm:%s309]
                  %361 = vst [vmem:[%s317 + $0x54] sm:%s309] %v360
                  %v362 = vld [vmem:[%s316 + $0xa0] sm:%s309]
                  %363 = vst [vmem:[%s317 + $0x58] sm:%s309] %v362
                  %v364 = vld [vmem:[%s316 + $0xa4] sm:%s309]
                  %365 = vst [vmem:[%s317 + $0x5c] sm:%s309] %v364
                  %v366 = vld [vmem:[%s316 + $0xa8] sm:%s309]
                  %367 = vst [vmem:[%s317 + $0x60] sm:%s309] %v366
                  %v368 = vld [vmem:[%s316 + $0xac] sm:%s309]
                  %369 = vst [vmem:[%s317 + $0x64] sm:%s309] %v368
                  %v370 = vld [vmem:[%s316 + $0xb0] sm:%s309]
                  %371 = vst [vmem:[%s317 + $0x68] sm:%s309] %v370
                  %v372 = vld [vmem:[%s316 + $0xb4] sm:%s309]
                  %373 = vst [vmem:[%s317 + $0x6c] sm:%s309] %v372
                  %v374 = vld [vmem:[%s316 + $0xb8] sm:%s309]
                  %375 = vst [vmem:[%s317 + $0x70] sm:%s309] %v374
                  %v376 = vld [vmem:[%s316 + $0xbc] sm:%s309]
                  %377 = vst [vmem:[%s317 + $0x74] sm:%s309] %v376
                  %v378 = vld [vmem:[%s316 + $0xc0] sm:%s309]
                  %379 = vst [vmem:[%s317 + $0x78] sm:%s309] %v378
                  %v380 = vld [vmem:[%s316 + $0xc4] sm:%s309]
                  %381 = vst [vmem:[%s317 + $0x7c] sm:%s309] %v380
                  %v382 = vld [vmem:[%s316 + $0xc8] sm:%s309]
                  %383 = vst [vmem:[%s317 + $0x80] sm:%s309] %v382
                  %v384 = vld [vmem:[%s316 + $0xcc] sm:%s309]
                  %385 = vst [vmem:[%s317 + $0x84] sm:%s309] %v384
                  %v386 = vld [vmem:[%s316 + $0xd0] sm:%s309]
                  %387 = vst [vmem:[%s317 + $0x88] sm:%s309] %v386
                  %v388 = vld [vmem:[%s316 + $0xd4] sm:%s309]
                  %389 = vst [vmem:[%s317 + $0x8c] sm:%s309] %v388
                  %v390 = vld [vmem:[%s316 + $0x120] sm:%s309]
                  %391 = vst [vmem:[%s317 + $0x90] sm:%s309] %v390
                  %v392 = vld [vmem:[%s316 + $0x124] sm:%s309]
                  %393 = vst [vmem:[%s317 + $0x94] sm:%s309] %v392
                  %v394 = vld [vmem:[%s316 + $0x128] sm:%s309]
                  %395 = vst [vmem:[%s317 + $0x98] sm:%s309] %v394
                  %v396 = vld [vmem:[%s316 + $0x12c] sm:%s309]
                  %397 = vst [vmem:[%s317 + $0x9c] sm:%s309] %v396
                  %v398 = vld [vmem:[%s316 + $0x130] sm:%s309]
                  %399 = vst [vmem:[%s317 + $0xa0] sm:%s309] %v398
                  %v400 = vld [vmem:[%s316 + $0x134] sm:%s309]
                  %401 = vst [vmem:[%s317 + $0xa4] sm:%s309] %v400
                  %v402 = vld [vmem:[%s316 + $0x138] sm:%s309]
                  %403 = vst [vmem:[%s317 + $0xa8] sm:%s309] %v402
                  %v404 = vld [vmem:[%s316 + $0x13c] sm:%s309]
                  %405 = vst [vmem:[%s317 + $0xac] sm:%s309] %v404
                  %v406 = vld [vmem:[%s316 + $0x140] sm:%s309]
                  %407 = vst [vmem:[%s317 + $0xb0] sm:%s309] %v406
                  %v408 = vld [vmem:[%s316 + $0x144] sm:%s309]
                  %409 = vst [vmem:[%s317 + $0xb4] sm:%s309] %v408
                  %v410 = vld [vmem:[%s316 + $0x148] sm:%s309]
                  %411 = vst [vmem:[%s317 + $0xb8] sm:%s309] %v410
                  %v412 = vld [vmem:[%s316 + $0x14c] sm:%s309]
                  %413 = vst [vmem:[%s317 + $0xbc] sm:%s309] %v412
                  %v414 = vld [vmem:[%s316 + $0x150] sm:%s309]
                  %415 = vst [vmem:[%s317 + $0xc0] sm:%s309] %v414
                  %v416 = vld [vmem:[%s316 + $0x154] sm:%s309]
                  %417 = vst [vmem:[%s317 + $0xc4] sm:%s309] %v416
                  %v418 = vld [vmem:[%s316 + $0x158] sm:%s309]
                  %419 = vst [vmem:[%s317 + $0xc8] sm:%s309] %v418
                  %v420 = vld [vmem:[%s316 + $0x15c] sm:%s309]
                  %421 = vst [vmem:[%s317 + $0xcc] sm:%s309] %v420
                  %v422 = vld [vmem:[%s316 + $0x160] sm:%s309]
                  %423 = vst [vmem:[%s317 + $0xd0] sm:%s309] %v422
                  %v424 = vld [vmem:[%s316 + $0x164] sm:%s309]
                  %425 = vst [vmem:[%s317 + $0xd4] sm:%s309] %v424
                  %v426 = vld [vmem:[%s316 + $0x1b0] sm:%s309]
                  %427 = vst [vmem:[%s317 + $0xd8] sm:%s309] %v426
                  %v428 = vld [vmem:[%s316 + $0x1b4] sm:%s309]
                  %429 = vst [vmem:[%s317 + $0xdc] sm:%s309] %v428
                  %v430 = vld [vmem:[%s316 + $0x1b8] sm:%s309]
                  %431 = vst [vmem:[%s317 + $0xe0] sm:%s309] %v430
                  %v432 = vld [vmem:[%s316 + $0x1bc] sm:%s309]
                  %433 = vst [vmem:[%s317 + $0xe4] sm:%s309] %v432
                  %v434 = vld [vmem:[%s316 + $0x1c0] sm:%s309]
                  %435 = vst [vmem:[%s317 + $0xe8] sm:%s309] %v434
                  %v436 = vld [vmem:[%s316 + $0x1c4] sm:%s309]
                  %437 = vst [vmem:[%s317 + $0xec] sm:%s309] %v436
                  %v438 = vld [vmem:[%s316 + $0x1c8] sm:%s309]
                  %439 = vst [vmem:[%s317 + $0xf0] sm:%s309] %v438
                  %v440 = vld [vmem:[%s316 + $0x1cc] sm:%s309]
                  %441 = vst [vmem:[%s317 + $0xf4] sm:%s309] %v440
                  %v442 = vld [vmem:[%s316 + $0x1d0] sm:%s309]
                  %443 = vst [vmem:[%s317 + $0xf8] sm:%s309] %v442
                  %v444 = vld [vmem:[%s316 + $0x1d4] sm:%s309]
                  %445 = vst [vmem:[%s317 + $0xfc] sm:%s309] %v444
                  %v446 = vld [vmem:[%s316 + $0x1d8] sm:%s309]
                  %447 = vst [vmem:[%s317 + $0x100] sm:%s309] %v446
                  %v448 = vld [vmem:[%s316 + $0x1dc] sm:%s309]
                  %449 = vst [vmem:[%s317 + $0x104] sm:%s309] %v448
                  %v450 = vld [vmem:[%s316 + $0x1e0] sm:%s309]
                  %451 = vst [vmem:[%s317 + $0x108] sm:%s309] %v450
                  %v452 = vld [vmem:[%s316 + $0x1e4] sm:%s309]
                  %453 = vst [vmem:[%s317 + $0x10c] sm:%s309] %v452
                  %v454 = vld [vmem:[%s316 + $0x1e8] sm:%s309]
                  %455 = vst [vmem:[%s317 + $0x110] sm:%s309] %v454
                  %v456 = vld [vmem:[%s316 + $0x1ec] sm:%s309]
                  %457 = vst [vmem:[%s317 + $0x114] sm:%s309] %v456
                  %v458 = vld [vmem:[%s316 + $0x1f0] sm:%s309]
                  %459 = vst [vmem:[%s317 + $0x118] sm:%s309] %v458
                  %v460 = vld [vmem:[%s316 + $0x1f4] sm:%s309]
                  %461 = vst [vmem:[%s317 + $0x11c] sm:%s309] %v460
                $region63: #{net_forward.5} parent=50 // loop_footer
                  %s315 = sadd.s32 1, %s311
                $region64: #{net_forward.5} parent=50 // loop_footer_branch
                  %310 = sbr.rel target = $region60
                $region65: #{net_forward.5} parent=50 // loop_exit
                  _
              $region51: #{net_forward.5} parent=35 // pred_fallthru
                _
            $region36: #{net_forward.5} parent=31 // pred_fallthru
              _
            // Predicated region
            $region37: #{net_forward.5} parent=31 // pred_check
              _
            $region38: #{net_forward.5} parent=31 // pred_check_branch
              %143 = sbr.rel (0) target = $region40
            $region39: #{net_forward.5} parent=31 // pred_region
              %s145 = ssub.s32 16, 1
              loop: start=0, step=1, limit=1
              $region41: #{net_forward.5} parent=39 // loop_pre_header
                _
              $region42: #{net_forward.5} parent=39 // loop_header
                %s147 = sphi 0, %s151
                %p148 = scmp.ge.s32.totalorder %s147, 1
                %s152 = sphi %s137, %s137
                %s153 = sphi %s134, %s134
              $region43: #{net_forward.5} parent=39 // loop_header_branch
                %150 = sbr.rel (%p148) target = $region47
              $region44: #{net_forward.5} parent=39 // loop_body
                %v154 = vld [vmem:[%s152] sm:%s145]
                %155 = vst [vmem:[%s153] sm:%s145] %v154
                %v156 = vld [vmem:[%s152 + $0x4] sm:%s145]
                %157 = vst [vmem:[%s153 + $0x4] sm:%s145] %v156
                %v158 = vld [vmem:[%s152 + $0x8] sm:%s145]
                %159 = vst [vmem:[%s153 + $0x8] sm:%s145] %v158
                %v160 = vld [vmem:[%s152 + $0xc] sm:%s145]
                %161 = vst [vmem:[%s153 + $0xc] sm:%s145] %v160
                %v162 = vld [vmem:[%s152 + $0x10] sm:%s145]
                %163 = vst [vmem:[%s153 + $0x10] sm:%s145] %v162
                %v164 = vld [vmem:[%s152 + $0x14] sm:%s145]
                %165 = vst [vmem:[%s153 + $0x14] sm:%s145] %v164
                %v166 = vld [vmem:[%s152 + $0x18] sm:%s145]
                %167 = vst [vmem:[%s153 + $0x18] sm:%s145] %v166
                %v168 = vld [vmem:[%s152 + $0x1c] sm:%s145]
                %169 = vst [vmem:[%s153 + $0x1c] sm:%s145] %v168
                %v170 = vld [vmem:[%s152 + $0x20] sm:%s145]
                %171 = vst [vmem:[%s153 + $0x20] sm:%s145] %v170
                %v172 = vld [vmem:[%s152 + $0x24] sm:%s145]
                %173 = vst [vmem:[%s153 + $0x24] sm:%s145] %v172
                %v174 = vld [vmem:[%s152 + $0x28] sm:%s145]
                %175 = vst [vmem:[%s153 + $0x28] sm:%s145] %v174
                %v176 = vld [vmem:[%s152 + $0x2c] sm:%s145]
                %177 = vst [vmem:[%s153 + $0x2c] sm:%s145] %v176
                %v178 = vld [vmem:[%s152 + $0x30] sm:%s145]
                %179 = vst [vmem:[%s153 + $0x30] sm:%s145] %v178
                %v180 = vld [vmem:[%s152 + $0x34] sm:%s145]
                %181 = vst [vmem:[%s153 + $0x34] sm:%s145] %v180
                %v182 = vld [vmem:[%s152 + $0x38] sm:%s145]
                %183 = vst [vmem:[%s153 + $0x38] sm:%s145] %v182
                %v184 = vld [vmem:[%s152 + $0x3c] sm:%s145]
                %185 = vst [vmem:[%s153 + $0x3c] sm:%s145] %v184
                %v186 = vld [vmem:[%s152 + $0x40] sm:%s145]
                %187 = vst [vmem:[%s153 + $0x40] sm:%s145] %v186
                %v188 = vld [vmem:[%s152 + $0x44] sm:%s145]
                %189 = vst [vmem:[%s153 + $0x44] sm:%s145] %v188
                %v190 = vld [vmem:[%s152 + $0x90] sm:%s145]
                %191 = vst [vmem:[%s153 + $0x48] sm:%s145] %v190
                %v192 = vld [vmem:[%s152 + $0x94] sm:%s145]
                %193 = vst [vmem:[%s153 + $0x4c] sm:%s145] %v192
                %v194 = vld [vmem:[%s152 + $0x98] sm:%s145]
                %195 = vst [vmem:[%s153 + $0x50] sm:%s145] %v194
                %v196 = vld [vmem:[%s152 + $0x9c] sm:%s145]
                %197 = vst [vmem:[%s153 + $0x54] sm:%s145] %v196
                %v198 = vld [vmem:[%s152 + $0xa0] sm:%s145]
                %199 = vst [vmem:[%s153 + $0x58] sm:%s145] %v198
                %v200 = vld [vmem:[%s152 + $0xa4] sm:%s145]
                %201 = vst [vmem:[%s153 + $0x5c] sm:%s145] %v200
                %v202 = vld [vmem:[%s152 + $0xa8] sm:%s145]
                %203 = vst [vmem:[%s153 + $0x60] sm:%s145] %v202
                %v204 = vld [vmem:[%s152 + $0xac] sm:%s145]
                %205 = vst [vmem:[%s153 + $0x64] sm:%s145] %v204
                %v206 = vld [vmem:[%s152 + $0xb0] sm:%s145]
                %207 = vst [vmem:[%s153 + $0x68] sm:%s145] %v206
                %v208 = vld [vmem:[%s152 + $0xb4] sm:%s145]
                %209 = vst [vmem:[%s153 + $0x6c] sm:%s145] %v208
                %v210 = vld [vmem:[%s152 + $0xb8] sm:%s145]
                %211 = vst [vmem:[%s153 + $0x70] sm:%s145] %v210
                %v212 = vld [vmem:[%s152 + $0xbc] sm:%s145]
                %213 = vst [vmem:[%s153 + $0x74] sm:%s145] %v212
                %v214 = vld [vmem:[%s152 + $0xc0] sm:%s145]
                %215 = vst [vmem:[%s153 + $0x78] sm:%s145] %v214
                %v216 = vld [vmem:[%s152 + $0xc4] sm:%s145]
                %217 = vst [vmem:[%s153 + $0x7c] sm:%s145] %v216
                %v218 = vld [vmem:[%s152 + $0xc8] sm:%s145]
                %219 = vst [vmem:[%s153 + $0x80] sm:%s145] %v218
                %v220 = vld [vmem:[%s152 + $0xcc] sm:%s145]
                %221 = vst [vmem:[%s153 + $0x84] sm:%s145] %v220
                %v222 = vld [vmem:[%s152 + $0xd0] sm:%s145]
                %223 = vst [vmem:[%s153 + $0x88] sm:%s145] %v222
                %v224 = vld [vmem:[%s152 + $0xd4] sm:%s145]
                %225 = vst [vmem:[%s153 + $0x8c] sm:%s145] %v224
                %v226 = vld [vmem:[%s152 + $0x120] sm:%s145]
                %227 = vst [vmem:[%s153 + $0x90] sm:%s145] %v226
                %v228 = vld [vmem:[%s152 + $0x124] sm:%s145]
                %229 = vst [vmem:[%s153 + $0x94] sm:%s145] %v228
                %v230 = vld [vmem:[%s152 + $0x128] sm:%s145]
                %231 = vst [vmem:[%s153 + $0x98] sm:%s145] %v230
                %v232 = vld [vmem:[%s152 + $0x12c] sm:%s145]
                %233 = vst [vmem:[%s153 + $0x9c] sm:%s145] %v232
                %v234 = vld [vmem:[%s152 + $0x130] sm:%s145]
                %235 = vst [vmem:[%s153 + $0xa0] sm:%s145] %v234
                %v236 = vld [vmem:[%s152 + $0x134] sm:%s145]
                %237 = vst [vmem:[%s153 + $0xa4] sm:%s145] %v236
                %v238 = vld [vmem:[%s152 + $0x138] sm:%s145]
                %239 = vst [vmem:[%s153 + $0xa8] sm:%s145] %v238
                %v240 = vld [vmem:[%s152 + $0x13c] sm:%s145]
                %241 = vst [vmem:[%s153 + $0xac] sm:%s145] %v240
                %v242 = vld [vmem:[%s152 + $0x140] sm:%s145]
                %243 = vst [vmem:[%s153 + $0xb0] sm:%s145] %v242
                %v244 = vld [vmem:[%s152 + $0x144] sm:%s145]
                %245 = vst [vmem:[%s153 + $0xb4] sm:%s145] %v244
                %v246 = vld [vmem:[%s152 + $0x148] sm:%s145]
                %247 = vst [vmem:[%s153 + $0xb8] sm:%s145] %v246
                %v248 = vld [vmem:[%s152 + $0x14c] sm:%s145]
                %249 = vst [vmem:[%s153 + $0xbc] sm:%s145] %v248
                %v250 = vld [vmem:[%s152 + $0x150] sm:%s145]
                %251 = vst [vmem:[%s153 + $0xc0] sm:%s145] %v250
                %v252 = vld [vmem:[%s152 + $0x154] sm:%s145]
                %253 = vst [vmem:[%s153 + $0xc4] sm:%s145] %v252
                %v254 = vld [vmem:[%s152 + $0x158] sm:%s145]
                %255 = vst [vmem:[%s153 + $0xc8] sm:%s145] %v254
                %v256 = vld [vmem:[%s152 + $0x15c] sm:%s145]
                %257 = vst [vmem:[%s153 + $0xcc] sm:%s145] %v256
                %v258 = vld [vmem:[%s152 + $0x160] sm:%s145]
                %259 = vst [vmem:[%s153 + $0xd0] sm:%s145] %v258
                %v260 = vld [vmem:[%s152 + $0x164] sm:%s145]
                %261 = vst [vmem:[%s153 + $0xd4] sm:%s145] %v260
                %v262 = vld [vmem:[%s152 + $0x1b0] sm:%s145]
                %263 = vst [vmem:[%s153 + $0xd8] sm:%s145] %v262
                %v264 = vld [vmem:[%s152 + $0x1b4] sm:%s145]
                %265 = vst [vmem:[%s153 + $0xdc] sm:%s145] %v264
                %v266 = vld [vmem:[%s152 + $0x1b8] sm:%s145]
                %267 = vst [vmem:[%s153 + $0xe0] sm:%s145] %v266
                %v268 = vld [vmem:[%s152 + $0x1bc] sm:%s145]
                %269 = vst [vmem:[%s153 + $0xe4] sm:%s145] %v268
                %v270 = vld [vmem:[%s152 + $0x1c0] sm:%s145]
                %271 = vst [vmem:[%s153 + $0xe8] sm:%s145] %v270
                %v272 = vld [vmem:[%s152 + $0x1c4] sm:%s145]
                %273 = vst [vmem:[%s153 + $0xec] sm:%s145] %v272
                %v274 = vld [vmem:[%s152 + $0x1c8] sm:%s145]
                %275 = vst [vmem:[%s153 + $0xf0] sm:%s145] %v274
                %v276 = vld [vmem:[%s152 + $0x1cc] sm:%s145]
                %277 = vst [vmem:[%s153 + $0xf4] sm:%s145] %v276
                %v278 = vld [vmem:[%s152 + $0x1d0] sm:%s145]
                %279 = vst [vmem:[%s153 + $0xf8] sm:%s145] %v278
                %v280 = vld [vmem:[%s152 + $0x1d4] sm:%s145]
                %281 = vst [vmem:[%s153 + $0xfc] sm:%s145] %v280
                %v282 = vld [vmem:[%s152 + $0x1d8] sm:%s145]
                %283 = vst [vmem:[%s153 + $0x100] sm:%s145] %v282
                %v284 = vld [vmem:[%s152 + $0x1dc] sm:%s145]
                %285 = vst [vmem:[%s153 + $0x104] sm:%s145] %v284
                %v286 = vld [vmem:[%s152 + $0x1e0] sm:%s145]
                %287 = vst [vmem:[%s153 + $0x108] sm:%s145] %v286
                %v288 = vld [vmem:[%s152 + $0x1e4] sm:%s145]
                %289 = vst [vmem:[%s153 + $0x10c] sm:%s145] %v288
                %v290 = vld [vmem:[%s152 + $0x1e8] sm:%s145]
                %291 = vst [vmem:[%s153 + $0x110] sm:%s145] %v290
                %v292 = vld [vmem:[%s152 + $0x1ec] sm:%s145]
                %293 = vst [vmem:[%s153 + $0x114] sm:%s145] %v292
                %v294 = vld [vmem:[%s152 + $0x1f0] sm:%s145]
                %295 = vst [vmem:[%s153 + $0x118] sm:%s145] %v294
                %v296 = vld [vmem:[%s152 + $0x1f4] sm:%s145]
                %297 = vst [vmem:[%s153 + $0x11c] sm:%s145] %v296
              $region45: #{net_forward.5} parent=39 // loop_footer
                %s151 = sadd.s32 1, %s147
              $region46: #{net_forward.5} parent=39 // loop_footer_branch
                %146 = sbr.rel target = $region42
              $region47: #{net_forward.5} parent=39 // loop_exit
                _
            $region40: #{net_forward.5} parent=31 // pred_fallthru
              _
          $region32: #{net_forward.5} parent=27 // pred_fallthru
            _
          %462 = vnop
        $region28: #{net_forward.5} parent=23 // pred_fallthru
          _
      $region24: #{net_forward.5} parent=5 // pred_fallthru
        _
      %p463 = scmp.le.s32.totalorder 1, %s9
      %p464 = scmp.lt.s32.totalorder %s9, 3
      %p465 = pnand %p463, %p464
      %p466 = pneg %p465
      // Predicated region
      $region66: #{net_forward.5} parent=5 // pred_check
        _
      $region67: #{net_forward.5} parent=5 // pred_check_branch
        %468 = sbr.rel (%p465) target = $region69
      $region68: #{net_forward.5} parent=5 // pred_region
        %s469 = ssub.s32 %s9, 1
        %s470 = sand.u32 %s22, 1
        %s471 = sand.u32 %s22, 1
        %s472 = smul.addr %s471, 288
        %s473 = scalar_lea.vmem [#allocation2], %s472
        // Predicated region
        $region70: #{net_forward.5} parent=68 // pred_check
          %p474 = pneg %p35
        $region71: #{net_forward.5} parent=68 // pred_check_branch
          %476 = sbr.rel (%p474) target = $region73
        $region72: #{net_forward.5} parent=68 // pred_region
          _
        $region73: #{net_forward.5} parent=68 // pred_fallthru
          _
        %s477 = sand.u32 %s22, 1
        %s478 = sand.u32 %s22, 1
        %s479 = smul.addr %s478, 288
        %s480 = scalar_lea.vmem [#allocation2], %s479
        %p481 = pneg %p35
        %p482 = pneg %p32
        %p483 = pneg %p56
        %p484 = pneg %p53
        %p485 = pneg %p77
        %p486 = pneg %p74
        %p487 = pneg %p103
        %p488 = pneg %p100
        %s489 = smul.u32 18, %s14
        %p490 = scmp.lt.s32.totalorder %s489, 35
        %s491 = scalar_select %p490, %s489, 35
        %s492 = smul.addr %s491, 4
        %s493 = scalar_lea.vmem %s3, %s492
        %s494 = smul.u32 18, %s14
        %s495 = smul.u32 18, %s14
        %p496 = scmp.lt.s32.totalorder %s495, 35
        %s497 = scalar_select %p496, %s495, 35
        %s498 = smul.addr %s497, 4
        %s499 = scalar_lea.vmem %s3, %s498
        %s500 = smul.u32 18, %s14
        %v502 = vld [vmem:[%s473] sm:$0xf]
        %v503 = vld [vmem:[%s473 + $0x4] sm:$0xf]
        %v504 = vld [vmem:[%s473 + $0x8] sm:$0xf]
        %v505 = vld [vmem:[%s473 + $0xc] sm:$0xf]
        %v506 = vld [vmem:[%s473 + $0x10] sm:$0xf]
        %v507 = vld [vmem:[%s473 + $0x14] sm:$0xf]
        %v508 = vld [vmem:[%s473 + $0x18] sm:$0xf]
        %v509 = vld [vmem:[%s473 + $0x1c] sm:$0xf]
        %v510 = vld [vmem:[%s473 + $0x20] sm:$0xf]
        %v511 = vld [vmem:[%s473 + $0x24] sm:$0xf]
        %v512 = vld [vmem:[%s473 + $0x28] sm:$0xf]
        %v513 = vld [vmem:[%s473 + $0x2c] sm:$0xf]
        %v514 = vld [vmem:[%s473 + $0x30] sm:$0xf]
        %v515 = vld [vmem:[%s473 + $0x34] sm:$0xf]
        %v516 = vld [vmem:[%s473 + $0x38] sm:$0xf]
        %v517 = vld [vmem:[%s473 + $0x3c] sm:$0xf]
        %v518 = vld [vmem:[%s473 + $0x40] sm:$0xf]
        %v519 = vld [vmem:[%s473 + $0x44] sm:$0xf]
        %s520 = scalar_lea.vmem %s473, 72 [#allocation2]
        %v521 = vld [vmem:[%s520] sm:$0xf]
        %v522 = vld [vmem:[%s520 + $0x4] sm:$0xf]
        %v523 = vld [vmem:[%s520 + $0x8] sm:$0xf]
        %v524 = vld [vmem:[%s520 + $0xc] sm:$0xf]
        %v525 = vld [vmem:[%s520 + $0x10] sm:$0xf]
        %v526 = vld [vmem:[%s520 + $0x14] sm:$0xf]
        %v527 = vld [vmem:[%s520 + $0x18] sm:$0xf]
        %v528 = vld [vmem:[%s520 + $0x1c] sm:$0xf]
        %v529 = vld [vmem:[%s520 + $0x20] sm:$0xf]
        %v530 = vld [vmem:[%s520 + $0x24] sm:$0xf]
        %v531 = vld [vmem:[%s520 + $0x28] sm:$0xf]
        %v532 = vld [vmem:[%s520 + $0x2c] sm:$0xf]
        %v533 = vld [vmem:[%s520 + $0x30] sm:$0xf]
        %v534 = vld [vmem:[%s520 + $0x34] sm:$0xf]
        %v535 = vld [vmem:[%s520 + $0x38] sm:$0xf]
        %v536 = vld [vmem:[%s520 + $0x3c] sm:$0xf]
        %v537 = vld [vmem:[%s520 + $0x40] sm:$0xf]
        %v538 = vld [vmem:[%s520 + $0x44] sm:$0xf]
        %s539 = scalar_lea.vmem %s473, 144 [#allocation2]
        %v540 = vld [vmem:[%s539] sm:$0xf]
        %v541 = vld [vmem:[%s539 + $0x4] sm:$0xf]
        %v542 = vld [vmem:[%s539 + $0x8] sm:$0xf]
        %v543 = vld [vmem:[%s539 + $0xc] sm:$0xf]
        %v544 = vld [vmem:[%s539 + $0x10] sm:$0xf]
        %v545 = vld [vmem:[%s539 + $0x14] sm:$0xf]
        %v546 = vld [vmem:[%s539 + $0x18] sm:$0xf]
        %v547 = vld [vmem:[%s539 + $0x1c] sm:$0xf]
        %v548 = vld [vmem:[%s539 + $0x20] sm:$0xf]
        %v549 = vld [vmem:[%s539 + $0x24] sm:$0xf]
        %v550 = vld [vmem:[%s539 + $0x28] sm:$0xf]
        %v551 = vld [vmem:[%s539 + $0x2c] sm:$0xf]
        %v552 = vld [vmem:[%s539 + $0x30] sm:$0xf]
        %v553 = vld [vmem:[%s539 + $0x34] sm:$0xf]
        %v554 = vld [vmem:[%s539 + $0x38] sm:$0xf]
        %v555 = vld [vmem:[%s539 + $0x3c] sm:$0xf]
        %v556 = vld [vmem:[%s539 + $0x40] sm:$0xf]
        %v557 = vld [vmem:[%s539 + $0x44] sm:$0xf]
        %s558 = scalar_lea.vmem %s473, 216 [#allocation2]
        %v559 = vld [vmem:[%s558] sm:$0xf]
        %v560 = vld [vmem:[%s558 + $0x4] sm:$0xf]
        %v561 = vld [vmem:[%s558 + $0x8] sm:$0xf]
        %v562 = vld [vmem:[%s558 + $0xc] sm:$0xf]
        %v563 = vld [vmem:[%s558 + $0x10] sm:$0xf]
        %v564 = vld [vmem:[%s558 + $0x14] sm:$0xf]
        %v565 = vld [vmem:[%s558 + $0x18] sm:$0xf]
        %v566 = vld [vmem:[%s558 + $0x1c] sm:$0xf]
        %v567 = vld [vmem:[%s558 + $0x20] sm:$0xf]
        %v568 = vld [vmem:[%s558 + $0x24] sm:$0xf]
        %v569 = vld [vmem:[%s558 + $0x28] sm:$0xf]
        %v570 = vld [vmem:[%s558 + $0x2c] sm:$0xf]
        %v571 = vld [vmem:[%s558 + $0x30] sm:$0xf]
        %v572 = vld [vmem:[%s558 + $0x34] sm:$0xf]
        %v573 = vld [vmem:[%s558 + $0x38] sm:$0xf]
        %v574 = vld [vmem:[%s558 + $0x3c] sm:$0xf]
        %v575 = vld [vmem:[%s558 + $0x40] sm:$0xf]
        %v576 = vld [vmem:[%s558 + $0x44] sm:$0xf]
        %v595 = vunpack.c.l.b16 %v502
        %v596 = vunpack.c.l.b16 %v503
        %v597 = vunpack.c.l.b16 %v504
        %v598 = vunpack.c.l.b16 %v505
        %v599 = vunpack.c.l.b16 %v506
        %v600 = vunpack.c.l.b16 %v507
        %v601 = vunpack.c.l.b16 %v508
        %v602 = vunpack.c.l.b16 %v509
        %v603 = vunpack.c.l.b16 %v510
        %v604 = vunpack.c.l.b16 %v511
        %v605 = vunpack.c.l.b16 %v512
        %v606 = vunpack.c.l.b16 %v513
        %v607 = vunpack.c.l.b16 %v514
        %v608 = vunpack.c.l.b16 %v515
        %v609 = vunpack.c.l.b16 %v516
        %v610 = vunpack.c.l.b16 %v517
        %v611 = vunpack.c.l.b16 %v518
        %v612 = vunpack.c.l.b16 %v519
        %v613 = vpack.c.b16 %v596, %v595
        %v614 = vpack.c.b16 %v598, %v597
        %v615 = vpack.c.b16 %v600, %v599
        %v616 = vpack.c.b16 %v602, %v601
        %v617 = vpack.c.b16 %v604, %v603
        %v618 = vpack.c.b16 %v606, %v605
        %v619 = vpack.c.b16 %v608, %v607
        %v620 = vpack.c.b16 %v610, %v609
        %v621 = vpack.c.b16 %v612, %v611
        %v640 = vunpack.c.l.b16 %v521
        %v641 = vunpack.c.l.b16 %v522
        %v642 = vunpack.c.l.b16 %v523
        %v643 = vunpack.c.l.b16 %v524
        %v644 = vunpack.c.l.b16 %v525
        %v645 = vunpack.c.l.b16 %v526
        %v646 = vunpack.c.l.b16 %v527
        %v647 = vunpack.c.l.b16 %v528
        %v648 = vunpack.c.l.b16 %v529
        %v649 = vunpack.c.l.b16 %v530
        %v650 = vunpack.c.l.b16 %v531
        %v651 = vunpack.c.l.b16 %v532
        %v652 = vunpack.c.l.b16 %v533
        %v653 = vunpack.c.l.b16 %v534
        %v654 = vunpack.c.l.b16 %v535
        %v655 = vunpack.c.l.b16 %v536
        %v656 = vunpack.c.l.b16 %v537
        %v657 = vunpack.c.l.b16 %v538
        %v658 = vpack.c.b16 %v641, %v640
        %v659 = vpack.c.b16 %v643, %v642
        %v660 = vpack.c.b16 %v645, %v644
        %v661 = vpack.c.b16 %v647, %v646
        %v662 = vpack.c.b16 %v649, %v648
        %v663 = vpack.c.b16 %v651, %v650
        %v664 = vpack.c.b16 %v653, %v652
        %v665 = vpack.c.b16 %v655, %v654
        %v666 = vpack.c.b16 %v657, %v656
        %v685 = vunpack.c.l.b16 %v540
        %v686 = vunpack.c.l.b16 %v541
        %v687 = vunpack.c.l.b16 %v542
        %v688 = vunpack.c.l.b16 %v543
        %v689 = vunpack.c.l.b16 %v544
        %v690 = vunpack.c.l.b16 %v545
        %v691 = vunpack.c.l.b16 %v546
        %v692 = vunpack.c.l.b16 %v547
        %v693 = vunpack.c.l.b16 %v548
        %v694 = vunpack.c.l.b16 %v549
        %v695 = vunpack.c.l.b16 %v550
        %v696 = vunpack.c.l.b16 %v551
        %v697 = vunpack.c.l.b16 %v552
        %v698 = vunpack.c.l.b16 %v553
        %v699 = vunpack.c.l.b16 %v554
        %v700 = vunpack.c.l.b16 %v555
        %v701 = vunpack.c.l.b16 %v556
        %v702 = vunpack.c.l.b16 %v557
        %v703 = vpack.c.b16 %v686, %v685
        %v704 = vpack.c.b16 %v688, %v687
        %v705 = vpack.c.b16 %v690, %v689
        %v706 = vpack.c.b16 %v692, %v691
        %v707 = vpack.c.b16 %v694, %v693
        %v708 = vpack.c.b16 %v696, %v695
        %v709 = vpack.c.b16 %v698, %v697
        %v710 = vpack.c.b16 %v700, %v699
        %v711 = vpack.c.b16 %v702, %v701
        %v730 = vunpack.c.l.b16 %v559
        %v731 = vunpack.c.l.b16 %v560
        %v732 = vunpack.c.l.b16 %v561
        %v733 = vunpack.c.l.b16 %v562
        %v734 = vunpack.c.l.b16 %v563
        %v735 = vunpack.c.l.b16 %v564
        %v736 = vunpack.c.l.b16 %v565
        %v737 = vunpack.c.l.b16 %v566
        %v738 = vunpack.c.l.b16 %v567
        %v739 = vunpack.c.l.b16 %v568
        %v740 = vunpack.c.l.b16 %v569
        %v741 = vunpack.c.l.b16 %v570
        %v742 = vunpack.c.l.b16 %v571
        %v743 = vunpack.c.l.b16 %v572
        %v744 = vunpack.c.l.b16 %v573
        %v745 = vunpack.c.l.b16 %v574
        %v746 = vunpack.c.l.b16 %v575
        %v747 = vunpack.c.l.b16 %v576
        %v748 = vpack.c.b16 %v731, %v730
        %v749 = vpack.c.b16 %v733, %v732
        %v750 = vpack.c.b16 %v735, %v734
        %v751 = vpack.c.b16 %v737, %v736
        %v752 = vpack.c.b16 %v739, %v738
        %v753 = vpack.c.b16 %v741, %v740
        %v754 = vpack.c.b16 %v743, %v742
        %v755 = vpack.c.b16 %v745, %v744
        %v756 = vpack.c.b16 %v747, %v746
        %v757 = vld [vmem:[%s1] sm:$0xf]
        %v758 = vld [vmem:[%s1 + $0x4] sm:$0xf]
        %v761 = vunpack.c.l.b16 %v757
        %v762 = vunpack.c.l.b16 %v758
        %v763 = vpack.c.b16 %v762, %v761
        %vm765 = vcmask 130048
        %v767 = vsel %vm765, %v613, 0
        %v770 = vsel %vm765, %v614, 0
        %v773 = vsel %vm765, %v615, 0
        %v776 = vsel %vm765, %v616, 0
        %v779 = vsel %vm765, %v617, 0
        %v782 = vsel %vm765, %v618, 0
        %v785 = vsel %vm765, %v619, 0
        %v788 = vsel %vm765, %v620, 0
        %v791 = vsel %vm765, %v621, 0
        %v794 = vsel %vm765, %v658, 0
        %v797 = vsel %vm765, %v659, 0
        %v800 = vsel %vm765, %v660, 0
        %v803 = vsel %vm765, %v661, 0
        %v806 = vsel %vm765, %v662, 0
        %v809 = vsel %vm765, %v663, 0
        %v812 = vsel %vm765, %v664, 0
        %v815 = vsel %vm765, %v665, 0
        %v818 = vsel %vm765, %v666, 0
        %v821 = vsel %vm765, %v703, 0
        %v824 = vsel %vm765, %v704, 0
        %v827 = vsel %vm765, %v705, 0
        %v830 = vsel %vm765, %v706, 0
        %v833 = vsel %vm765, %v707, 0
        %v836 = vsel %vm765, %v708, 0
        %v839 = vsel %vm765, %v709, 0
        %v842 = vsel %vm765, %v710, 0
        %v845 = vsel %vm765, %v711, 0
        %v848 = vsel %vm765, %v748, 0
        %v851 = vsel %vm765, %v749, 0
        %v854 = vsel %vm765, %v750, 0
        %v857 = vsel %vm765, %v751, 0
        %v860 = vsel %vm765, %v752, 0
        %v863 = vsel %vm765, %v753, 0
        %v866 = vsel %vm765, %v754, 0
        %v869 = vsel %vm765, %v755, 0
        %v872 = vsel %vm765, %v756, 0
        %874 = vmatprep.subr.bf16.mxu0 0
        %875 = vmatpush1.bf16.msra.mxu0 0
        %876 = vmatprep.subr.bf16.mxu0 0
        %877 = vmatpush1.bf16.msra.mxu0 0
        %878 = vmatprep.subr.bf16.mxu0 0
        %879 = vmatpush1.bf16.msra.mxu0 0
        %880 = vmatprep.subr.bf16.mxu0 0
        %881 = vmatpush1.bf16.msra.mxu0 0
        %882 = vmatprep.subr.bf16.mxu0 0
        %883 = vmatpush1.bf16.msra.mxu0 0
        %884 = vmatprep.subr.bf16.mxu0 0
        %885 = vmatpush1.bf16.msra.mxu0 0
        %886 = vmatprep.subr.bf16.mxu0 0
        %887 = vmatpush1.bf16.msra.mxu0 0
        %888 = vmatprep.subr.bf16.mxu0 0
        %889 = vmatpush1.bf16.msra.mxu0 %v763
        %890 = vmatprep.subr.bf16.mxu0 0
        %891 = vmatpush2.bf16.msra.mxu0 0
        %892 = vmatprep.subr.bf16.mxu0 0
        %893 = vmatpush2.bf16.msra.mxu0 0
        %894 = vmatprep.subr.bf16.mxu0 0
        %895 = vmatpush2.bf16.msra.mxu0 0
        %896 = vmatprep.subr.bf16.mxu0 0
        %897 = vmatpush2.bf16.msra.mxu0 0
        %898 = vmatprep.subr.bf16.mxu0 0
        %899 = vmatpush2.bf16.msra.mxu0 0
        %900 = vmatprep.subr.bf16.mxu0 0
        %901 = vmatpush2.bf16.msra.mxu0 0
        %902 = vmatprep.subr.bf16.mxu0 0
        %903 = vmatpush2.bf16.msra.mxu0 0
        %904 = vmatprep.subr.bf16.mxu0 0
        %905 = vmatpush2.bf16.msra.mxu0 0
        %906 = vmatprep.mubr.bf16.mxu0 0
        %907 = vmatmul.mubr.bf16.gmra.mxu0 %v767
        %v908 = vpop.f32.mrf.mxu0
        %v909 = vadd.f32 0.0, %v908
        %v910 = vpop.f32.mrf.mxu0
        %v911 = vpop.f32.mrf.mxu0
        %v912 = vadd.f32 0.0, %v911
        %v913 = vpop.f32.mrf.mxu0
        %914 = vmatprep.mubr.bf16.mxu0 0
        %915 = vmatmul.mubr.bf16.gmra.mxu0 %v770
        %v916 = vpop.f32.mrf.mxu0
        %v917 = vadd.f32 0.0, %v916
        %v918 = vpop.f32.mrf.mxu0
        %v919 = vpop.f32.mrf.mxu0
        %v920 = vadd.f32 0.0, %v919
        %v921 = vpop.f32.mrf.mxu0
        %922 = vmatprep.mubr.bf16.mxu0 0
        %923 = vmatmul.mubr.bf16.gmra.mxu0 %v773
        %v924 = vpop.f32.mrf.mxu0
        %v925 = vadd.f32 0.0, %v924
        %v926 = vpop.f32.mrf.mxu0
        %v927 = vpop.f32.mrf.mxu0
        %v928 = vadd.f32 0.0, %v927
        %v929 = vpop.f32.mrf.mxu0
        %930 = vmatprep.mubr.bf16.mxu0 0
        %931 = vmatmul.mubr.bf16.gmra.mxu0 %v776
        %v932 = vpop.f32.mrf.mxu0
        %v933 = vadd.f32 0.0, %v932
        %v934 = vpop.f32.mrf.mxu0
        %v935 = vpop.f32.mrf.mxu0
        %v936 = vadd.f32 0.0, %v935
        %v937 = vpop.f32.mrf.mxu0
        %938 = vmatprep.mubr.bf16.mxu0 0
        %939 = vmatmul.mubr.bf16.gmra.mxu0 %v779
        %v940 = vpop.f32.mrf.mxu0
        %v941 = vadd.f32 0.0, %v940
        %v942 = vpop.f32.mrf.mxu0
        %v943 = vpop.f32.mrf.mxu0
        %v944 = vadd.f32 0.0, %v943
        %v945 = vpop.f32.mrf.mxu0
        %946 = vmatprep.mubr.bf16.mxu0 0
        %947 = vmatmul.mubr.bf16.gmra.mxu0 %v782
        %v948 = vpop.f32.mrf.mxu0
        %v949 = vadd.f32 0.0, %v948
        %v950 = vpop.f32.mrf.mxu0
        %v951 = vpop.f32.mrf.mxu0
        %v952 = vadd.f32 0.0, %v951
        %v953 = vpop.f32.mrf.mxu0
        %954 = vmatprep.mubr.bf16.mxu0 0
        %955 = vmatmul.mubr.bf16.gmra.mxu0 %v785
        %v956 = vpop.f32.mrf.mxu0
        %v957 = vadd.f32 0.0, %v956
        %v958 = vpop.f32.mrf.mxu0
        %v959 = vpop.f32.mrf.mxu0
        %v960 = vadd.f32 0.0, %v959
        %v961 = vpop.f32.mrf.mxu0
        %962 = vmatprep.mubr.bf16.mxu0 0
        %963 = vmatmul.mubr.bf16.gmra.mxu0 %v788
        %v964 = vpop.f32.mrf.mxu0
        %v965 = vadd.f32 0.0, %v964
        %v966 = vpop.f32.mrf.mxu0
        %v967 = vpop.f32.mrf.mxu0
        %v968 = vadd.f32 0.0, %v967
        %v969 = vpop.f32.mrf.mxu0
        %970 = vmatprep.mubr.bf16.mxu0 0
        %971 = vmatmul.mubr.bf16.gmra.mxu0 %v791
        %v972 = vpop.f32.mrf.mxu0
        %v973 = vadd.f32 0.0, %v972
        %v974 = vpop.f32.mrf.mxu0
        %v975 = vpop.f32.mrf.mxu0
        %v976 = vadd.f32 0.0, %v975
        %v977 = vpop.f32.mrf.mxu0
        %978 = vmatprep.mubr.bf16.mxu0 0
        %979 = vmatmul.mubr.bf16.gmra.mxu0 %v794
        %v980 = vpop.f32.mrf.mxu0
        %v981 = vadd.f32 0.0, %v980
        %v982 = vpop.f32.mrf.mxu0
        %v983 = vpop.f32.mrf.mxu0
        %v984 = vadd.f32 0.0, %v983
        %v985 = vpop.f32.mrf.mxu0
        %986 = vmatprep.mubr.bf16.mxu0 0
        %987 = vmatmul.mubr.bf16.gmra.mxu0 %v797
        %v988 = vpop.f32.mrf.mxu0
        %v989 = vadd.f32 0.0, %v988
        %v990 = vpop.f32.mrf.mxu0
        %v991 = vpop.f32.mrf.mxu0
        %v992 = vadd.f32 0.0, %v991
        %v993 = vpop.f32.mrf.mxu0
        %994 = vmatprep.mubr.bf16.mxu0 0
        %995 = vmatmul.mubr.bf16.gmra.mxu0 %v800
        %v996 = vpop.f32.mrf.mxu0
        %v997 = vadd.f32 0.0, %v996
        %v998 = vpop.f32.mrf.mxu0
        %v999 = vpop.f32.mrf.mxu0
        %v1000 = vadd.f32 0.0, %v999
        %v1001 = vpop.f32.mrf.mxu0
        %1002 = vmatprep.mubr.bf16.mxu0 0
        %1003 = vmatmul.mubr.bf16.gmra.mxu0 %v803
        %v1004 = vpop.f32.mrf.mxu0
        %v1005 = vadd.f32 0.0, %v1004
        %v1006 = vpop.f32.mrf.mxu0
        %v1007 = vpop.f32.mrf.mxu0
        %v1008 = vadd.f32 0.0, %v1007
        %v1009 = vpop.f32.mrf.mxu0
        %1010 = vmatprep.mubr.bf16.mxu0 0
        %1011 = vmatmul.mubr.bf16.gmra.mxu0 %v806
        %v1012 = vpop.f32.mrf.mxu0
        %v1013 = vadd.f32 0.0, %v1012
        %v1014 = vpop.f32.mrf.mxu0
        %v1015 = vpop.f32.mrf.mxu0
        %v1016 = vadd.f32 0.0, %v1015
        %v1017 = vpop.f32.mrf.mxu0
        %1018 = vmatprep.mubr.bf16.mxu0 0
        %1019 = vmatmul.mubr.bf16.gmra.mxu0 %v809
        %v1020 = vpop.f32.mrf.mxu0
        %v1021 = vadd.f32 0.0, %v1020
        %v1022 = vpop.f32.mrf.mxu0
        %v1023 = vpop.f32.mrf.mxu0
        %v1024 = vadd.f32 0.0, %v1023
        %v1025 = vpop.f32.mrf.mxu0
        %1026 = vmatprep.mubr.bf16.mxu0 0
        %1027 = vmatmul.mubr.bf16.gmra.mxu0 %v812
        %v1028 = vpop.f32.mrf.mxu0
        %v1029 = vadd.f32 0.0, %v1028
        %v1030 = vpop.f32.mrf.mxu0
        %v1031 = vpop.f32.mrf.mxu0
        %v1032 = vadd.f32 0.0, %v1031
        %v1033 = vpop.f32.mrf.mxu0
        %1034 = vmatprep.mubr.bf16.mxu0 0
        %1035 = vmatmul.mubr.bf16.gmra.mxu0 %v815
        %v1036 = vpop.f32.mrf.mxu0
        %v1037 = vadd.f32 0.0, %v1036
        %v1038 = vpop.f32.mrf.mxu0
        %v1039 = vpop.f32.mrf.mxu0
        %v1040 = vadd.f32 0.0, %v1039
        %v1041 = vpop.f32.mrf.mxu0
        %1042 = vmatprep.mubr.bf16.mxu0 0
        %1043 = vmatmul.mubr.bf16.gmra.mxu0 %v818
        %v1044 = vpop.f32.mrf.mxu0
        %v1045 = vadd.f32 0.0, %v1044
        %v1046 = vpop.f32.mrf.mxu0
        %v1047 = vpop.f32.mrf.mxu0
        %v1048 = vadd.f32 0.0, %v1047
        %v1049 = vpop.f32.mrf.mxu0
        %1050 = vmatprep.mubr.bf16.mxu0 0
        %1051 = vmatmul.mubr.bf16.gmra.mxu0 %v821
        %v1052 = vpop.f32.mrf.mxu0
        %v1053 = vadd.f32 0.0, %v1052
        %v1054 = vpop.f32.mrf.mxu0
        %v1055 = vpop.f32.mrf.mxu0
        %v1056 = vadd.f32 0.0, %v1055
        %v1057 = vpop.f32.mrf.mxu0
        %1058 = vmatprep.mubr.bf16.mxu0 0
        %1059 = vmatmul.mubr.bf16.gmra.mxu0 %v824
        %v1060 = vpop.f32.mrf.mxu0
        %v1061 = vadd.f32 0.0, %v1060
        %v1062 = vpop.f32.mrf.mxu0
        %v1063 = vpop.f32.mrf.mxu0
        %v1064 = vadd.f32 0.0, %v1063
        %v1065 = vpop.f32.mrf.mxu0
        %1066 = vmatprep.mubr.bf16.mxu0 0
        %1067 = vmatmul.mubr.bf16.gmra.mxu0 %v827
        %v1068 = vpop.f32.mrf.mxu0
        %v1069 = vadd.f32 0.0, %v1068
        %v1070 = vpop.f32.mrf.mxu0
        %v1071 = vpop.f32.mrf.mxu0
        %v1072 = vadd.f32 0.0, %v1071
        %v1073 = vpop.f32.mrf.mxu0
        %1074 = vmatprep.mubr.bf16.mxu0 0
        %1075 = vmatmul.mubr.bf16.gmra.mxu0 %v830
        %v1076 = vpop.f32.mrf.mxu0
        %v1077 = vadd.f32 0.0, %v1076
        %v1078 = vpop.f32.mrf.mxu0
        %v1079 = vpop.f32.mrf.mxu0
        %v1080 = vadd.f32 0.0, %v1079
        %v1081 = vpop.f32.mrf.mxu0
        %1082 = vmatprep.mubr.bf16.mxu0 0
        %1083 = vmatmul.mubr.bf16.gmra.mxu0 %v833
        %v1084 = vpop.f32.mrf.mxu0
        %v1085 = vadd.f32 0.0, %v1084
        %v1086 = vpop.f32.mrf.mxu0
        %v1087 = vpop.f32.mrf.mxu0
        %v1088 = vadd.f32 0.0, %v1087
        %v1089 = vpop.f32.mrf.mxu0
        %1090 = vmatprep.mubr.bf16.mxu0 0
        %1091 = vmatmul.mubr.bf16.gmra.mxu0 %v836
        %v1092 = vpop.f32.mrf.mxu0
        %v1093 = vadd.f32 0.0, %v1092
        %v1094 = vpop.f32.mrf.mxu0
        %v1095 = vpop.f32.mrf.mxu0
        %v1096 = vadd.f32 0.0, %v1095
        %v1097 = vpop.f32.mrf.mxu0
        %1098 = vmatprep.mubr.bf16.mxu0 0
        %1099 = vmatmul.mubr.bf16.gmra.mxu0 %v839
        %v1100 = vpop.f32.mrf.mxu0
        %v1101 = vadd.f32 0.0, %v1100
        %v1102 = vpop.f32.mrf.mxu0
        %v1103 = vpop.f32.mrf.mxu0
        %v1104 = vadd.f32 0.0, %v1103
        %v1105 = vpop.f32.mrf.mxu0
        %1106 = vmatprep.mubr.bf16.mxu0 0
        %1107 = vmatmul.mubr.bf16.gmra.mxu0 %v842
        %v1108 = vpop.f32.mrf.mxu0
        %v1109 = vadd.f32 0.0, %v1108
        %v1110 = vpop.f32.mrf.mxu0
        %v1111 = vpop.f32.mrf.mxu0
        %v1112 = vadd.f32 0.0, %v1111
        %v1113 = vpop.f32.mrf.mxu0
        %1114 = vmatprep.mubr.bf16.mxu0 0
        %1115 = vmatmul.mubr.bf16.gmra.mxu0 %v845
        %v1116 = vpop.f32.mrf.mxu0
        %v1117 = vadd.f32 0.0, %v1116
        %v1118 = vpop.f32.mrf.mxu0
        %v1119 = vpop.f32.mrf.mxu0
        %v1120 = vadd.f32 0.0, %v1119
        %v1121 = vpop.f32.mrf.mxu0
        %1122 = vmatprep.mubr.bf16.mxu0 0
        %1123 = vmatmul.mubr.bf16.gmra.mxu0 %v848
        %v1124 = vpop.f32.mrf.mxu0
        %v1125 = vadd.f32 0.0, %v1124
        %v1126 = vpop.f32.mrf.mxu0
        %v1127 = vpop.f32.mrf.mxu0
        %v1128 = vadd.f32 0.0, %v1127
        %v1129 = vpop.f32.mrf.mxu0
        %1130 = vmatprep.mubr.bf16.mxu0 0
        %1131 = vmatmul.mubr.bf16.gmra.mxu0 %v851
        %v1132 = vpop.f32.mrf.mxu0
        %v1133 = vadd.f32 0.0, %v1132
        %v1134 = vpop.f32.mrf.mxu0
        %v1135 = vpop.f32.mrf.mxu0
        %v1136 = vadd.f32 0.0, %v1135
        %v1137 = vpop.f32.mrf.mxu0
        %1138 = vmatprep.mubr.bf16.mxu0 0
        %1139 = vmatmul.mubr.bf16.gmra.mxu0 %v854
        %v1140 = vpop.f32.mrf.mxu0
        %v1141 = vadd.f32 0.0, %v1140
        %v1142 = vpop.f32.mrf.mxu0
        %v1143 = vpop.f32.mrf.mxu0
        %v1144 = vadd.f32 0.0, %v1143
        %v1145 = vpop.f32.mrf.mxu0
        %1146 = vmatprep.mubr.bf16.mxu0 0
        %1147 = vmatmul.mubr.bf16.gmra.mxu0 %v857
        %v1148 = vpop.f32.mrf.mxu0
        %v1149 = vadd.f32 0.0, %v1148
        %v1150 = vpop.f32.mrf.mxu0
        %v1151 = vpop.f32.mrf.mxu0
        %v1152 = vadd.f32 0.0, %v1151
        %v1153 = vpop.f32.mrf.mxu0
        %1154 = vmatprep.mubr.bf16.mxu0 0
        %1155 = vmatmul.mubr.bf16.gmra.mxu0 %v860
        %v1156 = vpop.f32.mrf.mxu0
        %v1157 = vadd.f32 0.0, %v1156
        %v1158 = vpop.f32.mrf.mxu0
        %v1159 = vpop.f32.mrf.mxu0
        %v1160 = vadd.f32 0.0, %v1159
        %v1161 = vpop.f32.mrf.mxu0
        %1162 = vmatprep.mubr.bf16.mxu0 0
        %1163 = vmatmul.mubr.bf16.gmra.mxu0 %v863
        %v1164 = vpop.f32.mrf.mxu0
        %v1165 = vadd.f32 0.0, %v1164
        %v1166 = vpop.f32.mrf.mxu0
        %v1167 = vpop.f32.mrf.mxu0
        %v1168 = vadd.f32 0.0, %v1167
        %v1169 = vpop.f32.mrf.mxu0
        %1170 = vmatprep.mubr.bf16.mxu0 0
        %1171 = vmatmul.mubr.bf16.gmra.mxu0 %v866
        %v1172 = vpop.f32.mrf.mxu0
        %v1173 = vadd.f32 0.0, %v1172
        %v1174 = vpop.f32.mrf.mxu0
        %v1175 = vpop.f32.mrf.mxu0
        %v1176 = vadd.f32 0.0, %v1175
        %v1177 = vpop.f32.mrf.mxu0
        %1178 = vmatprep.mubr.bf16.mxu0 0
        %1179 = vmatmul.mubr.bf16.gmra.mxu0 %v869
        %v1180 = vpop.f32.mrf.mxu0
        %v1181 = vadd.f32 0.0, %v1180
        %v1182 = vpop.f32.mrf.mxu0
        %v1183 = vpop.f32.mrf.mxu0
        %v1184 = vadd.f32 0.0, %v1183
        %v1185 = vpop.f32.mrf.mxu0
        %1186 = vmatprep.mubr.bf16.mxu0 0
        %1187 = vmatmul.mubr.bf16.gmra.mxu0 %v872
        %v1188 = vpop.f32.mrf.mxu0
        %v1189 = vadd.f32 0.0, %v1188
        %v1190 = vpop.f32.mrf.mxu0
        %v1191 = vpop.f32.mrf.mxu0
        %v1192 = vadd.f32 0.0, %v1191
        %v1193 = vpop.f32.mrf.mxu0
        %1194 = vdwg.mxu0
        %v1195 = vmax.f32 %v909, %v981
        %v1196 = vmax.f32 %v912, %v984
        %v1197 = vmax.f32 %v917, %v989
        %v1198 = vmax.f32 %v920, %v992
        %v1199 = vmax.f32 %v925, %v997
        %v1200 = vmax.f32 %v928, %v1000
        %v1201 = vmax.f32 %v933, %v1005
        %v1202 = vmax.f32 %v936, %v1008
        %v1203 = vmax.f32 %v941, %v1013
        %v1204 = vmax.f32 %v944, %v1016
        %v1205 = vmax.f32 %v949, %v1021
        %v1206 = vmax.f32 %v952, %v1024
        %v1207 = vmax.f32 %v957, %v1029
        %v1208 = vmax.f32 %v960, %v1032
        %v1209 = vmax.f32 %v965, %v1037
        %v1210 = vmax.f32 %v968, %v1040
        %v1211 = vmax.f32 %v973, %v1045
        %v1212 = vmax.f32 %v976, %v1048
        %v1213 = vmax.f32 %v1053, %v1125
        %v1214 = vmax.f32 %v1056, %v1128
        %v1215 = vmax.f32 %v1061, %v1133
        %v1216 = vmax.f32 %v1064, %v1136
        %v1217 = vmax.f32 %v1069, %v1141
        %v1218 = vmax.f32 %v1072, %v1144
        %v1219 = vmax.f32 %v1077, %v1149
        %v1220 = vmax.f32 %v1080, %v1152
        %v1221 = vmax.f32 %v1085, %v1157
        %v1222 = vmax.f32 %v1088, %v1160
        %v1223 = vmax.f32 %v1093, %v1165
        %v1224 = vmax.f32 %v1096, %v1168
        %v1225 = vmax.f32 %v1101, %v1173
        %v1226 = vmax.f32 %v1104, %v1176
        %v1227 = vmax.f32 %v1109, %v1181
        %v1228 = vmax.f32 %v1112, %v1184
        %v1229 = vmax.f32 %v1117, %v1189
        %v1230 = vmax.f32 %v1120, %v1192
        %v1231 = vmax.f32 %v1195, %v1213
        %v1232 = vmax.f32 %v1196, %v1214
        %v1233 = vmax.f32 %v1197, %v1215
        %v1234 = vmax.f32 %v1198, %v1216
        %v1235 = vmax.f32 %v1199, %v1217
        %v1236 = vmax.f32 %v1200, %v1218
        %v1237 = vmax.f32 %v1201, %v1219
        %v1238 = vmax.f32 %v1202, %v1220
        %v1239 = vmax.f32 %v1203, %v1221
        %v1240 = vmax.f32 %v1204, %v1222
        %v1241 = vmax.f32 %v1205, %v1223
        %v1242 = vmax.f32 %v1206, %v1224
        %v1243 = vmax.f32 %v1207, %v1225
        %v1244 = vmax.f32 %v1208, %v1226
        %v1245 = vmax.f32 %v1209, %v1227
        %v1246 = vmax.f32 %v1210, %v1228
        %v1247 = vmax.f32 %v1211, %v1229
        %v1248 = vmax.f32 %v1212, %v1230
        %v1249 = vld [vmem:[%s2] sm:$0x1]
        %v1251 = vlaneseq
        %v1252 = vshrl.u32 %v1251, 7
        %v1253 = vsub.s32 0, %v1252
        %v1254 = vrot.slane %v1249, %v1253
        %v1256 = vadd.f32 %v1231, %v1254
        %v1257 = vadd.f32 %v1232, %v1254
        %v1258 = vadd.f32 %v1233, %v1254
        %v1259 = vadd.f32 %v1234, %v1254
        %v1260 = vadd.f32 %v1235, %v1254
        %v1261 = vadd.f32 %v1236, %v1254
        %v1262 = vadd.f32 %v1237, %v1254
        %v1263 = vadd.f32 %v1238, %v1254
        %v1264 = vadd.f32 %v1239, %v1254
        %v1265 = vadd.f32 %v1240, %v1254
        %v1266 = vadd.f32 %v1241, %v1254
        %v1267 = vadd.f32 %v1242, %v1254
        %v1268 = vadd.f32 %v1243, %v1254
        %v1269 = vadd.f32 %v1244, %v1254
        %v1270 = vadd.f32 %v1245, %v1254
        %v1271 = vadd.f32 %v1246, %v1254
        %v1272 = vadd.f32 %v1247, %v1254
        %v1273 = vadd.f32 %v1248, %v1254
        %v1274 = vmax.f32 %v1256, 0.0
        %v1275 = vmax.f32 %v1257, 0.0
        %v1276 = vmax.f32 %v1258, 0.0
        %v1277 = vmax.f32 %v1259, 0.0
        %v1278 = vmax.f32 %v1260, 0.0
        %v1279 = vmax.f32 %v1261, 0.0
        %v1280 = vmax.f32 %v1262, 0.0
        %v1281 = vmax.f32 %v1263, 0.0
        %v1282 = vmax.f32 %v1264, 0.0
        %v1283 = vmax.f32 %v1265, 0.0
        %v1284 = vmax.f32 %v1266, 0.0
        %v1285 = vmax.f32 %v1267, 0.0
        %v1286 = vmax.f32 %v1268, 0.0
        %v1287 = vmax.f32 %v1269, 0.0
        %v1288 = vmax.f32 %v1270, 0.0
        %v1289 = vmax.f32 %v1271, 0.0
        %v1290 = vmax.f32 %v1272, 0.0
        %v1291 = vmax.f32 %v1273, 0.0
        %v1292 = vpack.c.bf16 %v1275, %v1274
        %v1293 = vpack.c.bf16 %v1277, %v1276
        %v1294 = vpack.c.bf16 %v1279, %v1278
        %v1295 = vpack.c.bf16 %v1281, %v1280
        %v1296 = vpack.c.bf16 %v1283, %v1282
        %v1297 = vpack.c.bf16 %v1285, %v1284
        %v1298 = vpack.c.bf16 %v1287, %v1286
        %v1299 = vpack.c.bf16 %v1289, %v1288
        %v1300 = vpack.c.bf16 %v1291, %v1290
        %v1310 = vunpack.c.l.b16 %v1292
        %v1311 = vunpack.c.h.b16 %v1292
        %v1312 = vunpack.c.l.b16 %v1293
        %v1313 = vunpack.c.h.b16 %v1293
        %v1314 = vunpack.c.l.b16 %v1294
        %v1315 = vunpack.c.h.b16 %v1294
        %v1316 = vunpack.c.l.b16 %v1295
        %v1317 = vunpack.c.h.b16 %v1295
        %v1318 = vunpack.c.l.b16 %v1296
        %v1319 = vunpack.c.h.b16 %v1296
        %v1320 = vunpack.c.l.b16 %v1297
        %v1321 = vunpack.c.h.b16 %v1297
        %v1322 = vunpack.c.l.b16 %v1298
        %v1323 = vunpack.c.h.b16 %v1298
        %v1324 = vunpack.c.l.b16 %v1299
        %v1325 = vunpack.c.h.b16 %v1299
        %v1326 = vunpack.c.l.b16 %v1300
        %v1327 = vunpack.c.h.b16 %v1300
        %v1328 = vpack.c.b16 %v1310, %v1310
        %v1329 = vpack.c.b16 %v1311, %v1311
        %v1330 = vpack.c.b16 %v1312, %v1312
        %v1331 = vpack.c.b16 %v1313, %v1313
        %v1332 = vpack.c.b16 %v1314, %v1314
        %v1333 = vpack.c.b16 %v1315, %v1315
        %v1334 = vpack.c.b16 %v1316, %v1316
        %v1335 = vpack.c.b16 %v1317, %v1317
        %v1336 = vpack.c.b16 %v1318, %v1318
        %v1337 = vpack.c.b16 %v1319, %v1319
        %v1338 = vpack.c.b16 %v1320, %v1320
        %v1339 = vpack.c.b16 %v1321, %v1321
        %v1340 = vpack.c.b16 %v1322, %v1322
        %v1341 = vpack.c.b16 %v1323, %v1323
        %v1342 = vpack.c.b16 %v1324, %v1324
        %v1343 = vpack.c.b16 %v1325, %v1325
        %v1344 = vpack.c.b16 %v1326, %v1326
        %v1345 = vpack.c.b16 %v1327, %v1327
        %1364 = vst [vmem:[%s499] sm:$0xf] %v1328
        %1365 = vst [vmem:[%s499 + $0x4] sm:$0xf] %v1329
        %1366 = vst [vmem:[%s499 + $0x8] sm:$0xf] %v1330
        %1367 = vst [vmem:[%s499 + $0xc] sm:$0xf] %v1331
        %1368 = vst [vmem:[%s499 + $0x10] sm:$0xf] %v1332
        %1369 = vst [vmem:[%s499 + $0x14] sm:$0xf] %v1333
        %1370 = vst [vmem:[%s499 + $0x18] sm:$0xf] %v1334
        %1371 = vst [vmem:[%s499 + $0x1c] sm:$0xf] %v1335
        %1372 = vst [vmem:[%s499 + $0x20] sm:$0xf] %v1336
        %1373 = vst [vmem:[%s499 + $0x24] sm:$0xf] %v1337
        %1374 = vst [vmem:[%s499 + $0x28] sm:$0xf] %v1338
        %1375 = vst [vmem:[%s499 + $0x2c] sm:$0xf] %v1339
        %1376 = vst [vmem:[%s499 + $0x30] sm:$0xf] %v1340
        %1377 = vst [vmem:[%s499 + $0x34] sm:$0xf] %v1341
        %1378 = vst [vmem:[%s499 + $0x38] sm:$0xf] %v1342
        %1379 = vst [vmem:[%s499 + $0x3c] sm:$0xf] %v1343
        %1380 = vst [vmem:[%s499 + $0x40] sm:$0xf] %v1344
        %1381 = vst [vmem:[%s499 + $0x44] sm:$0xf] %v1345
        %s1382 = smul.u32 18, %s14
        %p1383 = scmp.lt.s32.totalorder %s1382, 35
        %s1384 = scalar_select %p1383, %s1382, 35
        %s1385 = smul.addr %s1384, 4
        %s1386 = scalar_lea.vmem %s3, %s1385
        // Predicated region
        $region74: #{net_forward.5} parent=68 // pred_check
          %p1387 = pneg %p100
        $region75: #{net_forward.5} parent=68 // pred_check_branch
          %1389 = sbr.rel (%p1387) target = $region77
        $region76: #{net_forward.5} parent=68 // pred_region
          %s1390 = smul.u32 18, %s14
        $region77: #{net_forward.5} parent=68 // pred_fallthru
          _
      $region69: #{net_forward.5} parent=5 // pred_fallthru
        _
      %p1391 = scmp.le.s32.totalorder 2, %s9
      // Predicated region
      $region78: #{net_forward.5} parent=5 // pred_check
        %p1392 = pneg %p1391
      $region79: #{net_forward.5} parent=5 // pred_check_branch
        %1394 = sbr.rel (%p1392) target = $region81
      $region80: #{net_forward.5} parent=5 // pred_region
        %s1395 = ssub.s32 %s9, 2
        // Predicated region
        $region82: #{net_forward.5} parent=80 // pred_check
          %p1396 = pneg %p106
        $region83: #{net_forward.5} parent=80 // pred_check_branch
          %1398 = sbr.rel (%p1396) target = $region85
        $region84: #{net_forward.5} parent=80 // pred_region
          %s1399 = smul.u32 18, %s15
          %p1400 = scmp.lt.s32.totalorder %s1399, 35
          %s1401 = scalar_select %p1400, %s1399, 35
          %s1402 = smul.addr %s1401, 4
          %s1403 = scalar_lea.vmem %s3, %s1402
        $region85: #{net_forward.5} parent=80 // pred_fallthru
          _
      $region81: #{net_forward.5} parent=5 // pred_fallthru
        _
    $region6: #{net_forward.5} parent=1 // loop_footer
      %s13 = sadd.s32 1, %s9
    $region7: #{net_forward.5} parent=1 // loop_footer_branch
      %8 = sbr.rel target = $region3
    $region8: #{net_forward.5} parent=1 // loop_exit
      _

// kernel: net_forward.6
$region0: #{net_forward.6}
  #allocation0 [shape = 'u32[]', space=smem, size = 0x4, offset = 0x4, fixed_abs, tag = 'smem constant byte address 0x4 - core index']
  #allocation1 [shape = 'u32[144,128]{1,0:T(1,128)}', space=vmem, size = 0x12000, scoped, tag = 'internal scratch']
  %s0 = inlined_call_operand.vmem [shape: bf16[4,32,320], index: 0, kind: input, shape index: {}]
  %s1 = inlined_call_operand.vmem [shape: bf16[320,128], index: 1, kind: input, shape index: {}]
  %s2 = inlined_call_operand.vmem [shape: f32[1,128], index: 2, kind: input, shape index: {}]
  %s3 = inlined_call_operand.vmem [shape: bf16[32,128], index: 3, kind: output, shape index: {}]
  %s4 = sld [smem:[#allocation0]]
  $region22: #{net_forward.6} parent=0
    _
  %s6 = ssub.s32 1, %s4
  %s7 = scalar_select 0, %s6, %s4
  // Predicated region
  $region2: #{net_forward.6} parent=0 // pred_check
    _
  $region3: #{net_forward.6} parent=0 // pred_check_branch
    %9 = sbr.rel (0) target = $region5
  $region4: #{net_forward.6} parent=0 // pred_region
    _
  $region5: #{net_forward.6} parent=0 // pred_fallthru
    _
  // Predicated region
  $region6: #{net_forward.6} parent=0 // pred_check
    _
  $region7: #{net_forward.6} parent=0 // pred_check_branch
    %11 = sbr.rel (0) target = $region9
  $region8: #{net_forward.6} parent=0 // pred_region
    _
  $region9: #{net_forward.6} parent=0 // pred_fallthru
    _
  // Predicated region
  $region10: #{net_forward.6} parent=0 // pred_check
    _
  $region11: #{net_forward.6} parent=0 // pred_check_branch
    %13 = sbr.rel (0) target = $region13
  $region12: #{net_forward.6} parent=0 // pred_region
    _
  $region13: #{net_forward.6} parent=0 // pred_fallthru
    _
  %v15 = vld [vmem:[%s0] sm:$0xff]
  %v16 = vld [vmem:[%s0 + $0x8] sm:$0xf]
  %v17 = vld [vmem:[%s0 + $0xc] sm:$0xff]
  %v18 = vld [vmem:[%s0 + $0x14] sm:$0xf]
  %v19 = vld [vmem:[%s0 + $0x18] sm:$0xff]
  %v20 = vld [vmem:[%s0 + $0x20] sm:$0xf]
  %v21 = vld [vmem:[%s0 + $0x24] sm:$0xff]
  %v22 = vld [vmem:[%s0 + $0x2c] sm:$0xf]
  %s23 = scalar_lea.vmem %s0, 48
  %v24 = vld [vmem:[%s23] sm:$0xff]
  %v25 = vld [vmem:[%s23 + $0x8] sm:$0xf]
  %v26 = vld [vmem:[%s23 + $0xc] sm:$0xff]
  %v27 = vld [vmem:[%s23 + $0x14] sm:$0xf]
  %v28 = vld [vmem:[%s23 + $0x18] sm:$0xff]
  %v29 = vld [vmem:[%s23 + $0x20] sm:$0xf]
  %v30 = vld [vmem:[%s23 + $0x24] sm:$0xff]
  %v31 = vld [vmem:[%s23 + $0x2c] sm:$0xf]
  %s32 = scalar_lea.vmem %s0, 96
  %v33 = vld [vmem:[%s32] sm:$0xff]
  %v34 = vld [vmem:[%s32 + $0x8] sm:$0xf]
  %v35 = vld [vmem:[%s32 + $0xc] sm:$0xff]
  %v36 = vld [vmem:[%s32 + $0x14] sm:$0xf]
  %v37 = vld [vmem:[%s32 + $0x18] sm:$0xff]
  %v38 = vld [vmem:[%s32 + $0x20] sm:$0xf]
  %v39 = vld [vmem:[%s32 + $0x24] sm:$0xff]
  %v40 = vld [vmem:[%s32 + $0x2c] sm:$0xf]
  %s41 = scalar_lea.vmem %s0, 144
  %v42 = vld [vmem:[%s41] sm:$0xff]
  %v43 = vld [vmem:[%s41 + $0x8] sm:$0xf]
  %v44 = vld [vmem:[%s41 + $0xc] sm:$0xff]
  %v45 = vld [vmem:[%s41 + $0x14] sm:$0xf]
  %v46 = vld [vmem:[%s41 + $0x18] sm:$0xff]
  %v47 = vld [vmem:[%s41 + $0x20] sm:$0xf]
  %v48 = vld [vmem:[%s41 + $0x24] sm:$0xff]
  %v49 = vld [vmem:[%s41 + $0x2c] sm:$0xf]
  %v58 = vunpack.c.l.b16 %v15
  %v59 = vunpack.c.h.b16 %v15
  %v60 = vunpack.c.l.b16 %v16
  %v61 = vunpack.c.l.b16 %v17
  %v62 = vunpack.c.h.b16 %v17
  %v63 = vunpack.c.l.b16 %v18
  %v64 = vunpack.c.l.b16 %v19
  %v65 = vunpack.c.h.b16 %v19
  %v66 = vunpack.c.l.b16 %v20
  %v67 = vunpack.c.l.b16 %v21
  %v68 = vunpack.c.h.b16 %v21
  %v69 = vunpack.c.l.b16 %v22
  %v70 = vpack.c.b16 %v61, %v58
  %v71 = vpack.c.b16 %v62, %v59
  %v72 = vpack.c.b16 %v63, %v60
  %v73 = vpack.c.b16 %v67, %v64
  %v74 = vpack.c.b16 %v68, %v65
  %v75 = vpack.c.b16 %v69, %v66
  %v88 = vunpack.c.l.b16 %v24
  %v89 = vunpack.c.h.b16 %v24
  %v90 = vunpack.c.l.b16 %v25
  %v91 = vunpack.c.l.b16 %v26
  %v92 = vunpack.c.h.b16 %v26
  %v93 = vunpack.c.l.b16 %v27
  %v94 = vunpack.c.l.b16 %v28
  %v95 = vunpack.c.h.b16 %v28
  %v96 = vunpack.c.l.b16 %v29
  %v97 = vunpack.c.l.b16 %v30
  %v98 = vunpack.c.h.b16 %v30
  %v99 = vunpack.c.l.b16 %v31
  %v100 = vpack.c.b16 %v91, %v88
  %v101 = vpack.c.b16 %v92, %v89
  %v102 = vpack.c.b16 %v93, %v90
  %v103 = vpack.c.b16 %v97, %v94
  %v104 = vpack.c.b16 %v98, %v95
  %v105 = vpack.c.b16 %v99, %v96
  %v118 = vunpack.c.l.b16 %v33
  %v119 = vunpack.c.h.b16 %v33
  %v120 = vunpack.c.l.b16 %v34
  %v121 = vunpack.c.l.b16 %v35
  %v122 = vunpack.c.h.b16 %v35
  %v123 = vunpack.c.l.b16 %v36
  %v124 = vunpack.c.l.b16 %v37
  %v125 = vunpack.c.h.b16 %v37
  %v126 = vunpack.c.l.b16 %v38
  %v127 = vunpack.c.l.b16 %v39
  %v128 = vunpack.c.h.b16 %v39
  %v129 = vunpack.c.l.b16 %v40
  %v130 = vpack.c.b16 %v121, %v118
  %v131 = vpack.c.b16 %v122, %v119
  %v132 = vpack.c.b16 %v123, %v120
  %v133 = vpack.c.b16 %v127, %v124
  %v134 = vpack.c.b16 %v128, %v125
  %v135 = vpack.c.b16 %v129, %v126
  %v148 = vunpack.c.l.b16 %v42
  %v149 = vunpack.c.h.b16 %v42
  %v150 = vunpack.c.l.b16 %v43
  %v151 = vunpack.c.l.b16 %v44
  %v152 = vunpack.c.h.b16 %v44
  %v153 = vunpack.c.l.b16 %v45
  %v154 = vunpack.c.l.b16 %v46
  %v155 = vunpack.c.h.b16 %v46
  %v156 = vunpack.c.l.b16 %v47
  %v157 = vunpack.c.l.b16 %v48
  %v158 = vunpack.c.h.b16 %v48
  %v159 = vunpack.c.l.b16 %v49
  %v160 = vpack.c.b16 %v151, %v148
  %v161 = vpack.c.b16 %v152, %v149
  %v162 = vpack.c.b16 %v153, %v150
  %v163 = vpack.c.b16 %v157, %v154
  %v164 = vpack.c.b16 %v158, %v155
  %v165 = vpack.c.b16 %v159, %v156
  %v170 = vld [vmem:[%s1] sm:$0xf]
  %v171 = vld [vmem:[%s1 + $0x4] sm:$0xf]
  %v172 = vld [vmem:[%s1 + $0x8] sm:$0xf]
  %v173 = vld [vmem:[%s1 + $0xc] sm:$0xf]
  %v174 = vld [vmem:[%s1 + $0x10] sm:$0xf]
  %v175 = vld [vmem:[%s1 + $0x14] sm:$0xf]
  %v176 = vld [vmem:[%s1 + $0x18] sm:$0xf]
  %v177 = vld [vmem:[%s1 + $0x1c] sm:$0xf]
  %v178 = vld [vmem:[%s1 + $0x20] sm:$0xf]
  %v179 = vld [vmem:[%s1 + $0x24] sm:$0xf]
  %v180 = vld [vmem:[%s1 + $0x28] sm:$0xf]
  %v181 = vld [vmem:[%s1 + $0x2c] sm:$0xf]
  %v182 = vld [vmem:[%s1 + $0x30] sm:$0xf]
  %v183 = vld [vmem:[%s1 + $0x34] sm:$0xf]
  %v184 = vld [vmem:[%s1 + $0x38] sm:$0xf]
  %v185 = vld [vmem:[%s1 + $0x3c] sm:$0xf]
  %v186 = vld [vmem:[%s1 + $0x40] sm:$0xf]
  %v187 = vld [vmem:[%s1 + $0x44] sm:$0xf]
  %v188 = vld [vmem:[%s1 + $0x48] sm:$0xf]
  %v189 = vld [vmem:[%s1 + $0x4c] sm:$0xf]
  %v190 = vld [vmem:[%s1 + $0x50] sm:$0xf]
  %v191 = vld [vmem:[%s1 + $0x54] sm:$0xf]
  %v192 = vld [vmem:[%s1 + $0x58] sm:$0xf]
  %v193 = vld [vmem:[%s1 + $0x5c] sm:$0xf]
  %v194 = vld [vmem:[%s1 + $0x60] sm:$0xf]
  %v195 = vld [vmem:[%s1 + $0x64] sm:$0xf]
  %v196 = vld [vmem:[%s1 + $0x68] sm:$0xf]
  %v197 = vld [vmem:[%s1 + $0x6c] sm:$0xf]
  %v198 = vld [vmem:[%s1 + $0x70] sm:$0xf]
  %v199 = vld [vmem:[%s1 + $0x74] sm:$0xf]
  %v200 = vld [vmem:[%s1 + $0x78] sm:$0xf]
  %v201 = vld [vmem:[%s1 + $0x7c] sm:$0xf]
  %v202 = vld [vmem:[%s1 + $0x80] sm:$0xf]
  %v203 = vld [vmem:[%s1 + $0x84] sm:$0xf]
  %v204 = vld [vmem:[%s1 + $0x88] sm:$0xf]
  %v205 = vld [vmem:[%s1 + $0x8c] sm:$0xf]
  %v206 = vld [vmem:[%s1 + $0x90] sm:$0xf]
  %v207 = vld [vmem:[%s1 + $0x94] sm:$0xf]
  %v208 = vld [vmem:[%s1 + $0x98] sm:$0xf]
  %v209 = vld [vmem:[%s1 + $0x9c] sm:$0xf]
  %v250 = vunpack.c.l.b16 %v170
  %v251 = vunpack.c.l.b16 %v171
  %v252 = vunpack.c.l.b16 %v172
  %v253 = vunpack.c.l.b16 %v173
  %v254 = vunpack.c.l.b16 %v174
  %v255 = vunpack.c.l.b16 %v175
  %v256 = vunpack.c.l.b16 %v176
  %v257 = vunpack.c.l.b16 %v177
  %v258 = vunpack.c.l.b16 %v178
  %v259 = vunpack.c.l.b16 %v179
  %v260 = vunpack.c.l.b16 %v180
  %v261 = vunpack.c.l.b16 %v181
  %v262 = vunpack.c.l.b16 %v182
  %v263 = vunpack.c.l.b16 %v183
  %v264 = vunpack.c.l.b16 %v184
  %v265 = vunpack.c.l.b16 %v185
  %v266 = vunpack.c.l.b16 %v186
  %v267 = vunpack.c.l.b16 %v187
  %v268 = vunpack.c.l.b16 %v188
  %v269 = vunpack.c.l.b16 %v189
  %v270 = vunpack.c.l.b16 %v190
  %v271 = vunpack.c.l.b16 %v191
  %v272 = vunpack.c.l.b16 %v192
  %v273 = vunpack.c.l.b16 %v193
  %v274 = vunpack.c.l.b16 %v194
  %v275 = vunpack.c.l.b16 %v195
  %v276 = vunpack.c.l.b16 %v196
  %v277 = vunpack.c.l.b16 %v197
  %v278 = vunpack.c.l.b16 %v198
  %v279 = vunpack.c.l.b16 %v199
  %v280 = vunpack.c.l.b16 %v200
  %v281 = vunpack.c.l.b16 %v201
  %v282 = vunpack.c.l.b16 %v202
  %v283 = vunpack.c.l.b16 %v203
  %v284 = vunpack.c.l.b16 %v204
  %v285 = vunpack.c.l.b16 %v205
  %v286 = vunpack.c.l.b16 %v206
  %v287 = vunpack.c.l.b16 %v207
  %v288 = vunpack.c.l.b16 %v208
  %v289 = vunpack.c.l.b16 %v209
  %v290 = vpack.c.b16 %v251, %v250
  %v291 = vpack.c.b16 %v253, %v252
  %v292 = vpack.c.b16 %v255, %v254
  %v293 = vpack.c.b16 %v257, %v256
  %v294 = vpack.c.b16 %v259, %v258
  %v295 = vpack.c.b16 %v261, %v260
  %v296 = vpack.c.b16 %v263, %v262
  %v297 = vpack.c.b16 %v265, %v264
  %v298 = vpack.c.b16 %v267, %v266
  %v299 = vpack.c.b16 %v269, %v268
  %v300 = vpack.c.b16 %v271, %v270
  %v301 = vpack.c.b16 %v273, %v272
  %v302 = vpack.c.b16 %v275, %v274
  %v303 = vpack.c.b16 %v277, %v276
  %v304 = vpack.c.b16 %v279, %v278
  %v305 = vpack.c.b16 %v281, %v280
  %v306 = vpack.c.b16 %v283, %v282
  %v307 = vpack.c.b16 %v285, %v284
  %v308 = vpack.c.b16 %v287, %v286
  %v309 = vpack.c.b16 %v289, %v288
  %vm330 = vcmask 523264
  %v332 = vsel %vm330, %v72, 0
  %v335 = vsel %vm330, %v75, 0
  %v338 = vsel %vm330, %v102, 0
  %v341 = vsel %vm330, %v105, 0
  %v344 = vsel %vm330, %v132, 0
  %v347 = vsel %vm330, %v135, 0
  %v350 = vsel %vm330, %v162, 0
  %v353 = vsel %vm330, %v165, 0
  %355 = vmatprep.subr.bf16.mxu0 0
  %356 = vmatpush1.bf16.msra.mxu0 %v297
  %357 = vmatprep.subr.bf16.mxu0 0
  %358 = vmatpush1.bf16.msra.mxu0 %v296
  %359 = vmatprep.subr.bf16.mxu0 0
  %360 = vmatpush1.bf16.msra.mxu0 %v295
  %361 = vmatprep.subr.bf16.mxu0 0
  %362 = vmatpush1.bf16.msra.mxu0 %v294
  %363 = vmatprep.subr.bf16.mxu0 0
  %364 = vmatpush1.bf16.msra.mxu0 %v293
  %365 = vmatprep.subr.bf16.mxu0 0
  %366 = vmatpush1.bf16.msra.mxu0 %v292
  %367 = vmatprep.subr.bf16.mxu0 0
  %368 = vmatpush1.bf16.msra.mxu0 %v291
  %369 = vmatprep.subr.bf16.mxu0 0
  %370 = vmatpush1.bf16.msra.mxu0 %v290
  %371 = vmatprep.subr.bf16.mxu0 0
  %372 = vmatpush2.bf16.msra.mxu0 %v305
  %373 = vmatprep.subr.bf16.mxu0 0
  %374 = vmatpush2.bf16.msra.mxu0 %v304
  %375 = vmatprep.subr.bf16.mxu0 0
  %376 = vmatpush2.bf16.msra.mxu0 %v303
  %377 = vmatprep.subr.bf16.mxu0 0
  %378 = vmatpush2.bf16.msra.mxu0 %v302
  %379 = vmatprep.subr.bf16.mxu0 0
  %380 = vmatpush2.bf16.msra.mxu0 %v301
  %381 = vmatprep.subr.bf16.mxu0 0
  %382 = vmatpush2.bf16.msra.mxu0 %v300
  %383 = vmatprep.subr.bf16.mxu0 0
  %384 = vmatpush2.bf16.msra.mxu0 %v299
  %385 = vmatprep.subr.bf16.mxu0 0
  %386 = vmatpush2.bf16.msra.mxu0 %v298
  %387 = vmatprep.mubr.bf16.mxu0 %v71
  %388 = vmatmul.mubr.bf16.gmra.mxu0 %v70
  %v389 = vpop.f32.mrf.mxu0
  %v390 = vadd.f32 0.0, %v389
  %v391 = vpop.f32.mrf.mxu0
  %v392 = vpop.f32.mrf.mxu0
  %v393 = vadd.f32 0.0, %v392
  %v394 = vpop.f32.mrf.mxu0
  %395 = vmatprep.mubr.bf16.mxu0 %v74
  %396 = vmatmul.mubr.bf16.gmra.mxu0 %v73
  %v397 = vpop.f32.mrf.mxu0
  %v398 = vadd.f32 0.0, %v397
  %v399 = vpop.f32.mrf.mxu0
  %v400 = vpop.f32.mrf.mxu0
  %v401 = vadd.f32 0.0, %v400
  %v402 = vpop.f32.mrf.mxu0
  %403 = vmatprep.mubr.bf16.mxu0 %v101
  %404 = vmatmul.mubr.bf16.gmra.mxu0 %v100
  %v405 = vpop.f32.mrf.mxu0
  %v406 = vadd.f32 0.0, %v405
  %v407 = vpop.f32.mrf.mxu0
  %v408 = vpop.f32.mrf.mxu0
  %v409 = vadd.f32 0.0, %v408
  %v410 = vpop.f32.mrf.mxu0
  %411 = vmatprep.mubr.bf16.mxu0 %v104
  %412 = vmatmul.mubr.bf16.gmra.mxu0 %v103
  %v413 = vpop.f32.mrf.mxu0
  %v414 = vadd.f32 0.0, %v413
  %v415 = vpop.f32.mrf.mxu0
  %v416 = vpop.f32.mrf.mxu0
  %v417 = vadd.f32 0.0, %v416
  %v418 = vpop.f32.mrf.mxu0
  %419 = vmatprep.mubr.bf16.mxu0 %v131
  %420 = vmatmul.mubr.bf16.gmra.mxu0 %v130
  %v421 = vpop.f32.mrf.mxu0
  %v422 = vadd.f32 0.0, %v421
  %v423 = vpop.f32.mrf.mxu0
  %v424 = vpop.f32.mrf.mxu0
  %v425 = vadd.f32 0.0, %v424
  %v426 = vpop.f32.mrf.mxu0
  %427 = vmatprep.mubr.bf16.mxu0 %v134
  %428 = vmatmul.mubr.bf16.gmra.mxu0 %v133
  %v429 = vpop.f32.mrf.mxu0
  %v430 = vadd.f32 0.0, %v429
  %v431 = vpop.f32.mrf.mxu0
  %v432 = vpop.f32.mrf.mxu0
  %v433 = vadd.f32 0.0, %v432
  %v434 = vpop.f32.mrf.mxu0
  %435 = vmatprep.mubr.bf16.mxu0 %v161
  %436 = vmatmul.mubr.bf16.gmra.mxu0 %v160
  %v437 = vpop.f32.mrf.mxu0
  %v438 = vadd.f32 0.0, %v437
  %v439 = vpop.f32.mrf.mxu0
  %v440 = vpop.f32.mrf.mxu0
  %v441 = vadd.f32 0.0, %v440
  %v442 = vpop.f32.mrf.mxu0
  %443 = vmatprep.mubr.bf16.mxu0 %v164
  %444 = vmatmul.mubr.bf16.gmra.mxu0 %v163
  %v445 = vpop.f32.mrf.mxu0
  %v446 = vadd.f32 0.0, %v445
  %v447 = vpop.f32.mrf.mxu0
  %v448 = vpop.f32.mrf.mxu0
  %v449 = vadd.f32 0.0, %v448
  %v450 = vpop.f32.mrf.mxu0
  %451 = vdwg.mxu0
  %452 = vmatprep.subr.bf16.mxu0 0
  %453 = vmatpush1.bf16.msra.mxu0 0
  %454 = vmatprep.subr.bf16.mxu0 0
  %455 = vmatpush1.bf16.msra.mxu0 0
  %456 = vmatprep.subr.bf16.mxu0 0
  %457 = vmatpush1.bf16.msra.mxu0 0
  %458 = vmatprep.subr.bf16.mxu0 0
  %459 = vmatpush1.bf16.msra.mxu0 0
  %460 = vmatprep.subr.bf16.mxu0 0
  %461 = vmatpush1.bf16.msra.mxu0 %v309
  %462 = vmatprep.subr.bf16.mxu0 0
  %463 = vmatpush1.bf16.msra.mxu0 %v308
  %464 = vmatprep.subr.bf16.mxu0 0
  %465 = vmatpush1.bf16.msra.mxu0 %v307
  %466 = vmatprep.subr.bf16.mxu0 0
  %467 = vmatpush1.bf16.msra.mxu0 %v306
  %468 = vmatprep.subr.bf16.mxu0 0
  %469 = vmatpush2.bf16.msra.mxu0 0
  %470 = vmatprep.subr.bf16.mxu0 0
  %471 = vmatpush2.bf16.msra.mxu0 0
  %472 = vmatprep.subr.bf16.mxu0 0
  %473 = vmatpush2.bf16.msra.mxu0 0
  %474 = vmatprep.subr.bf16.mxu0 0
  %475 = vmatpush2.bf16.msra.mxu0 0
  %476 = vmatprep.subr.bf16.mxu0 0
  %477 = vmatpush2.bf16.msra.mxu0 0
  %478 = vmatprep.subr.bf16.mxu0 0
  %479 = vmatpush2.bf16.msra.mxu0 0
  %480 = vmatprep.subr.bf16.mxu0 0
  %481 = vmatpush2.bf16.msra.mxu0 0
  %482 = vmatprep.subr.bf16.mxu0 0
  %483 = vmatpush2.bf16.msra.mxu0 0
  %484 = vmatprep.mubr.bf16.mxu0 0
  %485 = vmatmul.mubr.bf16.gmra.mxu0 %v332
  %v486 = vpop.f32.mrf.mxu0
  %v487 = vadd.f32 %v390, %v486
  %v488 = vpop.f32.mrf.mxu0
  %v489 = vpop.f32.mrf.mxu0
  %v490 = vadd.f32 %v393, %v489
  %v491 = vpop.f32.mrf.mxu0
  %492 = vmatprep.mubr.bf16.mxu0 0
  %493 = vmatmul.mubr.bf16.gmra.mxu0 %v335
  %v494 = vpop.f32.mrf.mxu0
  %v495 = vadd.f32 %v398, %v494
  %v496 = vpop.f32.mrf.mxu0
  %v497 = vpop.f32.mrf.mxu0
  %v498 = vadd.f32 %v401, %v497
  %v499 = vpop.f32.mrf.mxu0
  %500 = vmatprep.mubr.bf16.mxu0 0
  %501 = vmatmul.mubr.bf16.gmra.mxu0 %v338
  %v502 = vpop.f32.mrf.mxu0
  %v503 = vadd.f32 %v406, %v502
  %v504 = vpop.f32.mrf.mxu0
  %v505 = vpop.f32.mrf.mxu0
  %v506 = vadd.f32 %v409, %v505
  %v507 = vpop.f32.mrf.mxu0
  %508 = vmatprep.mubr.bf16.mxu0 0
  %509 = vmatmul.mubr.bf16.gmra.mxu0 %v341
  %v510 = vpop.f32.mrf.mxu0
  %v511 = vadd.f32 %v414, %v510
  %v512 = vpop.f32.mrf.mxu0
  %v513 = vpop.f32.mrf.mxu0
  %v514 = vadd.f32 %v417, %v513
  %v515 = vpop.f32.mrf.mxu0
  %516 = vmatprep.mubr.bf16.mxu0 0
  %517 = vmatmul.mubr.bf16.gmra.mxu0 %v344
  %v518 = vpop.f32.mrf.mxu0
  %v519 = vadd.f32 %v422, %v518
  %v520 = vpop.f32.mrf.mxu0
  %v521 = vpop.f32.mrf.mxu0
  %v522 = vadd.f32 %v425, %v521
  %v523 = vpop.f32.mrf.mxu0
  %524 = vmatprep.mubr.bf16.mxu0 0
  %525 = vmatmul.mubr.bf16.gmra.mxu0 %v347
  %v526 = vpop.f32.mrf.mxu0
  %v527 = vadd.f32 %v430, %v526
  %v528 = vpop.f32.mrf.mxu0
  %v529 = vpop.f32.mrf.mxu0
  %v530 = vadd.f32 %v433, %v529
  %v531 = vpop.f32.mrf.mxu0
  %532 = vmatprep.mubr.bf16.mxu0 0
  %533 = vmatmul.mubr.bf16.gmra.mxu0 %v350
  %v534 = vpop.f32.mrf.mxu0
  %v535 = vadd.f32 %v438, %v534
  %v536 = vpop.f32.mrf.mxu0
  %v537 = vpop.f32.mrf.mxu0
  %v538 = vadd.f32 %v441, %v537
  %v539 = vpop.f32.mrf.mxu0
  %540 = vmatprep.mubr.bf16.mxu0 0
  %541 = vmatmul.mubr.bf16.gmra.mxu0 %v353
  %v542 = vpop.f32.mrf.mxu0
  %v543 = vadd.f32 %v446, %v542
  %v544 = vpop.f32.mrf.mxu0
  %v545 = vpop.f32.mrf.mxu0
  %v546 = vadd.f32 %v449, %v545
  %v547 = vpop.f32.mrf.mxu0
  %548 = vdwg.mxu0
  %v549 = vmax.f32 %v487, %v503
  %v550 = vmax.f32 %v490, %v506
  %v551 = vmax.f32 %v495, %v511
  %v552 = vmax.f32 %v498, %v514
  %v553 = vmax.f32 %v519, %v535
  %v554 = vmax.f32 %v522, %v538
  %v555 = vmax.f32 %v527, %v543
  %v556 = vmax.f32 %v530, %v546
  %v557 = vmax.f32 %v549, %v553
  %v558 = vmax.f32 %v550, %v554
  %v559 = vmax.f32 %v551, %v555
  %v560 = vmax.f32 %v552, %v556
  %v561 = vld [vmem:[%s2] sm:$0x1]
  %v563 = vlaneseq
  %v564 = vshrl.u32 %v563, 7
  %v565 = vsub.s32 0, %v564
  %v566 = vrot.slane %v561, %v565
  %v568 = vadd.f32 %v557, %v566
  %v569 = vadd.f32 %v558, %v566
  %v570 = vadd.f32 %v559, %v566
  %v571 = vadd.f32 %v560, %v566
  %v572 = vmax.f32 %v568, 0.0
  %v573 = vmax.f32 %v569, 0.0
  %v574 = vmax.f32 %v570, 0.0
  %v575 = vmax.f32 %v571, 0.0
  %v576 = vpack.c.bf16 %v573, %v572
  %v577 = vpack.c.bf16 %v575, %v574
  %v580 = vunpack.c.l.b16 %v576
  %v581 = vunpack.c.h.b16 %v576
  %v582 = vunpack.c.l.b16 %v577
  %v583 = vunpack.c.h.b16 %v577
  %v584 = vpack.c.b16 %v580, %v580
  %v585 = vpack.c.b16 %v581, %v581
  %v586 = vpack.c.b16 %v582, %v582
  %v587 = vpack.c.b16 %v583, %v583
  %592 = vst [vmem:[%s3] sm:$0xf] %v584
  %593 = vst [vmem:[%s3 + $0x4] sm:$0xf] %v585
  %594 = vst [vmem:[%s3 + $0x8] sm:$0xf] %v586
  %595 = vst [vmem:[%s3 + $0xc] sm:$0xf] %v587
  // Predicated region
  $region14: #{net_forward.6} parent=0 // pred_check
    _
  $region15: #{net_forward.6} parent=0 // pred_check_branch
    %597 = sbr.rel (0) target = $region17
  $region16: #{net_forward.6} parent=0 // pred_region
    _
  $region17: #{net_forward.6} parent=0 // pred_fallthru
    _
  // Predicated region
  $region18: #{net_forward.6} parent=0 // pred_check
    _
  $region19: #{net_forward.6} parent=0 // pred_check_branch
    %599 = sbr.rel (0) target = $region21
  $region20: #{net_forward.6} parent=0 // pred_region
    _
  $region21: #{net_forward.6} parent=0 // pred_fallthru
    _

// kernel: net_forward.7
$region0: #{net_forward.7}
  #allocation0 [shape = 'u32[]', space=smem, size = 0x4, offset = 0x4, fixed_abs, tag = 'smem constant byte address 0x4 - core index']
  #allocation1 [shape = 'u32[144,128]{1,0:T(1,128)}', space=vmem, size = 0x12000, scoped, tag = 'internal scratch']
  %s0 = inlined_call_operand.vmem [shape: bf16[16,800], index: 0, kind: input, shape index: {}]
  %s1 = inlined_call_operand.vmem [shape: bf16[800,128], index: 1, kind: input, shape index: {}]
  %s2 = inlined_call_operand.vmem [shape: f32[1,128], index: 2, kind: input, shape index: {}]
  %s3 = inlined_call_operand.vmem [shape: bf16[128,896], index: 3, kind: input, shape index: {}]
  %s4 = inlined_call_operand.vmem [shape: f32[1,896], index: 4, kind: input, shape index: {}]
  %s5 = inlined_call_operand.vmem [shape: f32[16,128], index: 5, kind: output, shape index: {0}]
  %s6 = inlined_call_operand.vmem [shape: bf16[16,896], index: 6, kind: output, shape index: {1}]
  %7 = xla_tuple %s5, %s6
  %s8 = sld [smem:[#allocation0]]
  $region38: #{net_forward.7} parent=0
    _
  %s10 = ssub.s32 1, %s8
  %s11 = scalar_select 0, %s10, %s8
  // Predicated region
  $region2: #{net_forward.7} parent=0 // pred_check
    _
  $region3: #{net_forward.7} parent=0 // pred_check_branch
    %13 = sbr.rel (0) target = $region5
  $region4: #{net_forward.7} parent=0 // pred_region
    _
  $region5: #{net_forward.7} parent=0 // pred_fallthru
    _
  // Predicated region
  $region6: #{net_forward.7} parent=0 // pred_check
    _
  $region7: #{net_forward.7} parent=0 // pred_check_branch
    %15 = sbr.rel (0) target = $region9
  $region8: #{net_forward.7} parent=0 // pred_region
    _
  $region9: #{net_forward.7} parent=0 // pred_fallthru
    _
  // Predicated region
  $region10: #{net_forward.7} parent=0 // pred_check
    _
  $region11: #{net_forward.7} parent=0 // pred_check_branch
    %17 = sbr.rel (0) target = $region13
  $region12: #{net_forward.7} parent=0 // pred_region
    _
  $region13: #{net_forward.7} parent=0 // pred_fallthru
    _
  // Predicated region
  $region14: #{net_forward.7} parent=0 // pred_check
    _
  $region15: #{net_forward.7} parent=0 // pred_check_branch
    %19 = sbr.rel (0) target = $region17
  $region16: #{net_forward.7} parent=0 // pred_region
    _
  $region17: #{net_forward.7} parent=0 // pred_fallthru
    _
  // Predicated region
  $region18: #{net_forward.7} parent=0 // pred_check
    _
  $region19: #{net_forward.7} parent=0 // pred_check_branch
    %21 = sbr.rel (0) target = $region21
  $region20: #{net_forward.7} parent=0 // pred_region
    _
  $region21: #{net_forward.7} parent=0 // pred_fallthru
    _
  %v23 = vld [vmem:[%s0] sm:$0xff]
  %v24 = vld [vmem:[%s0 + $0x8] sm:$0xff]
  %v25 = vld [vmem:[%s0 + $0x10] sm:$0xff]
  %v26 = vld [vmem:[%s0 + $0x18] sm:$0xf]
  %v27 = vld [vmem:[%s0 + $0x1c] sm:$0xff]
  %v28 = vld [vmem:[%s0 + $0x24] sm:$0xff]
  %v29 = vld [vmem:[%s0 + $0x2c] sm:$0xff]
  %v30 = vld [vmem:[%s0 + $0x34] sm:$0xf]
  %v31 = vld [vmem:[%s1] sm:$0xf]
  %v32 = vld [vmem:[%s1 + $0x4] sm:$0xf]
  %v33 = vld [vmem:[%s1 + $0x8] sm:$0xf]
  %v34 = vld [vmem:[%s1 + $0xc] sm:$0xf]
  %v35 = vld [vmem:[%s1 + $0x10] sm:$0xf]
  %v36 = vld [vmem:[%s1 + $0x14] sm:$0xf]
  %v37 = vld [vmem:[%s1 + $0x18] sm:$0xf]
  %v38 = vld [vmem:[%s1 + $0x1c] sm:$0xf]
  %v39 = vld [vmem:[%s1 + $0x20] sm:$0xf]
  %v40 = vld [vmem:[%s1 + $0x24] sm:$0xf]
  %v41 = vld [vmem:[%s1 + $0x28] sm:$0xf]
  %v42 = vld [vmem:[%s1 + $0x2c] sm:$0xf]
  %v43 = vld [vmem:[%s1 + $0x30] sm:$0xf]
  %v44 = vld [vmem:[%s1 + $0x34] sm:$0xf]
  %v45 = vld [vmem:[%s1 + $0x38] sm:$0xf]
  %v46 = vld [vmem:[%s1 + $0x3c] sm:$0xf]
  %v47 = vld [vmem:[%s1 + $0x40] sm:$0xf]
  %v48 = vld [vmem:[%s1 + $0x44] sm:$0xf]
  %v49 = vld [vmem:[%s1 + $0x48] sm:$0xf]
  %v50 = vld [vmem:[%s1 + $0x4c] sm:$0xf]
  %v51 = vld [vmem:[%s1 + $0x50] sm:$0xf]
  %v52 = vld [vmem:[%s1 + $0x54] sm:$0xf]
  %v53 = vld [vmem:[%s1 + $0x58] sm:$0xf]
  %v54 = vld [vmem:[%s1 + $0x5c] sm:$0xf]
  %v55 = vld [vmem:[%s1 + $0x60] sm:$0xf]
  %v56 = vld [vmem:[%s1 + $0x64] sm:$0xf]
  %v57 = vld [vmem:[%s1 + $0x68] sm:$0xf]
  %v58 = vld [vmem:[%s1 + $0x6c] sm:$0xf]
  %v59 = vld [vmem:[%s1 + $0x70] sm:$0xf]
  %v60 = vld [vmem:[%s1 + $0x74] sm:$0xf]
  %v61 = vld [vmem:[%s1 + $0x78] sm:$0xf]
  %v62 = vld [vmem:[%s1 + $0x7c] sm:$0xf]
  %v63 = vld [vmem:[%s1 + $0x80] sm:$0xf]
  %v64 = vld [vmem:[%s1 + $0x84] sm:$0xf]
  %v65 = vld [vmem:[%s1 + $0x88] sm:$0xf]
  %v66 = vld [vmem:[%s1 + $0x8c] sm:$0xf]
  %v67 = vld [vmem:[%s1 + $0x90] sm:$0xf]
  %v68 = vld [vmem:[%s1 + $0x94] sm:$0xf]
  %v69 = vld [vmem:[%s1 + $0x98] sm:$0xf]
  %v70 = vld [vmem:[%s1 + $0x9c] sm:$0xf]
  %v71 = vld [vmem:[%s1 + $0xa0] sm:$0xf]
  %v72 = vld [vmem:[%s1 + $0xa4] sm:$0xf]
  %v73 = vld [vmem:[%s1 + $0xa8] sm:$0xf]
  %v74 = vld [vmem:[%s1 + $0xac] sm:$0xf]
  %v75 = vld [vmem:[%s1 + $0xb0] sm:$0xf]
  %v76 = vld [vmem:[%s1 + $0xb4] sm:$0xf]
  %v77 = vld [vmem:[%s1 + $0xb8] sm:$0xf]
  %v78 = vld [vmem:[%s1 + $0xbc] sm:$0xf]
  %v79 = vld [vmem:[%s1 + $0xc0] sm:$0xf]
  %v80 = vld [vmem:[%s1 + $0xc4] sm:$0xf]
  %v81 = vld [vmem:[%s1 + $0xc8] sm:$0xf]
  %v82 = vld [vmem:[%s1 + $0xcc] sm:$0xf]
  %v83 = vld [vmem:[%s1 + $0xd0] sm:$0xf]
  %v84 = vld [vmem:[%s1 + $0xd4] sm:$0xf]
  %v85 = vld [vmem:[%s1 + $0xd8] sm:$0xf]
  %v86 = vld [vmem:[%s1 + $0xdc] sm:$0xf]
  %v87 = vld [vmem:[%s1 + $0xe0] sm:$0xf]
  %v88 = vld [vmem:[%s1 + $0xe4] sm:$0xf]
  %v89 = vld [vmem:[%s1 + $0xe8] sm:$0xf]
  %v90 = vld [vmem:[%s1 + $0xec] sm:$0xf]
  %v91 = vld [vmem:[%s1 + $0xf0] sm:$0xf]
  %v92 = vld [vmem:[%s1 + $0xf4] sm:$0xf]
  %v93 = vld [vmem:[%s1 + $0xf8] sm:$0xf]
  %v94 = vld [vmem:[%s1 + $0xfc] sm:$0xf]
  %v95 = vld [vmem:[%s1 + $0x100] sm:$0xf]
  %v96 = vld [vmem:[%s1 + $0x104] sm:$0xf]
  %v97 = vld [vmem:[%s1 + $0x108] sm:$0xf]
  %v98 = vld [vmem:[%s1 + $0x10c] sm:$0xf]
  %v99 = vld [vmem:[%s1 + $0x110] sm:$0xf]
  %v100 = vld [vmem:[%s1 + $0x114] sm:$0xf]
  %v101 = vld [vmem:[%s1 + $0x118] sm:$0xf]
  %v102 = vld [vmem:[%s1 + $0x11c] sm:$0xf]
  %v103 = vld [vmem:[%s1 + $0x120] sm:$0xf]
  %v104 = vld [vmem:[%s1 + $0x124] sm:$0xf]
  %v105 = vld [vmem:[%s1 + $0x128] sm:$0xf]
  %v106 = vld [vmem:[%s1 + $0x12c] sm:$0xf]
  %v107 = vld [vmem:[%s1 + $0x130] sm:$0xf]
  %v108 = vld [vmem:[%s1 + $0x134] sm:$0xf]
  %v109 = vld [vmem:[%s1 + $0x138] sm:$0xf]
  %v110 = vld [vmem:[%s1 + $0x13c] sm:$0xf]
  %v111 = vld [vmem:[%s1 + $0x140] sm:$0xf]
  %v112 = vld [vmem:[%s1 + $0x144] sm:$0xf]
  %v113 = vld [vmem:[%s1 + $0x148] sm:$0xf]
  %v114 = vld [vmem:[%s1 + $0x14c] sm:$0xf]
  %v115 = vld [vmem:[%s1 + $0x150] sm:$0xf]
  %v116 = vld [vmem:[%s1 + $0x154] sm:$0xf]
  %v117 = vld [vmem:[%s1 + $0x158] sm:$0xf]
  %v118 = vld [vmem:[%s1 + $0x15c] sm:$0xf]
  %v119 = vld [vmem:[%s1 + $0x160] sm:$0xf]
  %v120 = vld [vmem:[%s1 + $0x164] sm:$0xf]
  %v121 = vld [vmem:[%s1 + $0x168] sm:$0xf]
  %v122 = vld [vmem:[%s1 + $0x16c] sm:$0xf]
  %v123 = vld [vmem:[%s1 + $0x170] sm:$0xf]
  %v124 = vld [vmem:[%s1 + $0x174] sm:$0xf]
  %v125 = vld [vmem:[%s1 + $0x178] sm:$0xf]
  %v126 = vld [vmem:[%s1 + $0x17c] sm:$0xf]
  %v127 = vld [vmem:[%s1 + $0x180] sm:$0xf]
  %v128 = vld [vmem:[%s1 + $0x184] sm:$0xf]
  %v129 = vld [vmem:[%s1 + $0x188] sm:$0xf]
  %v130 = vld [vmem:[%s1 + $0x18c] sm:$0xf]
  %v131 = vld [vmem:[%s2] sm:$0x1]
  %v133 = vlaneseq
  %v134 = vshrl.u32 %v133, 7
  %v135 = vsub.s32 0, %v134
  %v136 = vrot.slane %v131, %v135
  %v146 = vunpack.c.l.b16 %v23
  %v147 = vunpack.c.h.b16 %v23
  %v148 = vunpack.c.l.b16 %v24
  %v149 = vunpack.c.h.b16 %v24
  %v150 = vunpack.c.l.b16 %v25
  %v151 = vunpack.c.h.b16 %v25
  %v152 = vunpack.c.l.b16 %v26
  %v153 = vunpack.c.l.b16 %v27
  %v154 = vunpack.c.h.b16 %v27
  %v155 = vunpack.c.l.b16 %v28
  %v156 = vunpack.c.h.b16 %v28
  %v157 = vunpack.c.l.b16 %v29
  %v158 = vunpack.c.h.b16 %v29
  %v159 = vunpack.c.l.b16 %v30
  %v160 = vpack.c.b16 %v153, %v146
  %v161 = vpack.c.b16 %v154, %v147
  %v162 = vpack.c.b16 %v155, %v148
  %v163 = vpack.c.b16 %v156, %v149
  %v164 = vpack.c.b16 %v157, %v150
  %v165 = vpack.c.b16 %v158, %v151
  %v166 = vpack.c.b16 %v159, %v152
  %v273 = vunpack.c.l.b16 %v31
  %v274 = vunpack.c.l.b16 %v32
  %v275 = vunpack.c.l.b16 %v33
  %v276 = vunpack.c.l.b16 %v34
  %v277 = vunpack.c.l.b16 %v35
  %v278 = vunpack.c.l.b16 %v36
  %v279 = vunpack.c.l.b16 %v37
  %v280 = vunpack.c.l.b16 %v38
  %v281 = vunpack.c.l.b16 %v39
  %v282 = vunpack.c.l.b16 %v40
  %v283 = vunpack.c.l.b16 %v41
  %v284 = vunpack.c.l.b16 %v42
  %v285 = vunpack.c.l.b16 %v43
  %v286 = vunpack.c.l.b16 %v44
  %v287 = vunpack.c.l.b16 %v45
  %v288 = vunpack.c.l.b16 %v46
  %v289 = vunpack.c.l.b16 %v47
  %v290 = vunpack.c.l.b16 %v48
  %v291 = vunpack.c.l.b16 %v49
  %v292 = vunpack.c.l.b16 %v50
  %v293 = vunpack.c.l.b16 %v51
  %v294 = vunpack.c.l.b16 %v52
  %v295 = vunpack.c.l.b16 %v53
  %v296 = vunpack.c.l.b16 %v54
  %v297 = vunpack.c.l.b16 %v55
  %v298 = vunpack.c.l.b16 %v56
  %v299 = vunpack.c.l.b16 %v57
  %v300 = vunpack.c.l.b16 %v58
  %v301 = vunpack.c.l.b16 %v59
  %v302 = vunpack.c.l.b16 %v60
  %v303 = vunpack.c.l.b16 %v61
  %v304 = vunpack.c.l.b16 %v62
  %v305 = vunpack.c.l.b16 %v63
  %v306 = vunpack.c.l.b16 %v64
  %v307 = vunpack.c.l.b16 %v65
  %v308 = vunpack.c.l.b16 %v66
  %v309 = vunpack.c.l.b16 %v67
  %v310 = vunpack.c.l.b16 %v68
  %v311 = vunpack.c.l.b16 %v69
  %v312 = vunpack.c.l.b16 %v70
  %v313 = vunpack.c.l.b16 %v71
  %v314 = vunpack.c.l.b16 %v72
  %v315 = vunpack.c.l.b16 %v73
  %v316 = vunpack.c.l.b16 %v74
  %v317 = vunpack.c.l.b16 %v75
  %v318 = vunpack.c.l.b16 %v76
  %v319 = vunpack.c.l.b16 %v77
  %v320 = vunpack.c.l.b16 %v78
  %v321 = vunpack.c.l.b16 %v79
  %v322 = vunpack.c.l.b16 %v80
  %v323 = vunpack.c.l.b16 %v81
  %v324 = vunpack.c.l.b16 %v82
  %v325 = vunpack.c.l.b16 %v83
  %v326 = vunpack.c.l.b16 %v84
  %v327 = vunpack.c.l.b16 %v85
  %v328 = vunpack.c.l.b16 %v86
  %v329 = vunpack.c.l.b16 %v87
  %v330 = vunpack.c.l.b16 %v88
  %v331 = vunpack.c.l.b16 %v89
  %v332 = vunpack.c.l.b16 %v90
  %v333 = vunpack.c.l.b16 %v91
  %v334 = vunpack.c.l.b16 %v92
  %v335 = vunpack.c.l.b16 %v93
  %v336 = vunpack.c.l.b16 %v94
  %v337 = vunpack.c.l.b16 %v95
  %v338 = vunpack.c.l.b16 %v96
  %v339 = vunpack.c.l.b16 %v97
  %v340 = vunpack.c.l.b16 %v98
  %v341 = vunpack.c.l.b16 %v99
  %v342 = vunpack.c.l.b16 %v100
  %v343 = vunpack.c.l.b16 %v101
  %v344 = vunpack.c.l.b16 %v102
  %v345 = vunpack.c.l.b16 %v103
  %v346 = vunpack.c.l.b16 %v104
  %v347 = vunpack.c.l.b16 %v105
  %v348 = vunpack.c.l.b16 %v106
  %v349 = vunpack.c.l.b16 %v107
  %v350 = vunpack.c.l.b16 %v108
  %v351 = vunpack.c.l.b16 %v109
  %v352 = vunpack.c.l.b16 %v110
  %v353 = vunpack.c.l.b16 %v111
  %v354 = vunpack.c.l.b16 %v112
  %v355 = vunpack.c.l.b16 %v113
  %v356 = vunpack.c.l.b16 %v114
  %v357 = vunpack.c.l.b16 %v115
  %v358 = vunpack.c.l.b16 %v116
  %v359 = vunpack.c.l.b16 %v117
  %v360 = vunpack.c.l.b16 %v118
  %v361 = vunpack.c.l.b16 %v119
  %v362 = vunpack.c.l.b16 %v120
  %v363 = vunpack.c.l.b16 %v121
  %v364 = vunpack.c.l.b16 %v122
  %v365 = vunpack.c.l.b16 %v123
  %v366 = vunpack.c.l.b16 %v124
  %v367 = vunpack.c.l.b16 %v125
  %v368 = vunpack.c.l.b16 %v126
  %v369 = vunpack.c.l.b16 %v127
  %v370 = vunpack.c.l.b16 %v128
  %v371 = vunpack.c.l.b16 %v129
  %v372 = vunpack.c.l.b16 %v130
  %v373 = vpack.c.b16 %v274, %v273
  %v374 = vpack.c.b16 %v276, %v275
  %v375 = vpack.c.b16 %v278, %v277
  %v376 = vpack.c.b16 %v280, %v279
  %v377 = vpack.c.b16 %v282, %v281
  %v378 = vpack.c.b16 %v284, %v283
  %v379 = vpack.c.b16 %v286, %v285
  %v380 = vpack.c.b16 %v288, %v287
  %v381 = vpack.c.b16 %v290, %v289
  %v382 = vpack.c.b16 %v292, %v291
  %v383 = vpack.c.b16 %v294, %v293
  %v384 = vpack.c.b16 %v296, %v295
  %v385 = vpack.c.b16 %v298, %v297
  %v386 = vpack.c.b16 %v300, %v299
  %v387 = vpack.c.b16 %v302, %v301
  %v388 = vpack.c.b16 %v304, %v303
  %v389 = vpack.c.b16 %v306, %v305
  %v390 = vpack.c.b16 %v308, %v307
  %v391 = vpack.c.b16 %v310, %v309
  %v392 = vpack.c.b16 %v312, %v311
  %v393 = vpack.c.b16 %v314, %v313
  %v394 = vpack.c.b16 %v316, %v315
  %v395 = vpack.c.b16 %v318, %v317
  %v396 = vpack.c.b16 %v320, %v319
  %v397 = vpack.c.b16 %v322, %v321
  %v398 = vpack.c.b16 %v324, %v323
  %v399 = vpack.c.b16 %v326, %v325
  %v400 = vpack.c.b16 %v328, %v327
  %v401 = vpack.c.b16 %v330, %v329
  %v402 = vpack.c.b16 %v332, %v331
  %v403 = vpack.c.b16 %v334, %v333
  %v404 = vpack.c.b16 %v336, %v335
  %v405 = vpack.c.b16 %v338, %v337
  %v406 = vpack.c.b16 %v340, %v339
  %v407 = vpack.c.b16 %v342, %v341
  %v408 = vpack.c.b16 %v344, %v343
  %v409 = vpack.c.b16 %v346, %v345
  %v410 = vpack.c.b16 %v348, %v347
  %v411 = vpack.c.b16 %v350, %v349
  %v412 = vpack.c.b16 %v352, %v351
  %v413 = vpack.c.b16 %v354, %v353
  %v414 = vpack.c.b16 %v356, %v355
  %v415 = vpack.c.b16 %v358, %v357
  %v416 = vpack.c.b16 %v360, %v359
  %v417 = vpack.c.b16 %v362, %v361
  %v418 = vpack.c.b16 %v364, %v363
  %v419 = vpack.c.b16 %v366, %v365
  %v420 = vpack.c.b16 %v368, %v367
  %v421 = vpack.c.b16 %v370, %v369
  %v422 = vpack.c.b16 %v372, %v371
  %vm473 = vcmask 261120
  %v475 = vsel %vm473, %v166, 0
  %477 = vmatprep.subr.bf16.mxu0 0
  %478 = vmatpush1.bf16.msra.mxu0 %v380
  %479 = vmatprep.subr.bf16.mxu0 0
  %480 = vmatpush1.bf16.msra.mxu0 %v379
  %481 = vmatprep.subr.bf16.mxu0 0
  %482 = vmatpush1.bf16.msra.mxu0 %v378
  %483 = vmatprep.subr.bf16.mxu0 0
  %484 = vmatpush1.bf16.msra.mxu0 %v377
  %485 = vmatprep.subr.bf16.mxu0 0
  %486 = vmatpush1.bf16.msra.mxu0 %v376
  %487 = vmatprep.subr.bf16.mxu0 0
  %488 = vmatpush1.bf16.msra.mxu0 %v375
  %489 = vmatprep.subr.bf16.mxu0 0
  %490 = vmatpush1.bf16.msra.mxu0 %v374
  %491 = vmatprep.subr.bf16.mxu0 0
  %492 = vmatpush1.bf16.msra.mxu0 %v373
  %493 = vmatprep.subr.bf16.mxu0 0
  %494 = vmatpush2.bf16.msra.mxu0 %v388
  %495 = vmatprep.subr.bf16.mxu0 0
  %496 = vmatpush2.bf16.msra.mxu0 %v387
  %497 = vmatprep.subr.bf16.mxu0 0
  %498 = vmatpush2.bf16.msra.mxu0 %v386
  %499 = vmatprep.subr.bf16.mxu0 0
  %500 = vmatpush2.bf16.msra.mxu0 %v385
  %501 = vmatprep.subr.bf16.mxu0 0
  %502 = vmatpush2.bf16.msra.mxu0 %v384
  %503 = vmatprep.subr.bf16.mxu0 0
  %504 = vmatpush2.bf16.msra.mxu0 %v383
  %505 = vmatprep.subr.bf16.mxu0 0
  %506 = vmatpush2.bf16.msra.mxu0 %v382
  %507 = vmatprep.subr.bf16.mxu0 0
  %508 = vmatpush2.bf16.msra.mxu0 %v381
  %509 = vmatprep.mubr.bf16.mxu0 %v161
  %510 = vmatmul.mubr.bf16.gmra.mxu0 %v160
  %v511 = vpop.f32.mrf.mxu0
  %v512 = vadd.f32 %v136, %v511
  %v513 = vpop.f32.mrf.mxu0
  %v514 = vpop.f32.mrf.mxu0
  %v515 = vadd.f32 %v136, %v514
  %v516 = vpop.f32.mrf.mxu0
  %517 = vdwg.mxu0
  %518 = vmatprep.subr.bf16.mxu0 0
  %519 = vmatpush1.bf16.msra.mxu0 %v396
  %520 = vmatprep.subr.bf16.mxu0 0
  %521 = vmatpush1.bf16.msra.mxu0 %v395
  %522 = vmatprep.subr.bf16.mxu0 0
  %523 = vmatpush1.bf16.msra.mxu0 %v394
  %524 = vmatprep.subr.bf16.mxu0 0
  %525 = vmatpush1.bf16.msra.mxu0 %v393
  %526 = vmatprep.subr.bf16.mxu0 0
  %527 = vmatpush1.bf16.msra.mxu0 %v392
  %528 = vmatprep.subr.bf16.mxu0 0
  %529 = vmatpush1.bf16.msra.mxu0 %v391
  %530 = vmatprep.subr.bf16.mxu0 0
  %531 = vmatpush1.bf16.msra.mxu0 %v390
  %532 = vmatprep.subr.bf16.mxu0 0
  %533 = vmatpush1.bf16.msra.mxu0 %v389
  %534 = vmatprep.subr.bf16.mxu0 0
  %535 = vmatpush2.bf16.msra.mxu0 %v404
  %536 = vmatprep.subr.bf16.mxu0 0
  %537 = vmatpush2.bf16.msra.mxu0 %v403
  %538 = vmatprep.subr.bf16.mxu0 0
  %539 = vmatpush2.bf16.msra.mxu0 %v402
  %540 = vmatprep.subr.bf16.mxu0 0
  %541 = vmatpush2.bf16.msra.mxu0 %v401
  %542 = vmatprep.subr.bf16.mxu0 0
  %543 = vmatpush2.bf16.msra.mxu0 %v400
  %544 = vmatprep.subr.bf16.mxu0 0
  %545 = vmatpush2.bf16.msra.mxu0 %v399
  %546 = vmatprep.subr.bf16.mxu0 0
  %547 = vmatpush2.bf16.msra.mxu0 %v398
  %548 = vmatprep.subr.bf16.mxu0 0
  %549 = vmatpush2.bf16.msra.mxu0 %v397
  %550 = vmatprep.mubr.bf16.mxu0 %v163
  %551 = vmatmul.mubr.bf16.gmra.mxu0 %v162
  %v552 = vpop.f32.mrf.mxu0
  %v553 = vadd.f32 %v512, %v552
  %v554 = vpop.f32.mrf.mxu0
  %v555 = vpop.f32.mrf.mxu0
  %v556 = vadd.f32 %v515, %v555
  %v557 = vpop.f32.mrf.mxu0
  %558 = vdwg.mxu0
  %559 = vmatprep.subr.bf16.mxu0 0
  %560 = vmatpush1.bf16.msra.mxu0 %v412
  %561 = vmatprep.subr.bf16.mxu0 0
  %562 = vmatpush1.bf16.msra.mxu0 %v411
  %563 = vmatprep.subr.bf16.mxu0 0
  %564 = vmatpush1.bf16.msra.mxu0 %v410
  %565 = vmatprep.subr.bf16.mxu0 0
  %566 = vmatpush1.bf16.msra.mxu0 %v409
  %567 = vmatprep.subr.bf16.mxu0 0
  %568 = vmatpush1.bf16.msra.mxu0 %v408
  %569 = vmatprep.subr.bf16.mxu0 0
  %570 = vmatpush1.bf16.msra.mxu0 %v407
  %571 = vmatprep.subr.bf16.mxu0 0
  %572 = vmatpush1.bf16.msra.mxu0 %v406
  %573 = vmatprep.subr.bf16.mxu0 0
  %574 = vmatpush1.bf16.msra.mxu0 %v405
  %575 = vmatprep.subr.bf16.mxu0 0
  %576 = vmatpush2.bf16.msra.mxu0 %v420
  %577 = vmatprep.subr.bf16.mxu0 0
  %578 = vmatpush2.bf16.msra.mxu0 %v419
  %579 = vmatprep.subr.bf16.mxu0 0
  %580 = vmatpush2.bf16.msra.mxu0 %v418
  %581 = vmatprep.subr.bf16.mxu0 0
  %582 = vmatpush2.bf16.msra.mxu0 %v417
  %583 = vmatprep.subr.bf16.mxu0 0
  %584 = vmatpush2.bf16.msra.mxu0 %v416
  %585 = vmatprep.subr.bf16.mxu0 0
  %586 = vmatpush2.bf16.msra.mxu0 %v415
  %587 = vmatprep.subr.bf16.mxu0 0
  %588 = vmatpush2.bf16.msra.mxu0 %v414
  %589 = vmatprep.subr.bf16.mxu0 0
  %590 = vmatpush2.bf16.msra.mxu0 %v413
  %591 = vmatprep.mubr.bf16.mxu0 %v165
  %592 = vmatmul.mubr.bf16.gmra.mxu0 %v164
  %v593 = vpop.f32.mrf.mxu0
  %v594 = vadd.f32 %v553, %v593
  %v595 = vpop.f32.mrf.mxu0
  %v596 = vpop.f32.mrf.mxu0
  %v597 = vadd.f32 %v556, %v596
  %v598 = vpop.f32.mrf.mxu0
  %599 = vdwg.mxu0
  %600 = vmatprep.subr.bf16.mxu0 0
  %601 = vmatpush1.bf16.msra.mxu0 0
  %602 = vmatprep.subr.bf16.mxu0 0
  %603 = vmatpush1.bf16.msra.mxu0 0
  %604 = vmatprep.subr.bf16.mxu0 0
  %605 = vmatpush1.bf16.msra.mxu0 0
  %606 = vmatprep.subr.bf16.mxu0 0
  %607 = vmatpush1.bf16.msra.mxu0 0
  %608 = vmatprep.subr.bf16.mxu0 0
  %609 = vmatpush1.bf16.msra.mxu0 0
  %610 = vmatprep.subr.bf16.mxu0 0
  %611 = vmatpush1.bf16.msra.mxu0 0
  %612 = vmatprep.subr.bf16.mxu0 0
  %613 = vmatpush1.bf16.msra.mxu0 %v422
  %614 = vmatprep.subr.bf16.mxu0 0
  %615 = vmatpush1.bf16.msra.mxu0 %v421
  %616 = vmatprep.subr.bf16.mxu0 0
  %617 = vmatpush2.bf16.msra.mxu0 0
  %618 = vmatprep.subr.bf16.mxu0 0
  %619 = vmatpush2.bf16.msra.mxu0 0
  %620 = vmatprep.subr.bf16.mxu0 0
  %621 = vmatpush2.bf16.msra.mxu0 0
  %622 = vmatprep.subr.bf16.mxu0 0
  %623 = vmatpush2.bf16.msra.mxu0 0
  %624 = vmatprep.subr.bf16.mxu0 0
  %625 = vmatpush2.bf16.msra.mxu0 0
  %626 = vmatprep.subr.bf16.mxu0 0
  %627 = vmatpush2.bf16.msra.mxu0 0
  %628 = vmatprep.subr.bf16.mxu0 0
  %629 = vmatpush2.bf16.msra.mxu0 0
  %630 = vmatprep.subr.bf16.mxu0 0
  %631 = vmatpush2.bf16.msra.mxu0 0
  %632 = vmatprep.mubr.bf16.mxu0 0
  %633 = vmatmul.mubr.bf16.gmra.mxu0 %v475
  %v634 = vpop.f32.mrf.mxu0
  %v635 = vadd.f32 %v594, %v634
  %v636 = vpop.f32.mrf.mxu0
  %v637 = vpop.f32.mrf.mxu0
  %v638 = vadd.f32 %v597, %v637
  %v639 = vpop.f32.mrf.mxu0
  %640 = vdwg.mxu0
  %641 = vst [vmem:[%s5] sm:$0xff] %v635
  %642 = vst [vmem:[%s5 + $0x8] sm:$0xff] %v638
  %v643 = vpack.c.bf16 %v638, %v635
  %v644 = vld [vmem:[%s3] sm:$0xff]
  %v645 = vld [vmem:[%s3 + $0x8] sm:$0xff]
  %v646 = vld [vmem:[%s3 + $0x10] sm:$0xff]
  %v647 = vld [vmem:[%s3 + $0x18] sm:$0xf]
  %v648 = vld [vmem:[%s3 + $0x1c] sm:$0xff]
  %v649 = vld [vmem:[%s3 + $0x24] sm:$0xff]
  %v650 = vld [vmem:[%s3 + $0x2c] sm:$0xff]
  %v651 = vld [vmem:[%s3 + $0x34] sm:$0xf]
  %v652 = vld [vmem:[%s3 + $0x38] sm:$0xff]
  %v653 = vld [vmem:[%s3 + $0x40] sm:$0xff]
  %v654 = vld [vmem:[%s3 + $0x48] sm:$0xff]
  %v655 = vld [vmem:[%s3 + $0x50] sm:$0xf]
  %v656 = vld [vmem:[%s3 + $0x54] sm:$0xff]
  %v657 = vld [vmem:[%s3 + $0x5c] sm:$0xff]
  %v658 = vld [vmem:[%s3 + $0x64] sm:$0xff]
  %v659 = vld [vmem:[%s3 + $0x6c] sm:$0xf]
  %v660 = vld [vmem:[%s3 + $0x70] sm:$0xff]
  %v661 = vld [vmem:[%s3 + $0x78] sm:$0xff]
  %v662 = vld [vmem:[%s3 + $0x80] sm:$0xff]
  %v663 = vld [vmem:[%s3 + $0x88] sm:$0xf]
  %v664 = vld [vmem:[%s3 + $0x8c] sm:$0xff]
  %v665 = vld [vmem:[%s3 + $0x94] sm:$0xff]
  %v666 = vld [vmem:[%s3 + $0x9c] sm:$0xff]
  %v667 = vld [vmem:[%s3 + $0xa4] sm:$0xf]
  %v668 = vld [vmem:[%s3 + $0xa8] sm:$0xff]
  %v669 = vld [vmem:[%s3 + $0xb0] sm:$0xff]
  %v670 = vld [vmem:[%s3 + $0xb8] sm:$0xff]
  %v671 = vld [vmem:[%s3 + $0xc0] sm:$0xf]
  %v672 = vld [vmem:[%s3 + $0xc4] sm:$0xff]
  %v673 = vld [vmem:[%s3 + $0xcc] sm:$0xff]
  %v674 = vld [vmem:[%s3 + $0xd4] sm:$0xff]
  %v675 = vld [vmem:[%s3 + $0xdc] sm:$0xf]
  %v676 = vld [vmem:[%s3 + $0xe0] sm:$0xff]
  %v677 = vld [vmem:[%s3 + $0xe8] sm:$0xff]
  %v678 = vld [vmem:[%s3 + $0xf0] sm:$0xff]
  %v679 = vld [vmem:[%s3 + $0xf8] sm:$0xf]
  %v680 = vld [vmem:[%s3 + $0xfc] sm:$0xff]
  %v681 = vld [vmem:[%s3 + $0x104] sm:$0xff]
  %v682 = vld [vmem:[%s3 + $0x10c] sm:$0xff]
  %v683 = vld [vmem:[%s3 + $0x114] sm:$0xf]
  %v684 = vld [vmem:[%s3 + $0x118] sm:$0xff]
  %v685 = vld [vmem:[%s3 + $0x120] sm:$0xff]
  %v686 = vld [vmem:[%s3 + $0x128] sm:$0xff]
  %v687 = vld [vmem:[%s3 + $0x130] sm:$0xf]
  %v688 = vld [vmem:[%s3 + $0x134] sm:$0xff]
  %v689 = vld [vmem:[%s3 + $0x13c] sm:$0xff]
  %v690 = vld [vmem:[%s3 + $0x144] sm:$0xff]
  %v691 = vld [vmem:[%s3 + $0x14c] sm:$0xf]
  %v692 = vld [vmem:[%s3 + $0x150] sm:$0xff]
  %v693 = vld [vmem:[%s3 + $0x158] sm:$0xff]
  %v694 = vld [vmem:[%s3 + $0x160] sm:$0xff]
  %v695 = vld [vmem:[%s3 + $0x168] sm:$0xf]
  %v696 = vld [vmem:[%s3 + $0x16c] sm:$0xff]
  %v697 = vld [vmem:[%s3 + $0x174] sm:$0xff]
  %v698 = vld [vmem:[%s3 + $0x17c] sm:$0xff]
  %v699 = vld [vmem:[%s3 + $0x184] sm:$0xf]
  %v700 = vld [vmem:[%s3 + $0x188] sm:$0xff]
  %v701 = vld [vmem:[%s3 + $0x190] sm:$0xff]
  %v702 = vld [vmem:[%s3 + $0x198] sm:$0xff]
  %v703 = vld [vmem:[%s3 + $0x1a0] sm:$0xf]
  %v704 = vld [vmem:[%s3 + $0x1a4] sm:$0xff]
  %v705 = vld [vmem:[%s3 + $0x1ac] sm:$0xff]
  %v706 = vld [vmem:[%s3 + $0x1b4] sm:$0xff]
  %v707 = vld [vmem:[%s3 + $0x1bc] sm:$0xf]
  %v708 = vld [vmem:[%s4] sm:$0xff]
  %v710 = vlaneseq
  %v711 = vshrl.u32 %v710, 7
  %v712 = vsub.s32 0, %v711
  %v713 = vrot.slane %v708, %v712
  %v714 = vlaneseq
  %v715 = vshrl.u32 %v714, 7
  %v716 = vsub.s32 1, %v715
  %v717 = vrot.slane %v708, %v716
  %v718 = vlaneseq
  %v719 = vshrl.u32 %v718, 7
  %v720 = vsub.s32 2, %v719
  %v721 = vrot.slane %v708, %v720
  %v722 = vlaneseq
  %v723 = vshrl.u32 %v722, 7
  %v724 = vsub.s32 3, %v723
  %v725 = vrot.slane %v708, %v724
  %v726 = vlaneseq
  %v727 = vshrl.u32 %v726, 7
  %v728 = vsub.s32 4, %v727
  %v729 = vrot.slane %v708, %v728
  %v730 = vlaneseq
  %v731 = vshrl.u32 %v730, 7
  %v732 = vsub.s32 5, %v731
  %v733 = vrot.slane %v708, %v732
  %v734 = vlaneseq
  %v735 = vshrl.u32 %v734, 7
  %v736 = vsub.s32 6, %v735
  %v737 = vrot.slane %v708, %v736
  %v809 = vunpack.c.l.b16 %v644
  %v810 = vunpack.c.h.b16 %v644
  %v811 = vunpack.c.l.b16 %v645
  %v812 = vunpack.c.h.b16 %v645
  %v813 = vunpack.c.l.b16 %v646
  %v814 = vunpack.c.h.b16 %v646
  %v815 = vunpack.c.l.b16 %v647
  %v816 = vunpack.c.l.b16 %v648
  %v817 = vunpack.c.h.b16 %v648
  %v818 = vunpack.c.l.b16 %v649
  %v819 = vunpack.c.h.b16 %v649
  %v820 = vunpack.c.l.b16 %v650
  %v821 = vunpack.c.h.b16 %v650
  %v822 = vunpack.c.l.b16 %v651
  %v823 = vunpack.c.l.b16 %v652
  %v824 = vunpack.c.h.b16 %v652
  %v825 = vunpack.c.l.b16 %v653
  %v826 = vunpack.c.h.b16 %v653
  %v827 = vunpack.c.l.b16 %v654
  %v828 = vunpack.c.h.b16 %v654
  %v829 = vunpack.c.l.b16 %v655
  %v830 = vunpack.c.l.b16 %v656
  %v831 = vunpack.c.h.b16 %v656
  %v832 = vunpack.c.l.b16 %v657
  %v833 = vunpack.c.h.b16 %v657
  %v834 = vunpack.c.l.b16 %v658
  %v835 = vunpack.c.h.b16 %v658
  %v836 = vunpack.c.l.b16 %v659
  %v837 = vunpack.c.l.b16 %v660
  %v838 = vunpack.c.h.b16 %v660
  %v839 = vunpack.c.l.b16 %v661
  %v840 = vunpack.c.h.b16 %v661
  %v841 = vunpack.c.l.b16 %v662
  %v842 = vunpack.c.h.b16 %v662
  %v843 = vunpack.c.l.b16 %v663
  %v844 = vunpack.c.l.b16 %v664
  %v845 = vunpack.c.h.b16 %v664
  %v846 = vunpack.c.l.b16 %v665
  %v847 = vunpack.c.h.b16 %v665
  %v848 = vunpack.c.l.b16 %v666
  %v849 = vunpack.c.h.b16 %v666
  %v850 = vunpack.c.l.b16 %v667
  %v851 = vunpack.c.l.b16 %v668
  %v852 = vunpack.c.h.b16 %v668
  %v853 = vunpack.c.l.b16 %v669
  %v854 = vunpack.c.h.b16 %v669
  %v855 = vunpack.c.l.b16 %v670
  %v856 = vunpack.c.h.b16 %v670
  %v857 = vunpack.c.l.b16 %v671
  %v858 = vunpack.c.l.b16 %v672
  %v859 = vunpack.c.h.b16 %v672
  %v860 = vunpack.c.l.b16 %v673
  %v861 = vunpack.c.h.b16 %v673
  %v862 = vunpack.c.l.b16 %v674
  %v863 = vunpack.c.h.b16 %v674
  %v864 = vunpack.c.l.b16 %v675
  %v865 = vunpack.c.l.b16 %v676
  %v866 = vunpack.c.h.b16 %v676
  %v867 = vunpack.c.l.b16 %v677
  %v868 = vunpack.c.h.b16 %v677
  %v869 = vunpack.c.l.b16 %v678
  %v870 = vunpack.c.h.b16 %v678
  %v871 = vunpack.c.l.b16 %v679
  %v872 = vunpack.c.l.b16 %v680
  %v873 = vunpack.c.h.b16 %v680
  %v874 = vunpack.c.l.b16 %v681
  %v875 = vunpack.c.h.b16 %v681
  %v876 = vunpack.c.l.b16 %v682
  %v877 = vunpack.c.h.b16 %v682
  %v878 = vunpack.c.l.b16 %v683
  %v879 = vunpack.c.l.b16 %v684
  %v880 = vunpack.c.h.b16 %v684
  %v881 = vunpack.c.l.b16 %v685
  %v882 = vunpack.c.h.b16 %v685
  %v883 = vunpack.c.l.b16 %v686
  %v884 = vunpack.c.h.b16 %v686
  %v885 = vunpack.c.l.b16 %v687
  %v886 = vunpack.c.l.b16 %v688
  %v887 = vunpack.c.h.b16 %v688
  %v888 = vunpack.c.l.b16 %v689
  %v889 = vunpack.c.h.b16 %v689
  %v890 = vunpack.c.l.b16 %v690
  %v891 = vunpack.c.h.b16 %v690
  %v892 = vunpack.c.l.b16 %v691
  %v893 = vunpack.c.l.b16 %v692
  %v894 = vunpack.c.h.b16 %v692
  %v895 = vunpack.c.l.b16 %v693
  %v896 = vunpack.c.h.b16 %v693
  %v897 = vunpack.c.l.b16 %v694
  %v898 = vunpack.c.h.b16 %v694
  %v899 = vunpack.c.l.b16 %v695
  %v900 = vunpack.c.l.b16 %v696
  %v901 = vunpack.c.h.b16 %v696
  %v902 = vunpack.c.l.b16 %v697
  %v903 = vunpack.c.h.b16 %v697
  %v904 = vunpack.c.l.b16 %v698
  %v905 = vunpack.c.h.b16 %v698
  %v906 = vunpack.c.l.b16 %v699
  %v907 = vunpack.c.l.b16 %v700
  %v908 = vunpack.c.h.b16 %v700
  %v909 = vunpack.c.l.b16 %v701
  %v910 = vunpack.c.h.b16 %v701
  %v911 = vunpack.c.l.b16 %v702
  %v912 = vunpack.c.h.b16 %v702
  %v913 = vunpack.c.l.b16 %v703
  %v914 = vunpack.c.l.b16 %v704
  %v915 = vunpack.c.h.b16 %v704
  %v916 = vunpack.c.l.b16 %v705
  %v917 = vunpack.c.h.b16 %v705
  %v918 = vunpack.c.l.b16 %v706
  %v919 = vunpack.c.h.b16 %v706
  %v920 = vunpack.c.l.b16 %v707
  %v921 = vpack.c.b16 %v816, %v809
  %v922 = vpack.c.b16 %v817, %v810
  %v923 = vpack.c.b16 %v818, %v811
  %v924 = vpack.c.b16 %v819, %v812
  %v925 = vpack.c.b16 %v820, %v813
  %v926 = vpack.c.b16 %v821, %v814
  %v927 = vpack.c.b16 %v822, %v815
  %v928 = vpack.c.b16 %v830, %v823
  %v929 = vpack.c.b16 %v831, %v824
  %v930 = vpack.c.b16 %v832, %v825
  %v931 = vpack.c.b16 %v833, %v826
  %v932 = vpack.c.b16 %v834, %v827
  %v933 = vpack.c.b16 %v835, %v828
  %v934 = vpack.c.b16 %v836, %v829
  %v935 = vpack.c.b16 %v844, %v837
  %v936 = vpack.c.b16 %v845, %v838
  %v937 = vpack.c.b16 %v846, %v839
  %v938 = vpack.c.b16 %v847, %v840
  %v939 = vpack.c.b16 %v848, %v841
  %v940 = vpack.c.b16 %v849, %v842
  %v941 = vpack.c.b16 %v850, %v843
  %v942 = vpack.c.b16 %v858, %v851
  %v943 = vpack.c.b16 %v859, %v852
  %v944 = vpack.c.b16 %v860, %v853
  %v945 = vpack.c.b16 %v861, %v854
  %v946 = vpack.c.b16 %v862, %v855
  %v947 = vpack.c.b16 %v863, %v856
  %v948 = vpack.c.b16 %v864, %v857
  %v949 = vpack.c.b16 %v872, %v865
  %v950 = vpack.c.b16 %v873, %v866
  %v951 = vpack.c.b16 %v874, %v867
  %v952 = vpack.c.b16 %v875, %v868
  %v953 = vpack.c.b16 %v876, %v869
  %v954 = vpack.c.b16 %v877, %v870
  %v955 = vpack.c.b16 %v878, %v871
  %v956 = vpack.c.b16 %v886, %v879
  %v957 = vpack.c.b16 %v887, %v880
  %v958 = vpack.c.b16 %v888, %v881
  %v959 = vpack.c.b16 %v889, %v882
  %v960 = vpack.c.b16 %v890, %v883
  %v961 = vpack.c.b16 %v891, %v884
  %v962 = vpack.c.b16 %v892, %v885
  %v963 = vpack.c.b16 %v900, %v893
  %v964 = vpack.c.b16 %v901, %v894
  %v965 = vpack.c.b16 %v902, %v895
  %v966 = vpack.c.b16 %v903, %v896
  %v967 = vpack.c.b16 %v904, %v897
  %v968 = vpack.c.b16 %v905, %v898
  %v969 = vpack.c.b16 %v906, %v899
  %v970 = vpack.c.b16 %v914, %v907
  %v971 = vpack.c.b16 %v915, %v908
  %v972 = vpack.c.b16 %v916, %v909
  %v973 = vpack.c.b16 %v917, %v910
  %v974 = vpack.c.b16 %v918, %v911
  %v975 = vpack.c.b16 %v919, %v912
  %v976 = vpack.c.b16 %v920, %v913
  %1033 = vmatprep.subr.bf16.mxu0 %v971
  %1034 = vmatpush1.bf16.msra.mxu0 %v970
  %1035 = vmatprep.subr.bf16.mxu0 %v964
  %1036 = vmatpush1.bf16.msra.mxu0 %v963
  %1037 = vmatprep.subr.bf16.mxu0 %v957
  %1038 = vmatpush1.bf16.msra.mxu0 %v956
  %1039 = vmatprep.subr.bf16.mxu0 %v950
  %1040 = vmatpush1.bf16.msra.mxu0 %v949
  %1041 = vmatprep.subr.bf16.mxu0 %v943
  %1042 = vmatpush1.bf16.msra.mxu0 %v942
  %1043 = vmatprep.subr.bf16.mxu0 %v936
  %1044 = vmatpush1.bf16.msra.mxu0 %v935
  %1045 = vmatprep.subr.bf16.mxu0 %v929
  %1046 = vmatpush1.bf16.msra.mxu0 %v928
  %1047 = vmatprep.subr.bf16.mxu0 %v922
  %1048 = vmatpush1.bf16.msra.mxu0 %v921
  %1049 = vmatprep.subr.bf16.mxu0 0
  %1050 = vmatpush2.bf16.msra.mxu0 0
  %1051 = vmatprep.subr.bf16.mxu0 0
  %1052 = vmatpush2.bf16.msra.mxu0 0
  %1053 = vmatprep.subr.bf16.mxu0 0
  %1054 = vmatpush2.bf16.msra.mxu0 0
  %1055 = vmatprep.subr.bf16.mxu0 0
  %1056 = vmatpush2.bf16.msra.mxu0 0
  %1057 = vmatprep.subr.bf16.mxu0 0
  %1058 = vmatpush2.bf16.msra.mxu0 0
  %1059 = vmatprep.subr.bf16.mxu0 0
  %1060 = vmatpush2.bf16.msra.mxu0 0
  %1061 = vmatprep.subr.bf16.mxu0 0
  %1062 = vmatpush2.bf16.msra.mxu0 0
  %1063 = vmatprep.subr.bf16.mxu0 0
  %1064 = vmatpush2.bf16.msra.mxu0 0
  %1065 = vmatprep.mubr.bf16.mxu0 0
  %1066 = vmatmul.mubr.bf16.gmra.mxu0 %v643
  %v1067 = vpop.f32.mrf.mxu0
  %v1068 = vadd.f32 %v713, %v1067
  %v1069 = vpop.f32.mrf.mxu0
  %v1070 = vadd.f32 %v717, %v1069
  %v1071 = vpop.f32.mrf.mxu0
  %v1072 = vadd.f32 %v713, %v1071
  %v1073 = vpop.f32.mrf.mxu0
  %v1074 = vadd.f32 %v717, %v1073
  %1075 = vdwg.mxu0
  %1076 = vmatprep.subr.bf16.mxu0 %v973
  %1077 = vmatpush1.bf16.msra.mxu0 %v972
  %1078 = vmatprep.subr.bf16.mxu0 %v966
  %1079 = vmatpush1.bf16.msra.mxu0 %v965
  %1080 = vmatprep.subr.bf16.mxu0 %v959
  %1081 = vmatpush1.bf16.msra.mxu0 %v958
  %1082 = vmatprep.subr.bf16.mxu0 %v952
  %1083 = vmatpush1.bf16.msra.mxu0 %v951
  %1084 = vmatprep.subr.bf16.mxu0 %v945
  %1085 = vmatpush1.bf16.msra.mxu0 %v944
  %1086 = vmatprep.subr.bf16.mxu0 %v938
  %1087 = vmatpush1.bf16.msra.mxu0 %v937
  %1088 = vmatprep.subr.bf16.mxu0 %v931
  %1089 = vmatpush1.bf16.msra.mxu0 %v930
  %1090 = vmatprep.subr.bf16.mxu0 %v924
  %1091 = vmatpush1.bf16.msra.mxu0 %v923
  %1092 = vmatprep.subr.bf16.mxu0 0
  %1093 = vmatpush2.bf16.msra.mxu0 0
  %1094 = vmatprep.subr.bf16.mxu0 0
  %1095 = vmatpush2.bf16.msra.mxu0 0
  %1096 = vmatprep.subr.bf16.mxu0 0
  %1097 = vmatpush2.bf16.msra.mxu0 0
  %1098 = vmatprep.subr.bf16.mxu0 0
  %1099 = vmatpush2.bf16.msra.mxu0 0
  %1100 = vmatprep.subr.bf16.mxu0 0
  %1101 = vmatpush2.bf16.msra.mxu0 0
  %1102 = vmatprep.subr.bf16.mxu0 0
  %1103 = vmatpush2.bf16.msra.mxu0 0
  %1104 = vmatprep.subr.bf16.mxu0 0
  %1105 = vmatpush2.bf16.msra.mxu0 0
  %1106 = vmatprep.subr.bf16.mxu0 0
  %1107 = vmatpush2.bf16.msra.mxu0 0
  %1108 = vmatprep.mubr.bf16.mxu0 0
  %1109 = vmatmul.mubr.bf16.gmra.mxu0 %v643
  %v1110 = vpop.f32.mrf.mxu0
  %v1111 = vadd.f32 %v721, %v1110
  %v1112 = vpop.f32.mrf.mxu0
  %v1113 = vadd.f32 %v725, %v1112
  %v1114 = vpop.f32.mrf.mxu0
  %v1115 = vadd.f32 %v721, %v1114
  %v1116 = vpop.f32.mrf.mxu0
  %v1117 = vadd.f32 %v725, %v1116
  %1118 = vdwg.mxu0
  %1119 = vmatprep.subr.bf16.mxu0 %v975
  %1120 = vmatpush1.bf16.msra.mxu0 %v974
  %1121 = vmatprep.subr.bf16.mxu0 %v968
  %1122 = vmatpush1.bf16.msra.mxu0 %v967
  %1123 = vmatprep.subr.bf16.mxu0 %v961
  %1124 = vmatpush1.bf16.msra.mxu0 %v960
  %1125 = vmatprep.subr.bf16.mxu0 %v954
  %1126 = vmatpush1.bf16.msra.mxu0 %v953
  %1127 = vmatprep.subr.bf16.mxu0 %v947
  %1128 = vmatpush1.bf16.msra.mxu0 %v946
  %1129 = vmatprep.subr.bf16.mxu0 %v940
  %1130 = vmatpush1.bf16.msra.mxu0 %v939
  %1131 = vmatprep.subr.bf16.mxu0 %v933
  %1132 = vmatpush1.bf16.msra.mxu0 %v932
  %1133 = vmatprep.subr.bf16.mxu0 %v926
  %1134 = vmatpush1.bf16.msra.mxu0 %v925
  %1135 = vmatprep.subr.bf16.mxu0 0
  %1136 = vmatpush2.bf16.msra.mxu0 0
  %1137 = vmatprep.subr.bf16.mxu0 0
  %1138 = vmatpush2.bf16.msra.mxu0 0
  %1139 = vmatprep.subr.bf16.mxu0 0
  %1140 = vmatpush2.bf16.msra.mxu0 0
  %1141 = vmatprep.subr.bf16.mxu0 0
  %1142 = vmatpush2.bf16.msra.mxu0 0
  %1143 = vmatprep.subr.bf16.mxu0 0
  %1144 = vmatpush2.bf16.msra.mxu0 0
  %1145 = vmatprep.subr.bf16.mxu0 0
  %1146 = vmatpush2.bf16.msra.mxu0 0
  %1147 = vmatprep.subr.bf16.mxu0 0
  %1148 = vmatpush2.bf16.msra.mxu0 0
  %1149 = vmatprep.subr.bf16.mxu0 0
  %1150 = vmatpush2.bf16.msra.mxu0 0
  %1151 = vmatprep.mubr.bf16.mxu0 0
  %1152 = vmatmul.mubr.bf16.gmra.mxu0 %v643
  %v1153 = vpop.f32.mrf.mxu0
  %v1154 = vadd.f32 %v729, %v1153
  %v1155 = vpop.f32.mrf.mxu0
  %v1156 = vadd.f32 %v733, %v1155
  %v1157 = vpop.f32.mrf.mxu0
  %v1158 = vadd.f32 %v729, %v1157
  %v1159 = vpop.f32.mrf.mxu0
  %v1160 = vadd.f32 %v733, %v1159
  %1161 = vdwg.mxu0
  %1162 = vmatprep.subr.bf16.mxu0 0
  %1163 = vmatpush1.bf16.msra.mxu0 %v976
  %1164 = vmatprep.subr.bf16.mxu0 0
  %1165 = vmatpush1.bf16.msra.mxu0 %v969
  %1166 = vmatprep.subr.bf16.mxu0 0
  %1167 = vmatpush1.bf16.msra.mxu0 %v962
  %1168 = vmatprep.subr.bf16.mxu0 0
  %1169 = vmatpush1.bf16.msra.mxu0 %v955
  %1170 = vmatprep.subr.bf16.mxu0 0
  %1171 = vmatpush1.bf16.msra.mxu0 %v948
  %1172 = vmatprep.subr.bf16.mxu0 0
  %1173 = vmatpush1.bf16.msra.mxu0 %v941
  %1174 = vmatprep.subr.bf16.mxu0 0
  %1175 = vmatpush1.bf16.msra.mxu0 %v934
  %1176 = vmatprep.subr.bf16.mxu0 0
  %1177 = vmatpush1.bf16.msra.mxu0 %v927
  %1178 = vmatprep.subr.bf16.mxu0 0
  %1179 = vmatpush2.bf16.msra.mxu0 0
  %1180 = vmatprep.subr.bf16.mxu0 0
  %1181 = vmatpush2.bf16.msra.mxu0 0
  %1182 = vmatprep.subr.bf16.mxu0 0
  %1183 = vmatpush2.bf16.msra.mxu0 0
  %1184 = vmatprep.subr.bf16.mxu0 0
  %1185 = vmatpush2.bf16.msra.mxu0 0
  %1186 = vmatprep.subr.bf16.mxu0 0
  %1187 = vmatpush2.bf16.msra.mxu0 0
  %1188 = vmatprep.subr.bf16.mxu0 0
  %1189 = vmatpush2.bf16.msra.mxu0 0
  %1190 = vmatprep.subr.bf16.mxu0 0
  %1191 = vmatpush2.bf16.msra.mxu0 0
  %1192 = vmatprep.subr.bf16.mxu0 0
  %1193 = vmatpush2.bf16.msra.mxu0 0
  %1194 = vmatprep.mubr.bf16.mxu0 0
  %1195 = vmatmul.mubr.bf16.gmra.mxu0 %v643
  %v1196 = vpop.f32.mrf.mxu0
  %v1197 = vadd.f32 %v737, %v1196
  %v1198 = vpop.f32.mrf.mxu0
  %v1199 = vpop.f32.mrf.mxu0
  %v1200 = vadd.f32 %v737, %v1199
  %v1201 = vpop.f32.mrf.mxu0
  %1202 = vdwg.mxu0
  %v1203 = vtanh.pop %v1068
  %v1204 = vtanh.pop %v1070
  %v1205 = vtanh.pop %v1111
  %v1206 = vtanh.pop %v1113
  %v1207 = vtanh.pop %v1154
  %v1208 = vtanh.pop %v1156
  %v1209 = vtanh.pop %v1197
  %v1210 = vtanh.pop %v1072
  %v1211 = vtanh.pop %v1074
  %v1212 = vtanh.pop %v1115
  %v1213 = vtanh.pop %v1117
  %v1214 = vtanh.pop %v1158
  %v1215 = vtanh.pop %v1160
  %v1216 = vtanh.pop %v1200
  %v1217 = vpack.c.bf16 %v1210, %v1203
  %v1218 = vpack.c.bf16 %v1211, %v1204
  %v1219 = vpack.c.bf16 %v1212, %v1205
  %v1220 = vpack.c.bf16 %v1213, %v1206
  %v1221 = vpack.c.bf16 %v1214, %v1207
  %v1222 = vpack.c.bf16 %v1215, %v1208
  %v1223 = vpack.c.bf16 %v1216, %v1209
  %v1231 = vunpack.c.l.b16 %v1217
  %v1232 = vunpack.c.l.b16 %v1218
  %v1233 = vunpack.c.l.b16 %v1219
  %v1234 = vunpack.c.l.b16 %v1220
  %v1235 = vunpack.c.l.b16 %v1221
  %v1236 = vunpack.c.l.b16 %v1222
  %v1237 = vunpack.c.l.b16 %v1223
  %v1238 = vunpack.c.h.b16 %v1217
  %v1239 = vunpack.c.h.b16 %v1218
  %v1240 = vunpack.c.h.b16 %v1219
  %v1241 = vunpack.c.h.b16 %v1220
  %v1242 = vunpack.c.h.b16 %v1221
  %v1243 = vunpack.c.h.b16 %v1222
  %v1244 = vunpack.c.h.b16 %v1223
  %v1245 = vpack.c.b16 %v1232, %v1231
  %v1246 = vpack.c.b16 %v1234, %v1233
  %v1247 = vpack.c.b16 %v1236, %v1235
  %v1248 = vpack.c.b16 %v1237, %v1237
  %v1249 = vpack.c.b16 %v1239, %v1238
  %v1250 = vpack.c.b16 %v1241, %v1240
  %v1251 = vpack.c.b16 %v1243, %v1242
  %v1252 = vpack.c.b16 %v1244, %v1244
  %1261 = vst [vmem:[%s6] sm:$0xff] %v1245
  %1262 = vst [vmem:[%s6 + $0x8] sm:$0xff] %v1246
  %1263 = vst [vmem:[%s6 + $0x10] sm:$0xff] %v1247
  %1264 = vst [vmem:[%s6 + $0x18] sm:$0xf] %v1248
  %1265 = vst [vmem:[%s6 + $0x1c] sm:$0xff] %v1249
  %1266 = vst [vmem:[%s6 + $0x24] sm:$0xff] %v1250
  %1267 = vst [vmem:[%s6 + $0x2c] sm:$0xff] %v1251
  %1268 = vst [vmem:[%s6 + $0x34] sm:$0xf] %v1252
  // Predicated region
  $region22: #{net_forward.7} parent=0 // pred_check
    _
  $region23: #{net_forward.7} parent=0 // pred_check_branch
    %1270 = sbr.rel (0) target = $region25
  $region24: #{net_forward.7} parent=0 // pred_region
    _
  $region25: #{net_forward.7} parent=0 // pred_fallthru
    _
  // Predicated region
  $region26: #{net_forward.7} parent=0 // pred_check
    _
  $region27: #{net_forward.7} parent=0 // pred_check_branch
    %1272 = sbr.rel (0) target = $region29
  $region28: #{net_forward.7} parent=0 // pred_region
    _
  $region29: #{net_forward.7} parent=0 // pred_fallthru
    _
  // Predicated region
  $region30: #{net_forward.7} parent=0 // pred_check
    _
  $region31: #{net_forward.7} parent=0 // pred_check_branch
    %1274 = sbr.rel (0) target = $region33
  $region32: #{net_forward.7} parent=0 // pred_region
    _
  $region33: #{net_forward.7} parent=0 // pred_fallthru
    _
  // Predicated region
  $region34: #{net_forward.7} parent=0 // pred_check
    _
  $region35: #{net_forward.7} parent=0 // pred_check_branch
    %1276 = sbr.rel (0) target = $region37
  $region36: #{net_forward.7} parent=0 // pred_region
    _
  $region37: #{net_forward.7} parent=0 // pred_fallthru
    _

// kernel: net_forward.8
$region0: #{net_forward.8}
  #allocation0 [shape = 'u32[]', space=smem, size = 0x4, offset = 0x4, fixed_abs, tag = 'smem constant byte address 0x4 - core index']
  #allocation1 [shape = 'u32[144,128]{1,0:T(1,128)}', space=vmem, size = 0x12000, scoped, tag = 'internal scratch']
  %s0 = inlined_call_operand.vmem [shape: bf16[176,100], index: 0, kind: input, shape index: {}]
  %s1 = inlined_call_operand.vmem [shape: bf16[100,384], index: 1, kind: input, shape index: {}]
  %s2 = inlined_call_operand.vmem [shape: bf16[176,384], index: 2, kind: output, shape index: {}]
  %s3 = sld [smem:[#allocation0]]
  $region18: #{net_forward.8} parent=0
    _
  %s5 = ssub.s32 1, %s3
  %s6 = scalar_select 0, %s5, %s3
  // Predicated region
  $region2: #{net_forward.8} parent=0 // pred_check
    _
  $region3: #{net_forward.8} parent=0 // pred_check_branch
    %8 = sbr.rel (0) target = $region5
  $region4: #{net_forward.8} parent=0 // pred_region
    _
  $region5: #{net_forward.8} parent=0 // pred_fallthru
    _
  // Predicated region
  $region6: #{net_forward.8} parent=0 // pred_check
    _
  $region7: #{net_forward.8} parent=0 // pred_check_branch
    %10 = sbr.rel (0) target = $region9
  $region8: #{net_forward.8} parent=0 // pred_region
    _
  $region9: #{net_forward.8} parent=0 // pred_fallthru
    _
  %v12 = vld [vmem:[%s0] sm:$0xf]
  %v13 = vld [vmem:[%s0 + $0x4] sm:$0xf]
  %v14 = vld [vmem:[%s0 + $0x8] sm:$0xf]
  %v15 = vld [vmem:[%s0 + $0xc] sm:$0xf]
  %v16 = vld [vmem:[%s0 + $0x10] sm:$0xf]
  %v17 = vld [vmem:[%s0 + $0x14] sm:$0xf]
  %v18 = vld [vmem:[%s0 + $0x18] sm:$0xf]
  %v19 = vld [vmem:[%s0 + $0x1c] sm:$0xf]
  %v20 = vld [vmem:[%s0 + $0x20] sm:$0xf]
  %v21 = vld [vmem:[%s0 + $0x24] sm:$0xf]
  %v22 = vld [vmem:[%s0 + $0x28] sm:$0xf]
  %v23 = vld [vmem:[%s0 + $0x2c] sm:$0xf]
  %v24 = vld [vmem:[%s0 + $0x30] sm:$0xf]
  %v25 = vld [vmem:[%s0 + $0x34] sm:$0xf]
  %v26 = vld [vmem:[%s0 + $0x38] sm:$0xf]
  %v27 = vld [vmem:[%s0 + $0x3c] sm:$0xf]
  %v28 = vld [vmem:[%s0 + $0x40] sm:$0xf]
  %v29 = vld [vmem:[%s0 + $0x44] sm:$0xf]
  %v30 = vld [vmem:[%s0 + $0x48] sm:$0xf]
  %v31 = vld [vmem:[%s0 + $0x4c] sm:$0xf]
  %v32 = vld [vmem:[%s0 + $0x50] sm:$0xf]
  %v33 = vld [vmem:[%s0 + $0x54] sm:$0xf]
  %v34 = vld [vmem:[%s1] sm:$0xff]
  %v35 = vld [vmem:[%s1 + $0x8] sm:$0xf]
  %v36 = vld [vmem:[%s1 + $0xc] sm:$0xff]
  %v37 = vld [vmem:[%s1 + $0x14] sm:$0xf]
  %v38 = vld [vmem:[%s1 + $0x18] sm:$0xff]
  %v39 = vld [vmem:[%s1 + $0x20] sm:$0xf]
  %v40 = vld [vmem:[%s1 + $0x24] sm:$0xff]
  %v41 = vld [vmem:[%s1 + $0x2c] sm:$0xf]
  %v42 = vld [vmem:[%s1 + $0x30] sm:$0xff]
  %v43 = vld [vmem:[%s1 + $0x38] sm:$0xf]
  %v44 = vld [vmem:[%s1 + $0x3c] sm:$0xff]
  %v45 = vld [vmem:[%s1 + $0x44] sm:$0xf]
  %v46 = vld [vmem:[%s1 + $0x48] sm:$0xff]
  %v47 = vld [vmem:[%s1 + $0x50] sm:$0xf]
  %v48 = vld [vmem:[%s1 + $0x54] sm:$0xff]
  %v49 = vld [vmem:[%s1 + $0x5c] sm:$0xf]
  %v50 = vld [vmem:[%s1 + $0x60] sm:$0xff]
  %v51 = vld [vmem:[%s1 + $0x68] sm:$0xf]
  %v52 = vld [vmem:[%s1 + $0x6c] sm:$0xff]
  %v53 = vld [vmem:[%s1 + $0x74] sm:$0xf]
  %v54 = vld [vmem:[%s1 + $0x78] sm:$0xff]
  %v55 = vld [vmem:[%s1 + $0x80] sm:$0xf]
  %v56 = vld [vmem:[%s1 + $0x84] sm:$0xff]
  %v57 = vld [vmem:[%s1 + $0x8c] sm:$0xf]
  %v58 = vld [vmem:[%s1 + $0x90] sm:$0x33]
  %v59 = vld [vmem:[%s1 + $0x98] sm:$0x3]
  %v82 = vunpack.c.l.b16 %v12
  %v83 = vunpack.c.l.b16 %v13
  %v84 = vunpack.c.l.b16 %v14
  %v85 = vunpack.c.l.b16 %v15
  %v86 = vunpack.c.l.b16 %v16
  %v87 = vunpack.c.l.b16 %v17
  %v88 = vunpack.c.l.b16 %v18
  %v89 = vunpack.c.l.b16 %v19
  %v90 = vunpack.c.l.b16 %v20
  %v91 = vunpack.c.l.b16 %v21
  %v92 = vunpack.c.l.b16 %v22
  %v93 = vunpack.c.l.b16 %v23
  %v94 = vunpack.c.l.b16 %v24
  %v95 = vunpack.c.l.b16 %v25
  %v96 = vunpack.c.l.b16 %v26
  %v97 = vunpack.c.l.b16 %v27
  %v98 = vunpack.c.l.b16 %v28
  %v99 = vunpack.c.l.b16 %v29
  %v100 = vunpack.c.l.b16 %v30
  %v101 = vunpack.c.l.b16 %v31
  %v102 = vunpack.c.l.b16 %v32
  %v103 = vunpack.c.l.b16 %v33
  %v104 = vpack.c.b16 %v83, %v82
  %v105 = vpack.c.b16 %v85, %v84
  %v106 = vpack.c.b16 %v87, %v86
  %v107 = vpack.c.b16 %v89, %v88
  %v108 = vpack.c.b16 %v91, %v90
  %v109 = vpack.c.b16 %v93, %v92
  %v110 = vpack.c.b16 %v95, %v94
  %v111 = vpack.c.b16 %v97, %v96
  %v112 = vpack.c.b16 %v99, %v98
  %v113 = vpack.c.b16 %v101, %v100
  %v114 = vpack.c.b16 %v103, %v102
  %v141 = vunpack.c.l.b16 %v34
  %v142 = vunpack.c.h.b16 %v34
  %v143 = vunpack.c.l.b16 %v35
  %v144 = vunpack.c.l.b16 %v36
  %v145 = vunpack.c.h.b16 %v36
  %v146 = vunpack.c.l.b16 %v37
  %v147 = vunpack.c.l.b16 %v38
  %v148 = vunpack.c.h.b16 %v38
  %v149 = vunpack.c.l.b16 %v39
  %v150 = vunpack.c.l.b16 %v40
  %v151 = vunpack.c.h.b16 %v40
  %v152 = vunpack.c.l.b16 %v41
  %v153 = vunpack.c.l.b16 %v42
  %v154 = vunpack.c.h.b16 %v42
  %v155 = vunpack.c.l.b16 %v43
  %v156 = vunpack.c.l.b16 %v44
  %v157 = vunpack.c.h.b16 %v44
  %v158 = vunpack.c.l.b16 %v45
  %v159 = vunpack.c.l.b16 %v46
  %v160 = vunpack.c.h.b16 %v46
  %v161 = vunpack.c.l.b16 %v47
  %v162 = vunpack.c.l.b16 %v48
  %v163 = vunpack.c.h.b16 %v48
  %v164 = vunpack.c.l.b16 %v49
  %v165 = vunpack.c.l.b16 %v50
  %v166 = vunpack.c.h.b16 %v50
  %v167 = vunpack.c.l.b16 %v51
  %v168 = vunpack.c.l.b16 %v52
  %v169 = vunpack.c.h.b16 %v52
  %v170 = vunpack.c.l.b16 %v53
  %v171 = vunpack.c.l.b16 %v54
  %v172 = vunpack.c.h.b16 %v54
  %v173 = vunpack.c.l.b16 %v55
  %v174 = vunpack.c.l.b16 %v56
  %v175 = vunpack.c.h.b16 %v56
  %v176 = vunpack.c.l.b16 %v57
  %v177 = vunpack.c.l.b16 %v58
  %v178 = vunpack.c.h.b16 %v58
  %v179 = vunpack.c.l.b16 %v59
  %v180 = vpack.c.b16 %v144, %v141
  %v181 = vpack.c.b16 %v145, %v142
  %v182 = vpack.c.b16 %v146, %v143
  %v183 = vpack.c.b16 %v150, %v147
  %v184 = vpack.c.b16 %v151, %v148
  %v185 = vpack.c.b16 %v152, %v149
  %v186 = vpack.c.b16 %v156, %v153
  %v187 = vpack.c.b16 %v157, %v154
  %v188 = vpack.c.b16 %v158, %v155
  %v189 = vpack.c.b16 %v162, %v159
  %v190 = vpack.c.b16 %v163, %v160
  %v191 = vpack.c.b16 %v164, %v161
  %v192 = vpack.c.b16 %v168, %v165
  %v193 = vpack.c.b16 %v169, %v166
  %v194 = vpack.c.b16 %v170, %v167
  %v195 = vpack.c.b16 %v174, %v171
  %v196 = vpack.c.b16 %v175, %v172
  %v197 = vpack.c.b16 %v176, %v173
  %v198 = vpack.c.b16 %v177, %v177
  %v199 = vpack.c.b16 %v178, %v178
  %v200 = vpack.c.b16 %v179, %v179
  %vm219 = vcmask 818176
  %v221 = vsel %vm219, %v104, 0
  %v224 = vsel %vm219, %v105, 0
  %v227 = vsel %vm219, %v106, 0
  %v230 = vsel %vm219, %v107, 0
  %v233 = vsel %vm219, %v108, 0
  %v236 = vsel %vm219, %v109, 0
  %v239 = vsel %vm219, %v110, 0
  %v242 = vsel %vm219, %v111, 0
  %v245 = vsel %vm219, %v112, 0
  %v248 = vsel %vm219, %v113, 0
  %v251 = vsel %vm219, %v114, 0
  %vm253 = vcmask 1041408
  %v255 = vsel %vm253, %v198, 0
  %v258 = vsel %vm253, %v199, 0
  %v261 = vsel %vm253, %v200, 0
  %263 = vmatprep.subr.bf16.mxu0 0
  %264 = vmatpush1.bf16.msra.mxu0 0
  %265 = vmatprep.subr.bf16.mxu0 %v258
  %266 = vmatpush1.bf16.msra.mxu0 %v255
  %267 = vmatprep.subr.bf16.mxu0 %v196
  %268 = vmatpush1.bf16.msra.mxu0 %v195
  %269 = vmatprep.subr.bf16.mxu0 %v193
  %270 = vmatpush1.bf16.msra.mxu0 %v192
  %271 = vmatprep.subr.bf16.mxu0 %v190
  %272 = vmatpush1.bf16.msra.mxu0 %v189
  %273 = vmatprep.subr.bf16.mxu0 %v187
  %274 = vmatpush1.bf16.msra.mxu0 %v186
  %275 = vmatprep.subr.bf16.mxu0 %v184
  %276 = vmatpush1.bf16.msra.mxu0 %v183
  %277 = vmatprep.subr.bf16.mxu0 %v181
  %278 = vmatpush1.bf16.msra.mxu0 %v180
  %279 = vmatprep.subr.bf16.mxu0 0
  %280 = vmatpush2.bf16.msra.mxu0 0
  %281 = vmatprep.subr.bf16.mxu0 0
  %282 = vmatpush2.bf16.msra.mxu0 0
  %283 = vmatprep.subr.bf16.mxu0 0
  %284 = vmatpush2.bf16.msra.mxu0 0
  %285 = vmatprep.subr.bf16.mxu0 0
  %286 = vmatpush2.bf16.msra.mxu0 0
  %287 = vmatprep.subr.bf16.mxu0 0
  %288 = vmatpush2.bf16.msra.mxu0 0
  %289 = vmatprep.subr.bf16.mxu0 0
  %290 = vmatpush2.bf16.msra.mxu0 0
  %291 = vmatprep.subr.bf16.mxu0 0
  %292 = vmatpush2.bf16.msra.mxu0 0
  %293 = vmatprep.subr.bf16.mxu0 0
  %294 = vmatpush2.bf16.msra.mxu0 0
  %295 = vmatprep.mubr.bf16.mxu0 0
  %296 = vmatmul.mubr.bf16.gmra.mxu0 %v221
  %v297 = vpop.f32.mrf.mxu0
  %v298 = vadd.f32 0.0, %v297
  %v299 = vpop.f32.mrf.mxu0
  %v300 = vadd.f32 0.0, %v299
  %v301 = vpop.f32.mrf.mxu0
  %v302 = vadd.f32 0.0, %v301
  %v303 = vpop.f32.mrf.mxu0
  %v304 = vadd.f32 0.0, %v303
  %305 = vmatprep.mubr.bf16.mxu0 0
  %306 = vmatmul.mubr.bf16.gmra.mxu0 %v224
  %v307 = vpop.f32.mrf.mxu0
  %v308 = vadd.f32 0.0, %v307
  %v309 = vpop.f32.mrf.mxu0
  %v310 = vadd.f32 0.0, %v309
  %v311 = vpop.f32.mrf.mxu0
  %v312 = vadd.f32 0.0, %v311
  %v313 = vpop.f32.mrf.mxu0
  %v314 = vadd.f32 0.0, %v313
  %315 = vmatprep.mubr.bf16.mxu0 0
  %316 = vmatmul.mubr.bf16.gmra.mxu0 %v227
  %v317 = vpop.f32.mrf.mxu0
  %v318 = vadd.f32 0.0, %v317
  %v319 = vpop.f32.mrf.mxu0
  %v320 = vadd.f32 0.0, %v319
  %v321 = vpop.f32.mrf.mxu0
  %v322 = vadd.f32 0.0, %v321
  %v323 = vpop.f32.mrf.mxu0
  %v324 = vadd.f32 0.0, %v323
  %325 = vmatprep.mubr.bf16.mxu0 0
  %326 = vmatmul.mubr.bf16.gmra.mxu0 %v230
  %v327 = vpop.f32.mrf.mxu0
  %v328 = vadd.f32 0.0, %v327
  %v329 = vpop.f32.mrf.mxu0
  %v330 = vadd.f32 0.0, %v329
  %v331 = vpop.f32.mrf.mxu0
  %v332 = vadd.f32 0.0, %v331
  %v333 = vpop.f32.mrf.mxu0
  %v334 = vadd.f32 0.0, %v333
  %335 = vmatprep.mubr.bf16.mxu0 0
  %336 = vmatmul.mubr.bf16.gmra.mxu0 %v233
  %v337 = vpop.f32.mrf.mxu0
  %v338 = vadd.f32 0.0, %v337
  %v339 = vpop.f32.mrf.mxu0
  %v340 = vadd.f32 0.0, %v339
  %v341 = vpop.f32.mrf.mxu0
  %v342 = vadd.f32 0.0, %v341
  %v343 = vpop.f32.mrf.mxu0
  %v344 = vadd.f32 0.0, %v343
  %345 = vmatprep.mubr.bf16.mxu0 0
  %346 = vmatmul.mubr.bf16.gmra.mxu0 %v236
  %v347 = vpop.f32.mrf.mxu0
  %v348 = vadd.f32 0.0, %v347
  %v349 = vpop.f32.mrf.mxu0
  %v350 = vadd.f32 0.0, %v349
  %v351 = vpop.f32.mrf.mxu0
  %v352 = vadd.f32 0.0, %v351
  %v353 = vpop.f32.mrf.mxu0
  %v354 = vadd.f32 0.0, %v353
  %355 = vmatprep.mubr.bf16.mxu0 0
  %356 = vmatmul.mubr.bf16.gmra.mxu0 %v239
  %v357 = vpop.f32.mrf.mxu0
  %v358 = vadd.f32 0.0, %v357
  %v359 = vpop.f32.mrf.mxu0
  %v360 = vadd.f32 0.0, %v359
  %v361 = vpop.f32.mrf.mxu0
  %v362 = vadd.f32 0.0, %v361
  %v363 = vpop.f32.mrf.mxu0
  %v364 = vadd.f32 0.0, %v363
  %365 = vmatprep.mubr.bf16.mxu0 0
  %366 = vmatmul.mubr.bf16.gmra.mxu0 %v242
  %v367 = vpop.f32.mrf.mxu0
  %v368 = vadd.f32 0.0, %v367
  %v369 = vpop.f32.mrf.mxu0
  %v370 = vadd.f32 0.0, %v369
  %v371 = vpop.f32.mrf.mxu0
  %v372 = vadd.f32 0.0, %v371
  %v373 = vpop.f32.mrf.mxu0
  %v374 = vadd.f32 0.0, %v373
  %375 = vmatprep.mubr.bf16.mxu0 0
  %376 = vmatmul.mubr.bf16.gmra.mxu0 %v245
  %v377 = vpop.f32.mrf.mxu0
  %v378 = vadd.f32 0.0, %v377
  %v379 = vpop.f32.mrf.mxu0
  %v380 = vadd.f32 0.0, %v379
  %v381 = vpop.f32.mrf.mxu0
  %v382 = vadd.f32 0.0, %v381
  %v383 = vpop.f32.mrf.mxu0
  %v384 = vadd.f32 0.0, %v383
  %385 = vmatprep.mubr.bf16.mxu0 0
  %386 = vmatmul.mubr.bf16.gmra.mxu0 %v248
  %v387 = vpop.f32.mrf.mxu0
  %v388 = vadd.f32 0.0, %v387
  %v389 = vpop.f32.mrf.mxu0
  %v390 = vadd.f32 0.0, %v389
  %v391 = vpop.f32.mrf.mxu0
  %v392 = vadd.f32 0.0, %v391
  %v393 = vpop.f32.mrf.mxu0
  %v394 = vadd.f32 0.0, %v393
  %395 = vmatprep.mubr.bf16.mxu0 0
  %396 = vmatmul.mubr.bf16.gmra.mxu0 %v251
  %v397 = vpop.f32.mrf.mxu0
  %v398 = vadd.f32 0.0, %v397
  %v399 = vpop.f32.mrf.mxu0
  %v400 = vadd.f32 0.0, %v399
  %v401 = vpop.f32.mrf.mxu0
  %v402 = vadd.f32 0.0, %v401
  %v403 = vpop.f32.mrf.mxu0
  %v404 = vadd.f32 0.0, %v403
  %405 = vdwg.mxu0
  %406 = vmatprep.subr.bf16.mxu0 0
  %407 = vmatpush1.bf16.msra.mxu0 0
  %408 = vmatprep.subr.bf16.mxu0 0
  %409 = vmatpush1.bf16.msra.mxu0 %v261
  %410 = vmatprep.subr.bf16.mxu0 0
  %411 = vmatpush1.bf16.msra.mxu0 %v197
  %412 = vmatprep.subr.bf16.mxu0 0
  %413 = vmatpush1.bf16.msra.mxu0 %v194
  %414 = vmatprep.subr.bf16.mxu0 0
  %415 = vmatpush1.bf16.msra.mxu0 %v191
  %416 = vmatprep.subr.bf16.mxu0 0
  %417 = vmatpush1.bf16.msra.mxu0 %v188
  %418 = vmatprep.subr.bf16.mxu0 0
  %419 = vmatpush1.bf16.msra.mxu0 %v185
  %420 = vmatprep.subr.bf16.mxu0 0
  %421 = vmatpush1.bf16.msra.mxu0 %v182
  %422 = vmatprep.subr.bf16.mxu0 0
  %423 = vmatpush2.bf16.msra.mxu0 0
  %424 = vmatprep.subr.bf16.mxu0 0
  %425 = vmatpush2.bf16.msra.mxu0 0
  %426 = vmatprep.subr.bf16.mxu0 0
  %427 = vmatpush2.bf16.msra.mxu0 0
  %428 = vmatprep.subr.bf16.mxu0 0
  %429 = vmatpush2.bf16.msra.mxu0 0
  %430 = vmatprep.subr.bf16.mxu0 0
  %431 = vmatpush2.bf16.msra.mxu0 0
  %432 = vmatprep.subr.bf16.mxu0 0
  %433 = vmatpush2.bf16.msra.mxu0 0
  %434 = vmatprep.subr.bf16.mxu0 0
  %435 = vmatpush2.bf16.msra.mxu0 0
  %436 = vmatprep.subr.bf16.mxu0 0
  %437 = vmatpush2.bf16.msra.mxu0 0
  %438 = vmatprep.mubr.bf16.mxu0 0
  %439 = vmatmul.mubr.bf16.gmra.mxu0 %v221
  %v440 = vpop.f32.mrf.mxu0
  %v441 = vadd.f32 0.0, %v440
  %v442 = vpop.f32.mrf.mxu0
  %v443 = vpop.f32.mrf.mxu0
  %v444 = vadd.f32 0.0, %v443
  %v445 = vpop.f32.mrf.mxu0
  %446 = vmatprep.mubr.bf16.mxu0 0
  %447 = vmatmul.mubr.bf16.gmra.mxu0 %v224
  %v448 = vpop.f32.mrf.mxu0
  %v449 = vadd.f32 0.0, %v448
  %v450 = vpop.f32.mrf.mxu0
  %v451 = vpop.f32.mrf.mxu0
  %v452 = vadd.f32 0.0, %v451
  %v453 = vpop.f32.mrf.mxu0
  %454 = vmatprep.mubr.bf16.mxu0 0
  %455 = vmatmul.mubr.bf16.gmra.mxu0 %v227
  %v456 = vpop.f32.mrf.mxu0
  %v457 = vadd.f32 0.0, %v456
  %v458 = vpop.f32.mrf.mxu0
  %v459 = vpop.f32.mrf.mxu0
  %v460 = vadd.f32 0.0, %v459
  %v461 = vpop.f32.mrf.mxu0
  %462 = vmatprep.mubr.bf16.mxu0 0
  %463 = vmatmul.mubr.bf16.gmra.mxu0 %v230
  %v464 = vpop.f32.mrf.mxu0
  %v465 = vadd.f32 0.0, %v464
  %v466 = vpop.f32.mrf.mxu0
  %v467 = vpop.f32.mrf.mxu0
  %v468 = vadd.f32 0.0, %v467
  %v469 = vpop.f32.mrf.mxu0
  %470 = vmatprep.mubr.bf16.mxu0 0
  %471 = vmatmul.mubr.bf16.gmra.mxu0 %v233
  %v472 = vpop.f32.mrf.mxu0
  %v473 = vadd.f32 0.0, %v472
  %v474 = vpop.f32.mrf.mxu0
  %v475 = vpop.f32.mrf.mxu0
  %v476 = vadd.f32 0.0, %v475
  %v477 = vpop.f32.mrf.mxu0
  %478 = vmatprep.mubr.bf16.mxu0 0
  %479 = vmatmul.mubr.bf16.gmra.mxu0 %v236
  %v480 = vpop.f32.mrf.mxu0
  %v481 = vadd.f32 0.0, %v480
  %v482 = vpop.f32.mrf.mxu0
  %v483 = vpop.f32.mrf.mxu0
  %v484 = vadd.f32 0.0, %v483
  %v485 = vpop.f32.mrf.mxu0
  %486 = vmatprep.mubr.bf16.mxu0 0
  %487 = vmatmul.mubr.bf16.gmra.mxu0 %v239
  %v488 = vpop.f32.mrf.mxu0
  %v489 = vadd.f32 0.0, %v488
  %v490 = vpop.f32.mrf.mxu0
  %v491 = vpop.f32.mrf.mxu0
  %v492 = vadd.f32 0.0, %v491
  %v493 = vpop.f32.mrf.mxu0
  %494 = vmatprep.mubr.bf16.mxu0 0
  %495 = vmatmul.mubr.bf16.gmra.mxu0 %v242
  %v496 = vpop.f32.mrf.mxu0
  %v497 = vadd.f32 0.0, %v496
  %v498 = vpop.f32.mrf.mxu0
  %v499 = vpop.f32.mrf.mxu0
  %v500 = vadd.f32 0.0, %v499
  %v501 = vpop.f32.mrf.mxu0
  %502 = vmatprep.mubr.bf16.mxu0 0
  %503 = vmatmul.mubr.bf16.gmra.mxu0 %v245
  %v504 = vpop.f32.mrf.mxu0
  %v505 = vadd.f32 0.0, %v504
  %v506 = vpop.f32.mrf.mxu0
  %v507 = vpop.f32.mrf.mxu0
  %v508 = vadd.f32 0.0, %v507
  %v509 = vpop.f32.mrf.mxu0
  %510 = vmatprep.mubr.bf16.mxu0 0
  %511 = vmatmul.mubr.bf16.gmra.mxu0 %v248
  %v512 = vpop.f32.mrf.mxu0
  %v513 = vadd.f32 0.0, %v512
  %v514 = vpop.f32.mrf.mxu0
  %v515 = vpop.f32.mrf.mxu0
  %v516 = vadd.f32 0.0, %v515
  %v517 = vpop.f32.mrf.mxu0
  %518 = vmatprep.mubr.bf16.mxu0 0
  %519 = vmatmul.mubr.bf16.gmra.mxu0 %v251
  %v520 = vpop.f32.mrf.mxu0
  %v521 = vadd.f32 0.0, %v520
  %v522 = vpop.f32.mrf.mxu0
  %v523 = vpop.f32.mrf.mxu0
  %v524 = vadd.f32 0.0, %v523
  %v525 = vpop.f32.mrf.mxu0
  %526 = vdwg.mxu0
  %v527 = vpack.c.bf16 %v302, %v298
  %v528 = vpack.c.bf16 %v304, %v300
  %v529 = vpack.c.bf16 %v444, %v441
  %v530 = vpack.c.bf16 %v312, %v308
  %v531 = vpack.c.bf16 %v314, %v310
  %v532 = vpack.c.bf16 %v452, %v449
  %v533 = vpack.c.bf16 %v322, %v318
  %v534 = vpack.c.bf16 %v324, %v320
  %v535 = vpack.c.bf16 %v460, %v457
  %v536 = vpack.c.bf16 %v332, %v328
  %v537 = vpack.c.bf16 %v334, %v330
  %v538 = vpack.c.bf16 %v468, %v465
  %v539 = vpack.c.bf16 %v342, %v338
  %v540 = vpack.c.bf16 %v344, %v340
  %v541 = vpack.c.bf16 %v476, %v473
  %v542 = vpack.c.bf16 %v352, %v348
  %v543 = vpack.c.bf16 %v354, %v350
  %v544 = vpack.c.bf16 %v484, %v481
  %v545 = vpack.c.bf16 %v362, %v358
  %v546 = vpack.c.bf16 %v364, %v360
  %v547 = vpack.c.bf16 %v492, %v489
  %v548 = vpack.c.bf16 %v372, %v368
  %v549 = vpack.c.bf16 %v374, %v370
  %v550 = vpack.c.bf16 %v500, %v497
  %v551 = vpack.c.bf16 %v382, %v378
  %v552 = vpack.c.bf16 %v384, %v380
  %v553 = vpack.c.bf16 %v508, %v505
  %v554 = vpack.c.bf16 %v392, %v388
  %v555 = vpack.c.bf16 %v394, %v390
  %v556 = vpack.c.bf16 %v516, %v513
  %v557 = vpack.c.bf16 %v402, %v398
  %v558 = vpack.c.bf16 %v404, %v400
  %v559 = vpack.c.bf16 %v524, %v521
  %v593 = vunpack.c.l.b16 %v527
  %v594 = vunpack.c.l.b16 %v528
  %v595 = vunpack.c.l.b16 %v529
  %v596 = vunpack.c.h.b16 %v527
  %v597 = vunpack.c.h.b16 %v528
  %v598 = vunpack.c.h.b16 %v529
  %v599 = vunpack.c.l.b16 %v530
  %v600 = vunpack.c.l.b16 %v531
  %v601 = vunpack.c.l.b16 %v532
  %v602 = vunpack.c.h.b16 %v530
  %v603 = vunpack.c.h.b16 %v531
  %v604 = vunpack.c.h.b16 %v532
  %v605 = vunpack.c.l.b16 %v533
  %v606 = vunpack.c.l.b16 %v534
  %v607 = vunpack.c.l.b16 %v535
  %v608 = vunpack.c.h.b16 %v533
  %v609 = vunpack.c.h.b16 %v534
  %v610 = vunpack.c.h.b16 %v535
  %v611 = vunpack.c.l.b16 %v536
  %v612 = vunpack.c.l.b16 %v537
  %v613 = vunpack.c.l.b16 %v538
  %v614 = vunpack.c.h.b16 %v536
  %v615 = vunpack.c.h.b16 %v537
  %v616 = vunpack.c.h.b16 %v538
  %v617 = vunpack.c.l.b16 %v539
  %v618 = vunpack.c.l.b16 %v540
  %v619 = vunpack.c.l.b16 %v541
  %v620 = vunpack.c.h.b16 %v539
  %v621 = vunpack.c.h.b16 %v540
  %v622 = vunpack.c.h.b16 %v541
  %v623 = vunpack.c.l.b16 %v542
  %v624 = vunpack.c.l.b16 %v543
  %v625 = vunpack.c.l.b16 %v544
  %v626 = vunpack.c.h.b16 %v542
  %v627 = vunpack.c.h.b16 %v543
  %v628 = vunpack.c.h.b16 %v544
  %v629 = vunpack.c.l.b16 %v545
  %v630 = vunpack.c.l.b16 %v546
  %v631 = vunpack.c.l.b16 %v547
  %v632 = vunpack.c.h.b16 %v545
  %v633 = vunpack.c.h.b16 %v546
  %v634 = vunpack.c.h.b16 %v547
  %v635 = vunpack.c.l.b16 %v548
  %v636 = vunpack.c.l.b16 %v549
  %v637 = vunpack.c.l.b16 %v550
  %v638 = vunpack.c.h.b16 %v548
  %v639 = vunpack.c.h.b16 %v549
  %v640 = vunpack.c.h.b16 %v550
  %v641 = vunpack.c.l.b16 %v551
  %v642 = vunpack.c.l.b16 %v552
  %v643 = vunpack.c.l.b16 %v553
  %v644 = vunpack.c.h.b16 %v551
  %v645 = vunpack.c.h.b16 %v552
  %v646 = vunpack.c.h.b16 %v553
  %v647 = vunpack.c.l.b16 %v554
  %v648 = vunpack.c.l.b16 %v555
  %v649 = vunpack.c.l.b16 %v556
  %v650 = vunpack.c.h.b16 %v554
  %v651 = vunpack.c.h.b16 %v555
  %v652 = vunpack.c.h.b16 %v556
  %v653 = vunpack.c.l.b16 %v557
  %v654 = vunpack.c.l.b16 %v558
  %v655 = vunpack.c.l.b16 %v559
  %v656 = vunpack.c.h.b16 %v557
  %v657 = vunpack.c.h.b16 %v558
  %v658 = vunpack.c.h.b16 %v559
  %v659 = vpack.c.b16 %v594, %v593
  %v660 = vpack.c.b16 %v595, %v595
  %v661 = vpack.c.b16 %v597, %v596
  %v662 = vpack.c.b16 %v598, %v598
  %v663 = vpack.c.b16 %v600, %v599
  %v664 = vpack.c.b16 %v601, %v601
  %v665 = vpack.c.b16 %v603, %v602
  %v666 = vpack.c.b16 %v604, %v604
  %v667 = vpack.c.b16 %v606, %v605
  %v668 = vpack.c.b16 %v607, %v607
  %v669 = vpack.c.b16 %v609, %v608
  %v670 = vpack.c.b16 %v610, %v610
  %v671 = vpack.c.b16 %v612, %v611
  %v672 = vpack.c.b16 %v613, %v613
  %v673 = vpack.c.b16 %v615, %v614
  %v674 = vpack.c.b16 %v616, %v616
  %v675 = vpack.c.b16 %v618, %v617
  %v676 = vpack.c.b16 %v619, %v619
  %v677 = vpack.c.b16 %v621, %v620
  %v678 = vpack.c.b16 %v622, %v622
  %v679 = vpack.c.b16 %v624, %v623
  %v680 = vpack.c.b16 %v625, %v625
  %v681 = vpack.c.b16 %v627, %v626
  %v682 = vpack.c.b16 %v628, %v628
  %v683 = vpack.c.b16 %v630, %v629
  %v684 = vpack.c.b16 %v631, %v631
  %v685 = vpack.c.b16 %v633, %v632
  %v686 = vpack.c.b16 %v634, %v634
  %v687 = vpack.c.b16 %v636, %v635
  %v688 = vpack.c.b16 %v637, %v637
  %v689 = vpack.c.b16 %v639, %v638
  %v690 = vpack.c.b16 %v640, %v640
  %v691 = vpack.c.b16 %v642, %v641
  %v692 = vpack.c.b16 %v643, %v643
  %v693 = vpack.c.b16 %v645, %v644
  %v694 = vpack.c.b16 %v646, %v646
  %v695 = vpack.c.b16 %v648, %v647
  %v696 = vpack.c.b16 %v649, %v649
  %v697 = vpack.c.b16 %v651, %v650
  %v698 = vpack.c.b16 %v652, %v652
  %v699 = vpack.c.b16 %v654, %v653
  %v700 = vpack.c.b16 %v655, %v655
  %v701 = vpack.c.b16 %v657, %v656
  %v702 = vpack.c.b16 %v658, %v658
  %747 = vst [vmem:[%s2] sm:$0xff] %v659
  %748 = vst [vmem:[%s2 + $0x8] sm:$0xf] %v660
  %749 = vst [vmem:[%s2 + $0xc] sm:$0xff] %v661
  %750 = vst [vmem:[%s2 + $0x14] sm:$0xf] %v662
  %751 = vst [vmem:[%s2 + $0x18] sm:$0xff] %v663
  %752 = vst [vmem:[%s2 + $0x20] sm:$0xf] %v664
  %753 = vst [vmem:[%s2 + $0x24] sm:$0xff] %v665
  %754 = vst [vmem:[%s2 + $0x2c] sm:$0xf] %v666
  %755 = vst [vmem:[%s2 + $0x30] sm:$0xff] %v667
  %756 = vst [vmem:[%s2 + $0x38] sm:$0xf] %v668
  %757 = vst [vmem:[%s2 + $0x3c] sm:$0xff] %v669
  %758 = vst [vmem:[%s2 + $0x44] sm:$0xf] %v670
  %759 = vst [vmem:[%s2 + $0x48] sm:$0xff] %v671
  %760 = vst [vmem:[%s2 + $0x50] sm:$0xf] %v672
  %761 = vst [vmem:[%s2 + $0x54] sm:$0xff] %v673
  %762 = vst [vmem:[%s2 + $0x5c] sm:$0xf] %v674
  %763 = vst [vmem:[%s2 + $0x60] sm:$0xff] %v675
  %764 = vst [vmem:[%s2 + $0x68] sm:$0xf] %v676
  %765 = vst [vmem:[%s2 + $0x6c] sm:$0xff] %v677
  %766 = vst [vmem:[%s2 + $0x74] sm:$0xf] %v678
  %767 = vst [vmem:[%s2 + $0x78] sm:$0xff] %v679
  %768 = vst [vmem:[%s2 + $0x80] sm:$0xf] %v680
  %769 = vst [vmem:[%s2 + $0x84] sm:$0xff] %v681
  %770 = vst [vmem:[%s2 + $0x8c] sm:$0xf] %v682
  %771 = vst [vmem:[%s2 + $0x90] sm:$0xff] %v683
  %772 = vst [vmem:[%s2 + $0x98] sm:$0xf] %v684
  %773 = vst [vmem:[%s2 + $0x9c] sm:$0xff] %v685
  %774 = vst [vmem:[%s2 + $0xa4] sm:$0xf] %v686
  %775 = vst [vmem:[%s2 + $0xa8] sm:$0xff] %v687
  %776 = vst [vmem:[%s2 + $0xb0] sm:$0xf] %v688
  %777 = vst [vmem:[%s2 + $0xb4] sm:$0xff] %v689
  %778 = vst [vmem:[%s2 + $0xbc] sm:$0xf] %v690
  %779 = vst [vmem:[%s2 + $0xc0] sm:$0xff] %v691
  %780 = vst [vmem:[%s2 + $0xc8] sm:$0xf] %v692
  %781 = vst [vmem:[%s2 + $0xcc] sm:$0xff] %v693
  %782 = vst [vmem:[%s2 + $0xd4] sm:$0xf] %v694
  %783 = vst [vmem:[%s2 + $0xd8] sm:$0xff] %v695
  %784 = vst [vmem:[%s2 + $0xe0] sm:$0xf] %v696
  %785 = vst [vmem:[%s2 + $0xe4] sm:$0xff] %v697
  %786 = vst [vmem:[%s2 + $0xec] sm:$0xf] %v698
  %787 = vst [vmem:[%s2 + $0xf0] sm:$0xff] %v699
  %788 = vst [vmem:[%s2 + $0xf8] sm:$0xf] %v700
  %789 = vst [vmem:[%s2 + $0xfc] sm:$0xff] %v701
  %790 = vst [vmem:[%s2 + $0x104] sm:$0xf] %v702
  // Predicated region
  $region10: #{net_forward.8} parent=0 // pred_check
    _
  $region11: #{net_forward.8} parent=0 // pred_check_branch
    %792 = sbr.rel (0) target = $region13
  $region12: #{net_forward.8} parent=0 // pred_region
    _
  $region13: #{net_forward.8} parent=0 // pred_fallthru
    _
  // Predicated region
  $region14: #{net_forward.8} parent=0 // pred_check
    _
  $region15: #{net_forward.8} parent=0 // pred_check_branch
    %794 = sbr.rel (0) target = $region17
  $region16: #{net_forward.8} parent=0 // pred_region
    _
  $region17: #{net_forward.8} parent=0 // pred_fallthru
    _

// kernel: net_forward.9
$region0: #{net_forward.9}
  #allocation0 [shape = 'u32[]', space=smem, size = 0x4, offset = 0x4, fixed_abs, tag = 'smem constant byte address 0x4 - core index']
  #allocation1 [shape = 'u32[144,128]{1,0:T(1,128)}', space=vmem, size = 0x12000, scoped, tag = 'internal scratch']
  %s0 = inlined_call_operand.vmem [shape: bf16[1296,40], index: 0, kind: input, shape index: {}]
  %s1 = inlined_call_operand.vmem [shape: bf16[40,128], index: 1, kind: input, shape index: {}]
  %s2 = inlined_call_operand.vmem [shape: bf16[1296,128], index: 2, kind: output, shape index: {}]
  %s3 = sld [smem:[#allocation0]]
  $region41: #{net_forward.9} parent=0
    _
  %s5 = ssub.s32 1, %s3
  %s6 = scalar_select 0, %s5, %s3
  loop: start=0, step=1, limit=5
  $region2: #{net_forward.9} parent=0 // loop_pre_header
    _
  $region3: #{net_forward.9} parent=0 // loop_header
    %s8 = sphi 0, %s12
    %p9 = scmp.ge.s32.totalorder %s8, 5
    %s18 = sphi 0, %s20
    %s21 = sphi 0, %s18
    %s22 = sphi 0, %s21
    %s38 = sphi 0, %s22
    %s42 = sphi 0, %s42
    %s44 = sphi 0, %s42
    %s45 = sphi 0, %s44
    %s59 = sphi 0, %s45
    %s65 = sphi 0, %s67
    %s68 = sphi 0, %s65
    %s69 = sphi 0, %s68
    %s85 = sphi 0, %s69
  $region4: #{net_forward.9} parent=0 // loop_header_branch
    %11 = sbr.rel (%p9) target = $region8
  $region5: #{net_forward.9} parent=0 // loop_body
    %s13 = ssub.s32 %s8, 1
    %s14 = ssub.s32 %s8, 2
    %s15 = sadd.s32 %s8, 1
    %s16 = ssub.s32 %s8, %s15
    %p17 = scmp.eq.s32.totalorder %s16, 0
    %s19 = sadd.s32 %s18, 1
    %s20 = scalar_select %p17, %s18, %s19
    %p23 = pneg %p17
    %p24 = scmp.eq.s32.totalorder %s8, 2
    %p25 = por %p23, %p24
    %p26 = scmp.ne.s32.totalorder %s18, %s21
    %p27 = scmp.eq.s32.totalorder %s8, 0
    %p28 = por %p26, %p27
    %p29 = scmp.ne.s32.totalorder %s18, %s21
    %p30 = scmp.eq.s32.totalorder %s13, 2
    %p31 = por %p29, %p30
    %p32 = scmp.ne.s32.totalorder %s21, %s22
    %p33 = scmp.eq.s32.totalorder %s13, 0
    %p34 = por %p32, %p33
    %p35 = scmp.ne.s32.totalorder %s21, %s22
    %p36 = scmp.eq.s32.totalorder %s14, 2
    %p37 = por %p35, %p36
    %p39 = scmp.ne.s32.totalorder %s22, %s38
    %p40 = scmp.eq.s32.totalorder %s14, 0
    %p41 = por %p39, %p40
    %s43 = sadd.s32 %s42, 1
    %p46 = scmp.eq.s32.totalorder %s8, 2
    %p47 = scmp.ne.s32.totalorder %s42, %s44
    %p48 = scmp.eq.s32.totalorder %s8, 0
    %p49 = por %p47, %p48
    %p50 = scmp.ne.s32.totalorder %s42, %s44
    %p51 = scmp.eq.s32.totalorder %s13, 2
    %p52 = por %p50, %p51
    %p53 = scmp.ne.s32.totalorder %s44, %s45
    %p54 = scmp.eq.s32.totalorder %s13, 0
    %p55 = por %p53, %p54
    %p56 = scmp.ne.s32.totalorder %s44, %s45
    %p57 = scmp.eq.s32.totalorder %s14, 2
    %p58 = por %p56, %p57
    %p60 = scmp.ne.s32.totalorder %s45, %s59
    %p61 = scmp.eq.s32.totalorder %s14, 0
    %p62 = por %p60, %p61
    %s63 = ssub.s32 %s8, %s15
    %p64 = scmp.eq.s32.totalorder %s63, 0
    %s66 = sadd.s32 %s65, 1
    %s67 = scalar_select %p64, %s65, %s66
    %p70 = pneg %p64
    %p71 = scmp.eq.s32.totalorder %s8, 2
    %p72 = por %p70, %p71
    %p73 = scmp.ne.s32.totalorder %s65, %s68
    %p74 = scmp.eq.s32.totalorder %s8, 0
    %p75 = por %p73, %p74
    %p76 = scmp.ne.s32.totalorder %s65, %s68
    %p77 = scmp.eq.s32.totalorder %s13, 2
    %p78 = por %p76, %p77
    %p79 = scmp.ne.s32.totalorder %s68, %s69
    %p80 = scmp.eq.s32.totalorder %s13, 0
    %p81 = por %p79, %p80
    %p82 = scmp.ne.s32.totalorder %s68, %s69
    %p83 = scmp.eq.s32.totalorder %s14, 2
    %p84 = por %p82, %p83
    %p86 = scmp.ne.s32.totalorder %s69, %s85
    %p87 = scmp.eq.s32.totalorder %s14, 0
    %p88 = por %p86, %p87
    %p89 = scmp.le.s32.totalorder 1, %s8
    %p90 = scmp.lt.s32.totalorder %s8, 4
    %p91 = pnand %p89, %p90
    %p92 = pneg %p91
    // Predicated region
    $region9: #{net_forward.9} parent=5 // pred_check
      _
    $region10: #{net_forward.9} parent=5 // pred_check_branch
      %94 = sbr.rel (%p91) target = $region12
    $region11: #{net_forward.9} parent=5 // pred_region
      %s95 = ssub.s32 %s8, 1
      // Predicated region
      $region13: #{net_forward.9} parent=11 // pred_check
        %p96 = pneg %p55
      $region14: #{net_forward.9} parent=11 // pred_check_branch
        %98 = sbr.rel (%p96) target = $region16
      $region15: #{net_forward.9} parent=11 // pred_region
        _
      $region16: #{net_forward.9} parent=11 // pred_fallthru
        _
    $region12: #{net_forward.9} parent=5 // pred_fallthru
      _
    %p99 = scmp.lt.s32.totalorder %s8, 3
    // Predicated region
    $region17: #{net_forward.9} parent=5 // pred_check
      %p100 = pneg %p99
    $region18: #{net_forward.9} parent=5 // pred_check_branch
      %102 = sbr.rel (%p100) target = $region20
    $region19: #{net_forward.9} parent=5 // pred_region
      // Predicated region
      $region21: #{net_forward.9} parent=19 // pred_check
        %p103 = pneg %p28
      $region22: #{net_forward.9} parent=19 // pred_check_branch
        %105 = sbr.rel (%p103) target = $region24
      $region23: #{net_forward.9} parent=19 // pred_region
        %s106 = smul.u32 54, %s8
        %p107 = scmp.lt.s32.totalorder %s106, 161
        %s108 = scalar_select %p107, %s106, 161
        %s109 = smul.addr %s108, 4
        %s110 = scalar_lea.vmem %s0, %s109
        %s111 = smul.u32 54, %s8
      $region24: #{net_forward.9} parent=19 // pred_fallthru
        _
    $region20: #{net_forward.9} parent=5 // pred_fallthru
      _
    %p112 = scmp.le.s32.totalorder 1, %s8
    %p113 = scmp.lt.s32.totalorder %s8, 4
    %p114 = pnand %p112, %p113
    %p115 = pneg %p114
    // Predicated region
    $region25: #{net_forward.9} parent=5 // pred_check
      _
    $region26: #{net_forward.9} parent=5 // pred_check_branch
      %117 = sbr.rel (%p114) target = $region28
    $region27: #{net_forward.9} parent=5 // pred_region
      %s118 = ssub.s32 %s8, 1
      %s119 = smul.u32 54, %s13
      %p120 = scmp.lt.s32.totalorder %s119, 161
      %s121 = scalar_select %p120, %s119, 161
      %s122 = smul.addr %s121, 4
      %s123 = scalar_lea.vmem %s0, %s122
      %p124 = pneg %p34
      %p125 = pneg %p31
      %p126 = pneg %p55
      %p127 = pneg %p52
      %p128 = pneg %p81
      %p129 = pneg %p78
      %s130 = smul.u32 54, %s13
      %p131 = scmp.lt.s32.totalorder %s130, 161
      %s132 = scalar_select %p131, %s130, 161
      %s133 = smul.addr %s132, 4
      %s134 = scalar_lea.vmem %s2, %s133
      %s135 = smul.u32 54, %s13
      %p136 = scmp.lt.s32.totalorder %s135, 161
      %s137 = scalar_select %p136, %s135, 161
      %s138 = smul.addr %s137, 4
      %s139 = scalar_lea.vmem %s0, %s138
      %s140 = smul.u32 54, %s13
      %s141 = smul.u32 54, %s13
      %p142 = scmp.lt.s32.totalorder %s141, 161
      %s143 = scalar_select %p142, %s141, 161
      %s144 = smul.addr %s143, 4
      %s145 = scalar_lea.vmem %s2, %s144
      %s146 = smul.u32 54, %s13
      %v148 = vld [vmem:[%s139] sm:$0xf]
      %v149 = vld [vmem:[%s139 + $0x4] sm:$0xf]
      %v150 = vld [vmem:[%s139 + $0x8] sm:$0xf]
      %v151 = vld [vmem:[%s139 + $0xc] sm:$0xf]
      %v152 = vld [vmem:[%s139 + $0x10] sm:$0xf]
      %v153 = vld [vmem:[%s139 + $0x14] sm:$0xf]
      %v154 = vld [vmem:[%s139 + $0x18] sm:$0xf]
      %v155 = vld [vmem:[%s139 + $0x1c] sm:$0xf]
      %v156 = vld [vmem:[%s139 + $0x20] sm:$0xf]
      %v157 = vld [vmem:[%s139 + $0x24] sm:$0xf]
      %v158 = vld [vmem:[%s139 + $0x28] sm:$0xf]
      %v159 = vld [vmem:[%s139 + $0x2c] sm:$0xf]
      %v160 = vld [vmem:[%s139 + $0x30] sm:$0xf]
      %v161 = vld [vmem:[%s139 + $0x34] sm:$0xf]
      %v162 = vld [vmem:[%s139 + $0x38] sm:$0xf]
      %v163 = vld [vmem:[%s139 + $0x3c] sm:$0xf]
      %v164 = vld [vmem:[%s139 + $0x40] sm:$0xf]
      %v165 = vld [vmem:[%s139 + $0x44] sm:$0xf]
      %v166 = vld [vmem:[%s139 + $0x48] sm:$0xf]
      %v167 = vld [vmem:[%s139 + $0x4c] sm:$0xf]
      %v168 = vld [vmem:[%s139 + $0x50] sm:$0xf]
      %v169 = vld [vmem:[%s139 + $0x54] sm:$0xf]
      %v170 = vld [vmem:[%s139 + $0x58] sm:$0xf]
      %v171 = vld [vmem:[%s139 + $0x5c] sm:$0xf]
      %v172 = vld [vmem:[%s139 + $0x60] sm:$0xf]
      %v173 = vld [vmem:[%s139 + $0x64] sm:$0xf]
      %v174 = vld [vmem:[%s139 + $0x68] sm:$0xf]
      %v175 = vld [vmem:[%s139 + $0x6c] sm:$0xf]
      %v176 = vld [vmem:[%s139 + $0x70] sm:$0xf]
      %v177 = vld [vmem:[%s139 + $0x74] sm:$0xf]
      %v178 = vld [vmem:[%s139 + $0x78] sm:$0xf]
      %v179 = vld [vmem:[%s139 + $0x7c] sm:$0xf]
      %v180 = vld [vmem:[%s139 + $0x80] sm:$0xf]
      %v181 = vld [vmem:[%s139 + $0x84] sm:$0xf]
      %v182 = vld [vmem:[%s139 + $0x88] sm:$0xf]
      %v183 = vld [vmem:[%s139 + $0x8c] sm:$0xf]
      %v184 = vld [vmem:[%s139 + $0x90] sm:$0xf]
      %v185 = vld [vmem:[%s139 + $0x94] sm:$0xf]
      %v186 = vld [vmem:[%s139 + $0x98] sm:$0xf]
      %v187 = vld [vmem:[%s139 + $0x9c] sm:$0xf]
      %v188 = vld [vmem:[%s139 + $0xa0] sm:$0xf]
      %v189 = vld [vmem:[%s139 + $0xa4] sm:$0xf]
      %v190 = vld [vmem:[%s139 + $0xa8] sm:$0xf]
      %v191 = vld [vmem:[%s139 + $0xac] sm:$0xf]
      %v192 = vld [vmem:[%s139 + $0xb0] sm:$0xf]
      %v193 = vld [vmem:[%s139 + $0xb4] sm:$0xf]
      %v194 = vld [vmem:[%s139 + $0xb8] sm:$0xf]
      %v195 = vld [vmem:[%s139 + $0xbc] sm:$0xf]
      %v196 = vld [vmem:[%s139 + $0xc0] sm:$0xf]
      %v197 = vld [vmem:[%s139 + $0xc4] sm:$0xf]
      %v198 = vld [vmem:[%s139 + $0xc8] sm:$0xf]
      %v199 = vld [vmem:[%s139 + $0xcc] sm:$0xf]
      %v200 = vld [vmem:[%s139 + $0xd0] sm:$0xf]
      %v201 = vld [vmem:[%s139 + $0xd4] sm:$0xf]
      %v202 = vld [vmem:[%s1] sm:$0xf]
      %v203 = vld [vmem:[%s1 + $0x4] sm:$0xf]
      %v204 = vld [vmem:[%s1 + $0x8] sm:$0xf]
      %v205 = vld [vmem:[%s1 + $0xc] sm:$0xf]
      %v206 = vld [vmem:[%s1 + $0x10] sm:$0xf]
      %v261 = vunpack.c.l.b16 %v148
      %v262 = vunpack.c.l.b16 %v149
      %v263 = vunpack.c.l.b16 %v150
      %v264 = vunpack.c.l.b16 %v151
      %v265 = vunpack.c.l.b16 %v152
      %v266 = vunpack.c.l.b16 %v153
      %v267 = vunpack.c.l.b16 %v154
      %v268 = vunpack.c.l.b16 %v155
      %v269 = vunpack.c.l.b16 %v156
      %v270 = vunpack.c.l.b16 %v157
      %v271 = vunpack.c.l.b16 %v158
      %v272 = vunpack.c.l.b16 %v159
      %v273 = vunpack.c.l.b16 %v160
      %v274 = vunpack.c.l.b16 %v161
      %v275 = vunpack.c.l.b16 %v162
      %v276 = vunpack.c.l.b16 %v163
      %v277 = vunpack.c.l.b16 %v164
      %v278 = vunpack.c.l.b16 %v165
      %v279 = vunpack.c.l.b16 %v166
      %v280 = vunpack.c.l.b16 %v167
      %v281 = vunpack.c.l.b16 %v168
      %v282 = vunpack.c.l.b16 %v169
      %v283 = vunpack.c.l.b16 %v170
      %v284 = vunpack.c.l.b16 %v171
      %v285 = vunpack.c.l.b16 %v172
      %v286 = vunpack.c.l.b16 %v173
      %v287 = vunpack.c.l.b16 %v174
      %v288 = vunpack.c.l.b16 %v175
      %v289 = vunpack.c.l.b16 %v176
      %v290 = vunpack.c.l.b16 %v177
      %v291 = vunpack.c.l.b16 %v178
      %v292 = vunpack.c.l.b16 %v179
      %v293 = vunpack.c.l.b16 %v180
      %v294 = vunpack.c.l.b16 %v181
      %v295 = vunpack.c.l.b16 %v182
      %v296 = vunpack.c.l.b16 %v183
      %v297 = vunpack.c.l.b16 %v184
      %v298 = vunpack.c.l.b16 %v185
      %v299 = vunpack.c.l.b16 %v186
      %v300 = vunpack.c.l.b16 %v187
      %v301 = vunpack.c.l.b16 %v188
      %v302 = vunpack.c.l.b16 %v189
      %v303 = vunpack.c.l.b16 %v190
      %v304 = vunpack.c.l.b16 %v191
      %v305 = vunpack.c.l.b16 %v192
      %v306 = vunpack.c.l.b16 %v193
      %v307 = vunpack.c.l.b16 %v194
      %v308 = vunpack.c.l.b16 %v195
      %v309 = vunpack.c.l.b16 %v196
      %v310 = vunpack.c.l.b16 %v197
      %v311 = vunpack.c.l.b16 %v198
      %v312 = vunpack.c.l.b16 %v199
      %v313 = vunpack.c.l.b16 %v200
      %v314 = vunpack.c.l.b16 %v201
      %v315 = vpack.c.b16 %v262, %v261
      %v316 = vpack.c.b16 %v264, %v263
      %v317 = vpack.c.b16 %v266, %v265
      %v318 = vpack.c.b16 %v268, %v267
      %v319 = vpack.c.b16 %v270, %v269
      %v320 = vpack.c.b16 %v272, %v271
      %v321 = vpack.c.b16 %v274, %v273
      %v322 = vpack.c.b16 %v276, %v275
      %v323 = vpack.c.b16 %v278, %v277
      %v324 = vpack.c.b16 %v280, %v279
      %v325 = vpack.c.b16 %v282, %v281
      %v326 = vpack.c.b16 %v284, %v283
      %v327 = vpack.c.b16 %v286, %v285
      %v328 = vpack.c.b16 %v288, %v287
      %v329 = vpack.c.b16 %v290, %v289
      %v330 = vpack.c.b16 %v292, %v291
      %v331 = vpack.c.b16 %v294, %v293
      %v332 = vpack.c.b16 %v296, %v295
      %v333 = vpack.c.b16 %v298, %v297
      %v334 = vpack.c.b16 %v300, %v299
      %v335 = vpack.c.b16 %v302, %v301
      %v336 = vpack.c.b16 %v304, %v303
      %v337 = vpack.c.b16 %v306, %v305
      %v338 = vpack.c.b16 %v308, %v307
      %v339 = vpack.c.b16 %v310, %v309
      %v340 = vpack.c.b16 %v312, %v311
      %v341 = vpack.c.b16 %v314, %v313
      %v347 = vunpack.c.l.b16 %v202
      %v348 = vunpack.c.l.b16 %v203
      %v349 = vunpack.c.l.b16 %v204
      %v350 = vunpack.c.l.b16 %v205
      %v351 = vunpack.c.l.b16 %v206
      %v352 = vpack.c.b16 %v348, %v347
      %v353 = vpack.c.b16 %v350, %v349
      %v354 = vpack.c.b16 %v351, %v351
      %vm357 = vcmask 326656
      %v359 = vsel %vm357, %v315, 0
      %v362 = vsel %vm357, %v316, 0
      %v365 = vsel %vm357, %v317, 0
      %v368 = vsel %vm357, %v318, 0
      %v371 = vsel %vm357, %v319, 0
      %v374 = vsel %vm357, %v320, 0
      %v377 = vsel %vm357, %v321, 0
      %v380 = vsel %vm357, %v322, 0
      %v383 = vsel %vm357, %v323, 0
      %v386 = vsel %vm357, %v324, 0
      %v389 = vsel %vm357, %v325, 0
      %v392 = vsel %vm357, %v326, 0
      %v395 = vsel %vm357, %v327, 0
      %v398 = vsel %vm357, %v328, 0
      %v401 = vsel %vm357, %v329, 0
      %v404 = vsel %vm357, %v330, 0
      %v407 = vsel %vm357, %v331, 0
      %v410 = vsel %vm357, %v332, 0
      %v413 = vsel %vm357, %v333, 0
      %v416 = vsel %vm357, %v334, 0
      %v419 = vsel %vm357, %v335, 0
      %v422 = vsel %vm357, %v336, 0
      %v425 = vsel %vm357, %v337, 0
      %v428 = vsel %vm357, %v338, 0
      %v431 = vsel %vm357, %v339, 0
      %v434 = vsel %vm357, %v340, 0
      %v437 = vsel %vm357, %v341, 0
      %vm439 = vcmask 1043456
      %v441 = vsel %vm439, %v354, 0
      %443 = vmatprep.subr.bf16.mxu0 0
      %444 = vmatpush1.bf16.msra.mxu0 0
      %445 = vmatprep.subr.bf16.mxu0 0
      %446 = vmatpush1.bf16.msra.mxu0 0
      %447 = vmatprep.subr.bf16.mxu0 0
      %448 = vmatpush1.bf16.msra.mxu0 0
      %449 = vmatprep.subr.bf16.mxu0 0
      %450 = vmatpush1.bf16.msra.mxu0 0
      %451 = vmatprep.subr.bf16.mxu0 0
      %452 = vmatpush1.bf16.msra.mxu0 0
      %453 = vmatprep.subr.bf16.mxu0 0
      %454 = vmatpush1.bf16.msra.mxu0 %v441
      %455 = vmatprep.subr.bf16.mxu0 0
      %456 = vmatpush1.bf16.msra.mxu0 %v353
      %457 = vmatprep.subr.bf16.mxu0 0
      %458 = vmatpush1.bf16.msra.mxu0 %v352
      %459 = vmatprep.subr.bf16.mxu0 0
      %460 = vmatpush2.bf16.msra.mxu0 0
      %461 = vmatprep.subr.bf16.mxu0 0
      %462 = vmatpush2.bf16.msra.mxu0 0
      %463 = vmatprep.subr.bf16.mxu0 0
      %464 = vmatpush2.bf16.msra.mxu0 0
      %465 = vmatprep.subr.bf16.mxu0 0
      %466 = vmatpush2.bf16.msra.mxu0 0
      %467 = vmatprep.subr.bf16.mxu0 0
      %468 = vmatpush2.bf16.msra.mxu0 0
      %469 = vmatprep.subr.bf16.mxu0 0
      %470 = vmatpush2.bf16.msra.mxu0 0
      %471 = vmatprep.subr.bf16.mxu0 0
      %472 = vmatpush2.bf16.msra.mxu0 0
      %473 = vmatprep.subr.bf16.mxu0 0
      %474 = vmatpush2.bf16.msra.mxu0 0
      %475 = vmatprep.mubr.bf16.mxu0 0
      %476 = vmatmul.mubr.bf16.gmra.mxu0 %v359
      %v477 = vpop.f32.mrf.mxu0
      %v478 = vadd.f32 0.0, %v477
      %v479 = vpop.f32.mrf.mxu0
      %v480 = vpop.f32.mrf.mxu0
      %v481 = vadd.f32 0.0, %v480
      %v482 = vpop.f32.mrf.mxu0
      %483 = vmatprep.mubr.bf16.mxu0 0
      %484 = vmatmul.mubr.bf16.gmra.mxu0 %v362
      %v485 = vpop.f32.mrf.mxu0
      %v486 = vadd.f32 0.0, %v485
      %v487 = vpop.f32.mrf.mxu0
      %v488 = vpop.f32.mrf.mxu0
      %v489 = vadd.f32 0.0, %v488
      %v490 = vpop.f32.mrf.mxu0
      %491 = vmatprep.mubr.bf16.mxu0 0
      %492 = vmatmul.mubr.bf16.gmra.mxu0 %v365
      %v493 = vpop.f32.mrf.mxu0
      %v494 = vadd.f32 0.0, %v493
      %v495 = vpop.f32.mrf.mxu0
      %v496 = vpop.f32.mrf.mxu0
      %v497 = vadd.f32 0.0, %v496
      %v498 = vpop.f32.mrf.mxu0
      %499 = vmatprep.mubr.bf16.mxu0 0
      %500 = vmatmul.mubr.bf16.gmra.mxu0 %v368
      %v501 = vpop.f32.mrf.mxu0
      %v502 = vadd.f32 0.0, %v501
      %v503 = vpop.f32.mrf.mxu0
      %v504 = vpop.f32.mrf.mxu0
      %v505 = vadd.f32 0.0, %v504
      %v506 = vpop.f32.mrf.mxu0
      %507 = vmatprep.mubr.bf16.mxu0 0
      %508 = vmatmul.mubr.bf16.gmra.mxu0 %v371
      %v509 = vpop.f32.mrf.mxu0
      %v510 = vadd.f32 0.0, %v509
      %v511 = vpop.f32.mrf.mxu0
      %v512 = vpop.f32.mrf.mxu0
      %v513 = vadd.f32 0.0, %v512
      %v514 = vpop.f32.mrf.mxu0
      %515 = vmatprep.mubr.bf16.mxu0 0
      %516 = vmatmul.mubr.bf16.gmra.mxu0 %v374
      %v517 = vpop.f32.mrf.mxu0
      %v518 = vadd.f32 0.0, %v517
      %v519 = vpop.f32.mrf.mxu0
      %v520 = vpop.f32.mrf.mxu0
      %v521 = vadd.f32 0.0, %v520
      %v522 = vpop.f32.mrf.mxu0
      %523 = vmatprep.mubr.bf16.mxu0 0
      %524 = vmatmul.mubr.bf16.gmra.mxu0 %v377
      %v525 = vpop.f32.mrf.mxu0
      %v526 = vadd.f32 0.0, %v525
      %v527 = vpop.f32.mrf.mxu0
      %v528 = vpop.f32.mrf.mxu0
      %v529 = vadd.f32 0.0, %v528
      %v530 = vpop.f32.mrf.mxu0
      %531 = vmatprep.mubr.bf16.mxu0 0
      %532 = vmatmul.mubr.bf16.gmra.mxu0 %v380
      %v533 = vpop.f32.mrf.mxu0
      %v534 = vadd.f32 0.0, %v533
      %v535 = vpop.f32.mrf.mxu0
      %v536 = vpop.f32.mrf.mxu0
      %v537 = vadd.f32 0.0, %v536
      %v538 = vpop.f32.mrf.mxu0
      %539 = vmatprep.mubr.bf16.mxu0 0
      %540 = vmatmul.mubr.bf16.gmra.mxu0 %v383
      %v541 = vpop.f32.mrf.mxu0
      %v542 = vadd.f32 0.0, %v541
      %v543 = vpop.f32.mrf.mxu0
      %v544 = vpop.f32.mrf.mxu0
      %v545 = vadd.f32 0.0, %v544
      %v546 = vpop.f32.mrf.mxu0
      %547 = vmatprep.mubr.bf16.mxu0 0
      %548 = vmatmul.mubr.bf16.gmra.mxu0 %v386
      %v549 = vpop.f32.mrf.mxu0
      %v550 = vadd.f32 0.0, %v549
      %v551 = vpop.f32.mrf.mxu0
      %v552 = vpop.f32.mrf.mxu0
      %v553 = vadd.f32 0.0, %v552
      %v554 = vpop.f32.mrf.mxu0
      %555 = vmatprep.mubr.bf16.mxu0 0
      %556 = vmatmul.mubr.bf16.gmra.mxu0 %v389
      %v557 = vpop.f32.mrf.mxu0
      %v558 = vadd.f32 0.0, %v557
      %v559 = vpop.f32.mrf.mxu0
      %v560 = vpop.f32.mrf.mxu0
      %v561 = vadd.f32 0.0, %v560
      %v562 = vpop.f32.mrf.mxu0
      %563 = vmatprep.mubr.bf16.mxu0 0
      %564 = vmatmul.mubr.bf16.gmra.mxu0 %v392
      %v565 = vpop.f32.mrf.mxu0
      %v566 = vadd.f32 0.0, %v565
      %v567 = vpop.f32.mrf.mxu0
      %v568 = vpop.f32.mrf.mxu0
      %v569 = vadd.f32 0.0, %v568
      %v570 = vpop.f32.mrf.mxu0
      %571 = vmatprep.mubr.bf16.mxu0 0
      %572 = vmatmul.mubr.bf16.gmra.mxu0 %v395
      %v573 = vpop.f32.mrf.mxu0
      %v574 = vadd.f32 0.0, %v573
      %v575 = vpop.f32.mrf.mxu0
      %v576 = vpop.f32.mrf.mxu0
      %v577 = vadd.f32 0.0, %v576
      %v578 = vpop.f32.mrf.mxu0
      %579 = vmatprep.mubr.bf16.mxu0 0
      %580 = vmatmul.mubr.bf16.gmra.mxu0 %v398
      %v581 = vpop.f32.mrf.mxu0
      %v582 = vadd.f32 0.0, %v581
      %v583 = vpop.f32.mrf.mxu0
      %v584 = vpop.f32.mrf.mxu0
      %v585 = vadd.f32 0.0, %v584
      %v586 = vpop.f32.mrf.mxu0
      %587 = vmatprep.mubr.bf16.mxu0 0
      %588 = vmatmul.mubr.bf16.gmra.mxu0 %v401
      %v589 = vpop.f32.mrf.mxu0
      %v590 = vadd.f32 0.0, %v589
      %v591 = vpop.f32.mrf.mxu0
      %v592 = vpop.f32.mrf.mxu0
      %v593 = vadd.f32 0.0, %v592
      %v594 = vpop.f32.mrf.mxu0
      %595 = vmatprep.mubr.bf16.mxu0 0
      %596 = vmatmul.mubr.bf16.gmra.mxu0 %v404
      %v597 = vpop.f32.mrf.mxu0
      %v598 = vadd.f32 0.0, %v597
      %v599 = vpop.f32.mrf.mxu0
      %v600 = vpop.f32.mrf.mxu0
      %v601 = vadd.f32 0.0, %v600
      %v602 = vpop.f32.mrf.mxu0
      %603 = vmatprep.mubr.bf16.mxu0 0
      %604 = vmatmul.mubr.bf16.gmra.mxu0 %v407
      %v605 = vpop.f32.mrf.mxu0
      %v606 = vadd.f32 0.0, %v605
      %v607 = vpop.f32.mrf.mxu0
      %v608 = vpop.f32.mrf.mxu0
      %v609 = vadd.f32 0.0, %v608
      %v610 = vpop.f32.mrf.mxu0
      %611 = vmatprep.mubr.bf16.mxu0 0
      %612 = vmatmul.mubr.bf16.gmra.mxu0 %v410
      %v613 = vpop.f32.mrf.mxu0
      %v614 = vadd.f32 0.0, %v613
      %v615 = vpop.f32.mrf.mxu0
      %v616 = vpop.f32.mrf.mxu0
      %v617 = vadd.f32 0.0, %v616
      %v618 = vpop.f32.mrf.mxu0
      %619 = vmatprep.mubr.bf16.mxu0 0
      %620 = vmatmul.mubr.bf16.gmra.mxu0 %v413
      %v621 = vpop.f32.mrf.mxu0
      %v622 = vadd.f32 0.0, %v621
      %v623 = vpop.f32.mrf.mxu0
      %v624 = vpop.f32.mrf.mxu0
      %v625 = vadd.f32 0.0, %v624
      %v626 = vpop.f32.mrf.mxu0
      %627 = vmatprep.mubr.bf16.mxu0 0
      %628 = vmatmul.mubr.bf16.gmra.mxu0 %v416
      %v629 = vpop.f32.mrf.mxu0
      %v630 = vadd.f32 0.0, %v629
      %v631 = vpop.f32.mrf.mxu0
      %v632 = vpop.f32.mrf.mxu0
      %v633 = vadd.f32 0.0, %v632
      %v634 = vpop.f32.mrf.mxu0
      %635 = vmatprep.mubr.bf16.mxu0 0
      %636 = vmatmul.mubr.bf16.gmra.mxu0 %v419
      %v637 = vpop.f32.mrf.mxu0
      %v638 = vadd.f32 0.0, %v637
      %v639 = vpop.f32.mrf.mxu0
      %v640 = vpop.f32.mrf.mxu0
      %v641 = vadd.f32 0.0, %v640
      %v642 = vpop.f32.mrf.mxu0
      %643 = vmatprep.mubr.bf16.mxu0 0
      %644 = vmatmul.mubr.bf16.gmra.mxu0 %v422
      %v645 = vpop.f32.mrf.mxu0
      %v646 = vadd.f32 0.0, %v645
      %v647 = vpop.f32.mrf.mxu0
      %v648 = vpop.f32.mrf.mxu0
      %v649 = vadd.f32 0.0, %v648
      %v650 = vpop.f32.mrf.mxu0
      %651 = vmatprep.mubr.bf16.mxu0 0
      %652 = vmatmul.mubr.bf16.gmra.mxu0 %v425
      %v653 = vpop.f32.mrf.mxu0
      %v654 = vadd.f32 0.0, %v653
      %v655 = vpop.f32.mrf.mxu0
      %v656 = vpop.f32.mrf.mxu0
      %v657 = vadd.f32 0.0, %v656
      %v658 = vpop.f32.mrf.mxu0
      %659 = vmatprep.mubr.bf16.mxu0 0
      %660 = vmatmul.mubr.bf16.gmra.mxu0 %v428
      %v661 = vpop.f32.mrf.mxu0
      %v662 = vadd.f32 0.0, %v661
      %v663 = vpop.f32.mrf.mxu0
      %v664 = vpop.f32.mrf.mxu0
      %v665 = vadd.f32 0.0, %v664
      %v666 = vpop.f32.mrf.mxu0
      %667 = vmatprep.mubr.bf16.mxu0 0
      %668 = vmatmul.mubr.bf16.gmra.mxu0 %v431
      %v669 = vpop.f32.mrf.mxu0
      %v670 = vadd.f32 0.0, %v669
      %v671 = vpop.f32.mrf.mxu0
      %v672 = vpop.f32.mrf.mxu0
      %v673 = vadd.f32 0.0, %v672
      %v674 = vpop.f32.mrf.mxu0
      %675 = vmatprep.mubr.bf16.mxu0 0
      %676 = vmatmul.mubr.bf16.gmra.mxu0 %v434
      %v677 = vpop.f32.mrf.mxu0
      %v678 = vadd.f32 0.0, %v677
      %v679 = vpop.f32.mrf.mxu0
      %v680 = vpop.f32.mrf.mxu0
      %v681 = vadd.f32 0.0, %v680
      %v682 = vpop.f32.mrf.mxu0
      %683 = vmatprep.mubr.bf16.mxu0 0
      %684 = vmatmul.mubr.bf16.gmra.mxu0 %v437
      %v685 = vpop.f32.mrf.mxu0
      %v686 = vadd.f32 0.0, %v685
      %v687 = vpop.f32.mrf.mxu0
      %v688 = vpop.f32.mrf.mxu0
      %v689 = vadd.f32 0.0, %v688
      %v690 = vpop.f32.mrf.mxu0
      %691 = vdwg.mxu0
      %v692 = vpack.c.bf16 %v481, %v478
      %v693 = vpack.c.bf16 %v489, %v486
      %v694 = vpack.c.bf16 %v497, %v494
      %v695 = vpack.c.bf16 %v505, %v502
      %v696 = vpack.c.bf16 %v513, %v510
      %v697 = vpack.c.bf16 %v521, %v518
      %v698 = vpack.c.bf16 %v529, %v526
      %v699 = vpack.c.bf16 %v537, %v534
      %v700 = vpack.c.bf16 %v545, %v542
      %v701 = vpack.c.bf16 %v553, %v550
      %v702 = vpack.c.bf16 %v561, %v558
      %v703 = vpack.c.bf16 %v569, %v566
      %v704 = vpack.c.bf16 %v577, %v574
      %v705 = vpack.c.bf16 %v585, %v582
      %v706 = vpack.c.bf16 %v593, %v590
      %v707 = vpack.c.bf16 %v601, %v598
      %v708 = vpack.c.bf16 %v609, %v606
      %v709 = vpack.c.bf16 %v617, %v614
      %v710 = vpack.c.bf16 %v625, %v622
      %v711 = vpack.c.bf16 %v633, %v630
      %v712 = vpack.c.bf16 %v641, %v638
      %v713 = vpack.c.bf16 %v649, %v646
      %v714 = vpack.c.bf16 %v657, %v654
      %v715 = vpack.c.bf16 %v665, %v662
      %v716 = vpack.c.bf16 %v673, %v670
      %v717 = vpack.c.bf16 %v681, %v678
      %v718 = vpack.c.bf16 %v689, %v686
      %v746 = vunpack.c.l.b16 %v692
      %v747 = vunpack.c.h.b16 %v692
      %v748 = vunpack.c.l.b16 %v693
      %v749 = vunpack.c.h.b16 %v693
      %v750 = vunpack.c.l.b16 %v694
      %v751 = vunpack.c.h.b16 %v694
      %v752 = vunpack.c.l.b16 %v695
      %v753 = vunpack.c.h.b16 %v695
      %v754 = vunpack.c.l.b16 %v696
      %v755 = vunpack.c.h.b16 %v696
      %v756 = vunpack.c.l.b16 %v697
      %v757 = vunpack.c.h.b16 %v697
      %v758 = vunpack.c.l.b16 %v698
      %v759 = vunpack.c.h.b16 %v698
      %v760 = vunpack.c.l.b16 %v699
      %v761 = vunpack.c.h.b16 %v699
      %v762 = vunpack.c.l.b16 %v700
      %v763 = vunpack.c.h.b16 %v700
      %v764 = vunpack.c.l.b16 %v701
      %v765 = vunpack.c.h.b16 %v701
      %v766 = vunpack.c.l.b16 %v702
      %v767 = vunpack.c.h.b16 %v702
      %v768 = vunpack.c.l.b16 %v703
      %v769 = vunpack.c.h.b16 %v703
      %v770 = vunpack.c.l.b16 %v704
      %v771 = vunpack.c.h.b16 %v704
      %v772 = vunpack.c.l.b16 %v705
      %v773 = vunpack.c.h.b16 %v705
      %v774 = vunpack.c.l.b16 %v706
      %v775 = vunpack.c.h.b16 %v706
      %v776 = vunpack.c.l.b16 %v707
      %v777 = vunpack.c.h.b16 %v707
      %v778 = vunpack.c.l.b16 %v708
      %v779 = vunpack.c.h.b16 %v708
      %v780 = vunpack.c.l.b16 %v709
      %v781 = vunpack.c.h.b16 %v709
      %v782 = vunpack.c.l.b16 %v710
      %v783 = vunpack.c.h.b16 %v710
      %v784 = vunpack.c.l.b16 %v711
      %v785 = vunpack.c.h.b16 %v711
      %v786 = vunpack.c.l.b16 %v712
      %v787 = vunpack.c.h.b16 %v712
      %v788 = vunpack.c.l.b16 %v713
      %v789 = vunpack.c.h.b16 %v713
      %v790 = vunpack.c.l.b16 %v714
      %v791 = vunpack.c.h.b16 %v714
      %v792 = vunpack.c.l.b16 %v715
      %v793 = vunpack.c.h.b16 %v715
      %v794 = vunpack.c.l.b16 %v716
      %v795 = vunpack.c.h.b16 %v716
      %v796 = vunpack.c.l.b16 %v717
      %v797 = vunpack.c.h.b16 %v717
      %v798 = vunpack.c.l.b16 %v718
      %v799 = vunpack.c.h.b16 %v718
      %v800 = vpack.c.b16 %v746, %v746
      %v801 = vpack.c.b16 %v747, %v747
      %v802 = vpack.c.b16 %v748, %v748
      %v803 = vpack.c.b16 %v749, %v749
      %v804 = vpack.c.b16 %v750, %v750
      %v805 = vpack.c.b16 %v751, %v751
      %v806 = vpack.c.b16 %v752, %v752
      %v807 = vpack.c.b16 %v753, %v753
      %v808 = vpack.c.b16 %v754, %v754
      %v809 = vpack.c.b16 %v755, %v755
      %v810 = vpack.c.b16 %v756, %v756
      %v811 = vpack.c.b16 %v757, %v757
      %v812 = vpack.c.b16 %v758, %v758
      %v813 = vpack.c.b16 %v759, %v759
      %v814 = vpack.c.b16 %v760, %v760
      %v815 = vpack.c.b16 %v761, %v761
      %v816 = vpack.c.b16 %v762, %v762
      %v817 = vpack.c.b16 %v763, %v763
      %v818 = vpack.c.b16 %v764, %v764
      %v819 = vpack.c.b16 %v765, %v765
      %v820 = vpack.c.b16 %v766, %v766
      %v821 = vpack.c.b16 %v767, %v767
      %v822 = vpack.c.b16 %v768, %v768
      %v823 = vpack.c.b16 %v769, %v769
      %v824 = vpack.c.b16 %v770, %v770
      %v825 = vpack.c.b16 %v771, %v771
      %v826 = vpack.c.b16 %v772, %v772
      %v827 = vpack.c.b16 %v773, %v773
      %v828 = vpack.c.b16 %v774, %v774
      %v829 = vpack.c.b16 %v775, %v775
      %v830 = vpack.c.b16 %v776, %v776
      %v831 = vpack.c.b16 %v777, %v777
      %v832 = vpack.c.b16 %v778, %v778
      %v833 = vpack.c.b16 %v779, %v779
      %v834 = vpack.c.b16 %v780, %v780
      %v835 = vpack.c.b16 %v781, %v781
      %v836 = vpack.c.b16 %v782, %v782
      %v837 = vpack.c.b16 %v783, %v783
      %v838 = vpack.c.b16 %v784, %v784
      %v839 = vpack.c.b16 %v785, %v785
      %v840 = vpack.c.b16 %v786, %v786
      %v841 = vpack.c.b16 %v787, %v787
      %v842 = vpack.c.b16 %v788, %v788
      %v843 = vpack.c.b16 %v789, %v789
      %v844 = vpack.c.b16 %v790, %v790
      %v845 = vpack.c.b16 %v791, %v791
      %v846 = vpack.c.b16 %v792, %v792
      %v847 = vpack.c.b16 %v793, %v793
      %v848 = vpack.c.b16 %v794, %v794
      %v849 = vpack.c.b16 %v795, %v795
      %v850 = vpack.c.b16 %v796, %v796
      %v851 = vpack.c.b16 %v797, %v797
      %v852 = vpack.c.b16 %v798, %v798
      %v853 = vpack.c.b16 %v799, %v799
      %908 = vst [vmem:[%s145] sm:$0xf] %v800
      %909 = vst [vmem:[%s145 + $0x4] sm:$0xf] %v801
      %910 = vst [vmem:[%s145 + $0x8] sm:$0xf] %v802
      %911 = vst [vmem:[%s145 + $0xc] sm:$0xf] %v803
      %912 = vst [vmem:[%s145 + $0x10] sm:$0xf] %v804
      %913 = vst [vmem:[%s145 + $0x14] sm:$0xf] %v805
      %914 = vst [vmem:[%s145 + $0x18] sm:$0xf] %v806
      %915 = vst [vmem:[%s145 + $0x1c] sm:$0xf] %v807
      %916 = vst [vmem:[%s145 + $0x20] sm:$0xf] %v808
      %917 = vst [vmem:[%s145 + $0x24] sm:$0xf] %v809
      %918 = vst [vmem:[%s145 + $0x28] sm:$0xf] %v810
      %919 = vst [vmem:[%s145 + $0x2c] sm:$0xf] %v811
      %920 = vst [vmem:[%s145 + $0x30] sm:$0xf] %v812
      %921 = vst [vmem:[%s145 + $0x34] sm:$0xf] %v813
      %922 = vst [vmem:[%s145 + $0x38] sm:$0xf] %v814
      %923 = vst [vmem:[%s145 + $0x3c] sm:$0xf] %v815
      %924 = vst [vmem:[%s145 + $0x40] sm:$0xf] %v816
      %925 = vst [vmem:[%s145 + $0x44] sm:$0xf] %v817
      %926 = vst [vmem:[%s145 + $0x48] sm:$0xf] %v818
      %927 = vst [vmem:[%s145 + $0x4c] sm:$0xf] %v819
      %928 = vst [vmem:[%s145 + $0x50] sm:$0xf] %v820
      %929 = vst [vmem:[%s145 + $0x54] sm:$0xf] %v821
      %930 = vst [vmem:[%s145 + $0x58] sm:$0xf] %v822
      %931 = vst [vmem:[%s145 + $0x5c] sm:$0xf] %v823
      %932 = vst [vmem:[%s145 + $0x60] sm:$0xf] %v824
      %933 = vst [vmem:[%s145 + $0x64] sm:$0xf] %v825
      %934 = vst [vmem:[%s145 + $0x68] sm:$0xf] %v826
      %935 = vst [vmem:[%s145 + $0x6c] sm:$0xf] %v827
      %936 = vst [vmem:[%s145 + $0x70] sm:$0xf] %v828
      %937 = vst [vmem:[%s145 + $0x74] sm:$0xf] %v829
      %938 = vst [vmem:[%s145 + $0x78] sm:$0xf] %v830
      %939 = vst [vmem:[%s145 + $0x7c] sm:$0xf] %v831
      %940 = vst [vmem:[%s145 + $0x80] sm:$0xf] %v832
      %941 = vst [vmem:[%s145 + $0x84] sm:$0xf] %v833
      %942 = vst [vmem:[%s145 + $0x88] sm:$0xf] %v834
      %943 = vst [vmem:[%s145 + $0x8c] sm:$0xf] %v835
      %944 = vst [vmem:[%s145 + $0x90] sm:$0xf] %v836
      %945 = vst [vmem:[%s145 + $0x94] sm:$0xf] %v837
      %946 = vst [vmem:[%s145 + $0x98] sm:$0xf] %v838
      %947 = vst [vmem:[%s145 + $0x9c] sm:$0xf] %v839
      %948 = vst [vmem:[%s145 + $0xa0] sm:$0xf] %v840
      %949 = vst [vmem:[%s145 + $0xa4] sm:$0xf] %v841
      %950 = vst [vmem:[%s145 + $0xa8] sm:$0xf] %v842
      %951 = vst [vmem:[%s145 + $0xac] sm:$0xf] %v843
      %952 = vst [vmem:[%s145 + $0xb0] sm:$0xf] %v844
      %953 = vst [vmem:[%s145 + $0xb4] sm:$0xf] %v845
      %954 = vst [vmem:[%s145 + $0xb8] sm:$0xf] %v846
      %955 = vst [vmem:[%s145 + $0xbc] sm:$0xf] %v847
      %956 = vst [vmem:[%s145 + $0xc0] sm:$0xf] %v848
      %957 = vst [vmem:[%s145 + $0xc4] sm:$0xf] %v849
      %958 = vst [vmem:[%s145 + $0xc8] sm:$0xf] %v850
      %959 = vst [vmem:[%s145 + $0xcc] sm:$0xf] %v851
      %960 = vst [vmem:[%s145 + $0xd0] sm:$0xf] %v852
      %961 = vst [vmem:[%s145 + $0xd4] sm:$0xf] %v853
      %s962 = smul.u32 54, %s13
      %p963 = scmp.lt.s32.totalorder %s962, 161
      %s964 = scalar_select %p963, %s962, 161
      %s965 = smul.addr %s964, 4
      %s966 = scalar_lea.vmem %s2, %s965
      // Predicated region
      $region29: #{net_forward.9} parent=27 // pred_check
        %p967 = pneg %p78
      $region30: #{net_forward.9} parent=27 // pred_check_branch
        %969 = sbr.rel (%p967) target = $region32
      $region31: #{net_forward.9} parent=27 // pred_region
        %s970 = smul.u32 54, %s13
      $region32: #{net_forward.9} parent=27 // pred_fallthru
        _
    $region28: #{net_forward.9} parent=5 // pred_fallthru
      _
    %p971 = scmp.le.s32.totalorder 2, %s8
    // Predicated region
    $region33: #{net_forward.9} parent=5 // pred_check
      %p972 = pneg %p971
    $region34: #{net_forward.9} parent=5 // pred_check_branch
      %974 = sbr.rel (%p972) target = $region36
    $region35: #{net_forward.9} parent=5 // pred_region
      %s975 = ssub.s32 %s8, 2
      // Predicated region
      $region37: #{net_forward.9} parent=35 // pred_check
        %p976 = pneg %p84
      $region38: #{net_forward.9} parent=35 // pred_check_branch
        %978 = sbr.rel (%p976) target = $region40
      $region39: #{net_forward.9} parent=35 // pred_region
        %s979 = smul.u32 54, %s14
        %p980 = scmp.lt.s32.totalorder %s979, 161
        %s981 = scalar_select %p980, %s979, 161
        %s982 = smul.addr %s981, 4
        %s983 = scalar_lea.vmem %s2, %s982
      $region40: #{net_forward.9} parent=35 // pred_fallthru
        _
    $region36: #{net_forward.9} parent=5 // pred_fallthru
      _
  $region6: #{net_forward.9} parent=0 // loop_footer
    %s12 = sadd.s32 1, %s8
  $region7: #{net_forward.9} parent=0 // loop_footer_branch
    %7 = sbr.rel target = $region3
  $region8: #{net_forward.9} parent=0 // loop_exit
    _

</llo_original>
